<compile_context>
chip_gen: v5e
topology: v5e:2x2
jax: 0.10.0
libtpu: 0.0.40
codegen_flags: <defaults>
</compile_context>

<pallas_src>
import math
import jax
import jax.numpy as jnp
from jax.experimental import pallas as pl
from jax.experimental.pallas import tpu as pltpu

LN_EPS = 1e-12
COMPUTE_DTYPE = jnp.bfloat16      # MXU input dtype / inter-layer activation dtype


# ----------------------------- kernel factory -----------------------------
def _make_bert_layer_kernel(num_heads: int, head_dim: int, q_tile: int):
    scale = 1.0 / math.sqrt(head_dim)
    NH, D = num_heads, head_dim

    def layer_norm(x, g, b):      # f32 in / f32 out
        mu = jnp.mean(x, axis=-1, keepdims=True)
        var = jnp.mean((x - mu) ** 2, axis=-1, keepdims=True)
        return (x - mu) * jax.lax.rsqrt(var + LN_EPS) * g + b

    def gelu(x):                  # exact (erf) GELU, HF "gelu"
        return 0.5 * x * (1.0 + jax.lax.erf(x * (1.0 / math.sqrt(2.0))))

    def kernel(x_ref, mask_ref,
               wq_ref, bq_ref, wk_ref, bk_ref, wv_ref, bv_ref,
               wo_ref, bo_ref, ln1g_ref, ln1b_ref,
               wi_ref, bi_ref, wo2_ref, bo2_ref, ln2g_ref, ln2b_ref,
               out_ref, kh_ref, vh_ref):
        f32 = jnp.float32
        S, H = x_ref.shape

        # ---- K/V projections: once per sequence, cached in VMEM scratch ----
        @pl.when(pl.program_id(1) == 0)
        def _():
            xkv = x_ref[...].astype(COMPUTE_DTYPE)              # (S, H)
            k = jnp.dot(xkv, wk_ref[...], preferred_element_type=f32) + bk_ref[...].astype(f32)
            v = jnp.dot(xkv, wv_ref[...], preferred_element_type=f32) + bv_ref[...].astype(f32)
            # cast to bf16 BEFORE the relayout -> half the XLU traffic
            kh_ref[...] = pltpu.einshape("mhd->hmd", k.astype(COMPUTE_DTYPE).reshape(S, NH, D))
            vh_ref[...] = pltpu.einshape("mhd->hmd", v.astype(COMPUTE_DTYPE).reshape(S, NH, D))

        # ---- query-row tile sliced from the resident full-sequence block ----
        row0 = pl.multiple_of(pl.program_id(1) * q_tile, q_tile)
        xq = x_ref[pl.ds(row0, q_tile), :]                      # (TQ, H) bf16
        xq_f32 = xq.astype(f32)                                 # residual path

        q = jnp.dot(xq, wq_ref[...], preferred_element_type=f32) + bq_ref[...].astype(f32)
        q = q * scale                                           # == scaling K^T by 1/sqrt(d)
        qh = pltpu.einshape("mhd->hmd", q.astype(COMPUTE_DTYPE).reshape(q_tile, NH, D))

        mask = mask_ref[...].astype(f32)                        # (1, S) additive key mask
        scores = jnp.einsum("hqd,hkd->hqk", qh, kh_ref[...],
                            preferred_element_type=f32)         # (NH, TQ, S)
        scores = scores + mask                                  # single hoisted broadcast

        # numerically-stable softmax in f32; exact reciprocal (parity with HF)
        m = jnp.max(scores, axis=-1, keepdims=True)
        e = jnp.exp(scores - m)
        p = e * pl.reciprocal(jnp.sum(e, axis=-1, keepdims=True))

        ctx_h = jnp.einsum("hqk,hkd->hqd", p.astype(COMPUTE_DTYPE), vh_ref[...],
                           preferred_element_type=f32)          # (NH, TQ, D)
        ctx = pltpu.einshape("hmd->mhd", ctx_h.astype(COMPUTE_DTYPE)).reshape(q_tile, H)

        # ---- BertSelfOutput: dense + residual + LayerNorm ----
        attn = jnp.dot(ctx, wo_ref[...], preferred_element_type=f32) + bo_ref[...].astype(f32)
        h1 = layer_norm(attn + xq_f32, ln1g_ref[...], ln1b_ref[...])

        # ---- BertIntermediate (erf GELU) + BertOutput: dense + residual + LN ----
        inter = gelu(jnp.dot(h1.astype(COMPUTE_DTYPE), wi_ref[...],
                             preferred_element_type=f32) + bi_ref[...].astype(f32))
        ff = jnp.dot(inter.astype(COMPUTE_DTYPE), wo2_ref[...],
                     preferred_element_type=f32) + bo2_ref[...].astype(f32)
        y = layer_norm(ff + h1, ln2g_ref[...], ln2b_ref[...])

        out_ref[...] = y.astype(out_ref.dtype)

    return kernel


# ----------------------------- tiling / VMEM budget -----------------------------
def _round_up(x, m):
    return (x + m - 1) // m * m


def _padded_tile_bytes(shape, itemsize):
    s = list(shape)
    if len(s) == 1:
        s = [1] + s
    s[-1] = max(_round_up(s[-1], 128), 128)
    s[-2] = max(_round_up(s[-2], 8), 8)
    n = 1
    for d in s:
        n *= d
    return n * itemsize


def _tpu_budget():
    """(q-tile upper bound, scoped-VMEM cap) gated on the part's physical VMEM."""
    try:
        info = pltpu.get_tpu_info()
        vmem_cap = int(getattr(info, "vmem_capacity_bytes", 64 * 1024 * 1024))
    except Exception:
        vmem_cap = 64 * 1024 * 1024
    if vmem_cap >= 100 * 1024 * 1024:           # v5e / v6e class: 128 MiB VMEM
        return 512, 96 * 1024 * 1024
    return 256, 56 * 1024 * 1024                # v7x class: 64 MiB VMEM


def _pick_q_tile(S, limit):
    # largest divisor of S <= limit that keeps sublane alignment (mult of 8 or == S)
    # TODO(synk): pad S up to a multiple of 128 for awkward sequence lengths instead.
    best = None
    for d in range(1, min(S, limit) + 1):
        if S % d == 0 and (d % 8 == 0 or d == S):
            best = d
    return best if best is not None else S


def _estimate_vmem_bytes(params, S, H, I, NH, D, q_tile, weight_bufs):
    total = 0
    for p in params:                                            # resident weights
        total += weight_bufs * _padded_tile_bytes(p.shape, p.dtype.itemsize)
    total += 2 * _padded_tile_bytes((S, H), 2)                  # x block (bf16, 2 bufs)
    total += 2 * _padded_tile_bytes((q_tile, H), 2)             # output block
    total += 2 * _padded_tile_bytes((1, S), 4)                  # mask block
    total += 2 * _padded_tile_bytes((NH * S, D), 2)             # K/V bf16 scratch
    total += 3 * _padded_tile_bytes((NH * q_tile, S), 4)        # scores / e / p f32
    total += 3 * _padded_tile_bytes((q_tile, H), 4)             # attn / h1 / ff f32
    total += _padded_tile_bytes((q_tile, I), 4)                 # intermediate f32
    total += _padded_tile_bytes((q_tile, I), 2)                 # intermediate bf16
    return total


# ----------------------------- layer / encoder wrappers -----------------------------
def bert_layer_pallas(x, add_mask, params, num_heads, *, q_tile=None):
    """One BertLayer (inference). x: (B, S, H) bf16, add_mask: (B, 1, S) additive f32."""
    B, S, H = x.shape
    head_dim = H // num_heads
    intermediate = params[10].shape[1]          # wi: (H, I)

    tile_limit, vmem_cap = _tpu_budget()
    if q_tile is None:
        q_tile = _pick_q_tile(S, tile_limit)
    n_q_tiles = S // q_tile

    kernel = _make_bert_layer_kernel(num_heads, head_dim, q_tile)

    def resident(p, single_buffer):             # weights stay resident across the grid
        nd = p.ndim
        kwargs = {"pipeline_mode": pl.Buffered(1)} if single_buffer else {}
        return pl.BlockSpec(p.shape, lambda b, t, nd=nd: (0,) * nd, **kwargs)

    def run(single_buffer_weights):
        weight_bufs = 1 if single_buffer_weights else 2
        vmem_limit = int(1.3 * _estimate_vmem_bytes(
            params, S, H, intermediate, num_heads, head_dim, q_tile, weight_bufs))
        vmem_limit = min(max(vmem_limit, 32 * 1024 * 1024), vmem_cap)
        weight_specs = [resident(p, single_buffer_weights) for p in params]
        return pl.pallas_call(
            kernel,
            out_shape=jax.ShapeDtypeStruct((B, S, H), COMPUTE_DTYPE),
            grid=(B, n_q_tiles),
            in_specs=[
                pl.BlockSpec((None, S, H), lambda b, t: (b, 0, 0)),   # full seq (K/V + q slice)
                pl.BlockSpec((None, 1, S), lambda b, t: (b, 0, 0)),   # additive key mask
            ] + weight_specs,
            out_specs=pl.BlockSpec((None, q_tile, H), lambda b, t: (b, t, 0)),
            scratch_shapes=[
                pltpu.VMEM((num_heads, S, head_dim), COMPUTE_DTYPE),  # cached K heads
                pltpu.VMEM((num_heads, S, head_dim), COMPUTE_DTYPE),  # cached V heads
            ],
            compiler_params=pltpu.CompilerParams(
                # batch axis feeds megacore; the q-tile axis must stay serial so the
                # K/V scratch computed at t == 0 is reused by the remaining tiles.
                dimension_semantics=("parallel", "arbitrary"),
                vmem_limit_bytes=vmem_limit,
            ),
        )(x, add_mask, *params)

    try:
        return run(single_buffer_weights=True)
    except Exception:
        # Fallback for jax versions that reject pl.Buffered(1) on resident specs.
        return run(single_buffer_weights=False)


def bert_encoder_pallas(hidden_states, add_mask, all_layer_params, num_heads):
    """BertEncoder.forward (inference; returns last_hidden_state only)."""
    # bf16 inter-layer activations: halves activation HBM traffic per layer.
    hidden_states = hidden_states.astype(COMPUTE_DTYPE)
    add_mask = add_mask.astype(jnp.float32)
    # TODO(synk): cross-pallas_call prefetch of layer l+1 weights (P10) to hide the
    #             per-layer weight-load prologue in latency-bound serving shapes.
    for params in all_layer_params:
        hidden_states = bert_layer_pallas(hidden_states, add_mask, params, num_heads)
    return hidden_states


# ---------- deterministic synthetic parameter init (bf16 weights, f32 LN) ----------
def init_layer_params(key, hidden, intermediate):
    ks = jax.random.split(key, 12)

    def lin(kw, kb, din, dout):
        w = (jax.random.normal(kw, (din, dout), jnp.float32) * 0.02).astype(COMPUTE_DTYPE)
        b = (jax.random.normal(kb, (1, dout), jnp.float32) * 0.02).astype(COMPUTE_DTYPE)
        return w, b

    wq, bq = lin(ks[0], ks[1], hidden, hidden)
    wk, bk = lin(ks[2], ks[3], hidden, hidden)
    wv, bv = lin(ks[4], ks[5], hidden, hidden)
    wo, bo = lin(ks[6], ks[7], hidden, hidden)
    ln1g = jnp.ones((1, hidden), jnp.float32)
    ln1b = jnp.zeros((1, hidden), jnp.float32)
    wi, bi = lin(ks[8], ks[9], hidden, intermediate)
    wo2, bo2 = lin(ks[10], ks[11], intermediate, hidden)
    ln2g = jnp.ones((1, hidden), jnp.float32)
    ln2b = jnp.zeros((1, hidden), jnp.float32)
    return (wq, bq, wk, bk, wv, bv, wo, bo, ln1g, ln1b,
            wi, bi, wo2, bo2, ln2g, ln2b)


# ---------- pure-JAX f32 reference (mirrors the PyTorch math) ----------
def ref_layer(x, add_mask, p, num_heads):
    (wq, bq, wk, bk, wv, bv, wo, bo, g1, b1, wi, bi, wo2, bo2, g2, b2) = [
        jnp.asarray(t, jnp.float32) for t in p]
    B, S, H = x.shape
    d = H // num_heads

    def split(t):  # transpose_for_scores
        return t.reshape(B, S, num_heads, d).transpose(0, 2, 1, 3)

    q = split(x @ wq + bq)
    k = split(x @ wk + bk)
    v = split(x @ wv + bv)
    scores = jnp.einsum('bhqd,bhkd->bhqk', q, k) / math.sqrt(d)
    scores = scores + add_mask[:, None, :, :]
    probs = jax.nn.softmax(scores, axis=-1)
    ctx = jnp.einsum('bhqk,bhkd->bhqd', probs, v).transpose(0, 2, 1, 3).reshape(B, S, H)

    def ln(t, g, bb):
        mu = t.mean(-1, keepdims=True)
        var = ((t - mu) ** 2).mean(-1, keepdims=True)
        return (t - mu) / jnp.sqrt(var + LN_EPS) * g + bb

    h1 = ln(ctx @ wo + bo + x, g1, b1)
    z = h1 @ wi + bi
    inter = 0.5 * z * (1.0 + jax.lax.erf(z / math.sqrt(2.0)))
    return ln(inter @ wo2 + bo2 + h1, g2, b2)


def ref_encoder(x, add_mask, all_params, num_heads):
    for p in all_params:
        x = ref_layer(x, add_mask, p, num_heads)
    return x


if __name__ == "__main__":
    # Small synthetic config: B=2, S=8, hidden=32, heads=4, intermediate=64, layers=2
    B, S, H, NH, I, L = 2, 8, 32, 4, 64, 2

    key = jax.random.PRNGKey(0)
    k_x, k_p = jax.random.split(key)
    hidden_states = jax.random.normal(k_x, (B, S, H), jnp.float32)

    # HF-style extended additive attention mask (B, 1, S): 0 = attend, -1e4 = masked.
    pad = jnp.array([[0] * S, [0] * (S - 2) + [1, 1]], jnp.float32)  # batch 1 pads last 2
    add_mask = (pad * -10000.0).reshape(B, 1, S)

    layer_keys = jax.random.split(k_p, L)
    all_params = [init_layer_params(layer_keys[i], H, I) for i in range(L)]

    out = bert_encoder_pallas(hidden_states, add_mask, all_params, NH)
    out = jax.block_until_ready(out)

    # correctness check vs f32 reference (tolerance reflects bf16 weights/activations)
    ref = ref_encoder(hidden_states, add_mask, all_params, NH)
    assert out.shape == (B, S, H)
    err = float(jnp.max(jnp.abs(out.astype(jnp.float32) - ref)))
    assert err < 1e-1, err

    print("KERNEL_OK")
</pallas_src>

<mosaic_0001>
module attributes {stable_mosaic.version = 11 : i64} {
  func.func @kernel(%arg0: i32, %arg1: i32, %arg2: memref<1x8x32xbf16, #tpu.memory_space<vmem>>, %arg3: memref<1x1x8xf32, #tpu.memory_space<vmem>>, %arg4: memref<32x32xbf16, #tpu.memory_space<vmem>>, %arg5: memref<1x32xbf16, #tpu.memory_space<vmem>>, %arg6: memref<32x32xbf16, #tpu.memory_space<vmem>>, %arg7: memref<1x32xbf16, #tpu.memory_space<vmem>>, %arg8: memref<32x32xbf16, #tpu.memory_space<vmem>>, %arg9: memref<1x32xbf16, #tpu.memory_space<vmem>>, %arg10: memref<32x32xbf16, #tpu.memory_space<vmem>>, %arg11: memref<1x32xbf16, #tpu.memory_space<vmem>>, %arg12: memref<1x32xf32, #tpu.memory_space<vmem>>, %arg13: memref<1x32xf32, #tpu.memory_space<vmem>>, %arg14: memref<32x64xbf16, #tpu.memory_space<vmem>>, %arg15: memref<1x64xbf16, #tpu.memory_space<vmem>>, %arg16: memref<64x32xbf16, #tpu.memory_space<vmem>>, %arg17: memref<1x32xbf16, #tpu.memory_space<vmem>>, %arg18: memref<1x32xf32, #tpu.memory_space<vmem>>, %arg19: memref<1x32xf32, #tpu.memory_space<vmem>>, %arg20: memref<1x8x32xbf16, #tpu.memory_space<vmem>>, %arg21: memref<4x8x8xbf16, #tpu.memory_space<vmem>>, %arg22: memref<4x8x8xbf16, #tpu.memory_space<vmem>>) attributes {dimension_semantics = [#tpu.dimension_semantics<parallel>, #tpu.dimension_semantics<arbitrary>], iteration_bounds = array<i64: 2, 1>, scalar_prefetch = 0 : i64, scratch_operands = 2 : i64, tpu.core_type = #tpu.core_type<tc>, window_params = [{transform_indices = @transform_0, window_bounds = array<i64: 1, 8, 32>}, {transform_indices = @transform_1, window_bounds = array<i64: 1, 1, 8>}, {pipeline_mode = #tpu.pipeline_mode<synchronous>, transform_indices = @transform_2, window_bounds = array<i64: 32, 32>}, {pipeline_mode = #tpu.pipeline_mode<synchronous>, transform_indices = @transform_3, window_bounds = array<i64: 1, 32>}, {pipeline_mode = #tpu.pipeline_mode<synchronous>, transform_indices = @transform_4, window_bounds = array<i64: 32, 32>}, {pipeline_mode = #tpu.pipeline_mode<synchronous>, transform_indices = @transform_5, window_bounds = array<i64: 1, 32>}, {pipeline_mode = #tpu.pipeline_mode<synchronous>, transform_indices = @transform_6, window_bounds = array<i64: 32, 32>}, {pipeline_mode = #tpu.pipeline_mode<synchronous>, transform_indices = @transform_7, window_bounds = array<i64: 1, 32>}, {pipeline_mode = #tpu.pipeline_mode<synchronous>, transform_indices = @transform_8, window_bounds = array<i64: 32, 32>}, {pipeline_mode = #tpu.pipeline_mode<synchronous>, transform_indices = @transform_9, window_bounds = array<i64: 1, 32>}, {pipeline_mode = #tpu.pipeline_mode<synchronous>, transform_indices = @transform_10, window_bounds = array<i64: 1, 32>}, {pipeline_mode = #tpu.pipeline_mode<synchronous>, transform_indices = @transform_11, window_bounds = array<i64: 1, 32>}, {pipeline_mode = #tpu.pipeline_mode<synchronous>, transform_indices = @transform_12, window_bounds = array<i64: 32, 64>}, {pipeline_mode = #tpu.pipeline_mode<synchronous>, transform_indices = @transform_13, window_bounds = array<i64: 1, 64>}, {pipeline_mode = #tpu.pipeline_mode<synchronous>, transform_indices = @transform_14, window_bounds = array<i64: 64, 32>}, {pipeline_mode = #tpu.pipeline_mode<synchronous>, transform_indices = @transform_15, window_bounds = array<i64: 1, 32>}, {pipeline_mode = #tpu.pipeline_mode<synchronous>, transform_indices = @transform_16, window_bounds = array<i64: 1, 32>}, {pipeline_mode = #tpu.pipeline_mode<synchronous>, transform_indices = @transform_17, window_bounds = array<i64: 1, 32>}, {transform_indices = @transform_18, window_bounds = array<i64: 1, 8, 32>}]} {
    %c0_i32 = arith.constant 0 : i32
    %0 = arith.cmpi eq, %arg1, %c0_i32 : i32
    %1 = arith.extui %0 : i1 to i32
    %c0_i32_0 = arith.constant 0 : i32
    %2 = arith.cmpi ne, %1, %c0_i32_0 : i32
    scf.if %2 {
      %c0_59 = arith.constant 0 : index
      %c0_60 = arith.constant 0 : index
      %c0_61 = arith.constant 0 : index
      %125 = vector.load %arg2[%c0_59, %c0_60, %c0_61] : memref<1x8x32xbf16, #tpu.memory_space<vmem>>, vector<1x8x32xbf16>
      %126 = vector.shape_cast %125 : vector<1x8x32xbf16> to vector<8x32xbf16>
      %c0_62 = arith.constant 0 : index
      %c0_63 = arith.constant 0 : index
      %127 = vector.load %arg6[%c0_62, %c0_63] : memref<32x32xbf16, #tpu.memory_space<vmem>>, vector<32x32xbf16>
      %cst_64 = arith.constant dense<0.000000e+00> : vector<8x32xf32>
      %128 = tpu.matmul %126, %127, %cst_64 {dimension_numbers = #tpu.dot_dimension_numbers<[1], [0], [0], [1], [0, 0, 1, 1], [], []>} : vector<8x32xbf16>, vector<32x32xbf16>, vector<8x32xf32> -> vector<8x32xf32>
      %c0_65 = arith.constant 0 : index
      %c0_66 = arith.constant 0 : index
      %129 = vector.load %arg7[%c0_65, %c0_66] : memref<1x32xbf16, #tpu.memory_space<vmem>>, vector<1x32xbf16>
      %130 = arith.extf %129 : vector<1x32xbf16> to vector<1x32xf32>
      %131 = vector.broadcast %130 : vector<1x32xf32> to vector<8x32xf32>
      %132 = arith.addf %128, %131 : vector<8x32xf32>
      %c0_67 = arith.constant 0 : index
      %c0_68 = arith.constant 0 : index
      %133 = vector.load %arg8[%c0_67, %c0_68] : memref<32x32xbf16, #tpu.memory_space<vmem>>, vector<32x32xbf16>
      %cst_69 = arith.constant dense<0.000000e+00> : vector<8x32xf32>
      %134 = tpu.matmul %126, %133, %cst_69 {dimension_numbers = #tpu.dot_dimension_numbers<[1], [0], [0], [1], [0, 0, 1, 1], [], []>} : vector<8x32xbf16>, vector<32x32xbf16>, vector<8x32xf32> -> vector<8x32xf32>
      %c0_70 = arith.constant 0 : index
      %c0_71 = arith.constant 0 : index
      %135 = vector.load %arg9[%c0_70, %c0_71] : memref<1x32xbf16, #tpu.memory_space<vmem>>, vector<1x32xbf16>
      %136 = arith.extf %135 : vector<1x32xbf16> to vector<1x32xf32>
      %137 = vector.broadcast %136 : vector<1x32xf32> to vector<8x32xf32>
      %138 = arith.addf %134, %137 : vector<8x32xf32>
      %139 = arith.truncf %132 : vector<8x32xf32> to vector<8x32xbf16>
      %140 = vector.shape_cast %139 : vector<8x32xbf16> to vector<8x4x8xbf16>
      %141 = tpu.transpose %140, [1, 0, 2] : vector<8x4x8xbf16> -> vector<4x8x8xbf16>
      %c0_72 = arith.constant 0 : index
      %c0_73 = arith.constant 0 : index
      %c0_74 = arith.constant 0 : index
      %142 = vector.load %arg21[%c0_72, %c0_73, %c0_74] : memref<4x8x8xbf16, #tpu.memory_space<vmem>>, vector<4x8x8xbf16>
      tpu.vector_store %arg21[%c0_72, %c0_73, %c0_74], %141 {strides = array<i32>} : memref<4x8x8xbf16, #tpu.memory_space<vmem>>, vector<4x8x8xbf16>,
      %143 = arith.truncf %138 : vector<8x32xf32> to vector<8x32xbf16>
      %144 = vector.shape_cast %143 : vector<8x32xbf16> to vector<8x4x8xbf16>
      %145 = tpu.transpose %144, [1, 0, 2] : vector<8x4x8xbf16> -> vector<4x8x8xbf16>
      %c0_75 = arith.constant 0 : index
      %c0_76 = arith.constant 0 : index
      %c0_77 = arith.constant 0 : index
      %146 = vector.load %arg22[%c0_75, %c0_76, %c0_77] : memref<4x8x8xbf16, #tpu.memory_space<vmem>>, vector<4x8x8xbf16>
      tpu.vector_store %arg22[%c0_75, %c0_76, %c0_77], %145 {strides = array<i32>} : memref<4x8x8xbf16, #tpu.memory_space<vmem>>, vector<4x8x8xbf16>,
    } else {
    }
    %c8_i32 = arith.constant 8 : i32
    %3 = arith.muli %arg1, %c8_i32 : i32
    %4 = tpu.assume_multiple %3, 8 : i32
    %c0 = arith.constant 0 : index
    %5 = arith.index_cast %4 : i32 to index
    %c0_1 = arith.constant 0 : index
    %6 = vector.load %arg2[%c0, %5, %c0_1] : memref<1x8x32xbf16, #tpu.memory_space<vmem>>, vector<1x8x32xbf16>
    %7 = vector.shape_cast %6 : vector<1x8x32xbf16> to vector<8x32xbf16>
    %8 = arith.extf %7 : vector<8x32xbf16> to vector<8x32xf32>
    %c0_2 = arith.constant 0 : index
    %c0_3 = arith.constant 0 : index
    %9 = vector.load %arg4[%c0_2, %c0_3] : memref<32x32xbf16, #tpu.memory_space<vmem>>, vector<32x32xbf16>
    %cst = arith.constant dense<0.000000e+00> : vector<8x32xf32>
    %10 = tpu.matmul %7, %9, %cst {dimension_numbers = #tpu.dot_dimension_numbers<[1], [0], [0], [1], [0, 0, 1, 1], [], []>} : vector<8x32xbf16>, vector<32x32xbf16>, vector<8x32xf32> -> vector<8x32xf32>
    %c0_4 = arith.constant 0 : index
    %c0_5 = arith.constant 0 : index
    %11 = vector.load %arg5[%c0_4, %c0_5] : memref<1x32xbf16, #tpu.memory_space<vmem>>, vector<1x32xbf16>
    %12 = arith.extf %11 : vector<1x32xbf16> to vector<1x32xf32>
    %13 = vector.broadcast %12 : vector<1x32xf32> to vector<8x32xf32>
    %14 = arith.addf %10, %13 : vector<8x32xf32>
    %cst_6 = arith.constant 0.353553385 : f32
    %15 = vector.broadcast %cst_6 : f32 to vector<8x32xf32>
    %16 = arith.mulf %14, %15 : vector<8x32xf32>
    %17 = arith.truncf %16 : vector<8x32xf32> to vector<8x32xbf16>
    %18 = vector.shape_cast %17 : vector<8x32xbf16> to vector<8x4x8xbf16>
    %19 = tpu.transpose %18, [1, 0, 2] : vector<8x4x8xbf16> -> vector<4x8x8xbf16>
    %c0_7 = arith.constant 0 : index
    %c0_8 = arith.constant 0 : index
    %c0_9 = arith.constant 0 : index
    %20 = vector.load %arg3[%c0_7, %c0_8, %c0_9] : memref<1x1x8xf32, #tpu.memory_space<vmem>>, vector<1x1x8xf32>
    %21 = vector.shape_cast %20 : vector<1x1x8xf32> to vector<1x8xf32>
    %c0_10 = arith.constant 0 : index
    %c0_11 = arith.constant 0 : index
    %c0_12 = arith.constant 0 : index
    %22 = vector.load %arg21[%c0_10, %c0_11, %c0_12] : memref<4x8x8xbf16, #tpu.memory_space<vmem>>, vector<4x8x8xbf16>
    "tpu.trace_start"() <{level = 10 : i32, message = "hqd,hkd->hqk"}> : () -> ()
    %cst_13 = arith.constant dense<0.000000e+00> : vector<4x8x8xf32>
    %23 = tpu.matmul %19, %22, %cst_13 {dimension_numbers = #tpu.dot_dimension_numbers<[2], [2], [1], [1], [0, 0, 0, 1, 1, 1], [0], [0]>} : vector<4x8x8xbf16>, vector<4x8x8xbf16>, vector<4x8x8xf32> -> vector<4x8x8xf32>
    "tpu.trace_stop"() : () -> ()
    %24 = vector.shape_cast %21 : vector<1x8xf32> to vector<1x1x8xf32>
    %25 = vector.broadcast %24 : vector<1x1x8xf32> to vector<4x8x8xf32>
    %26 = arith.addf %23, %25 : vector<4x8x8xf32>
    %cst_14 = arith.constant dense<0xFF800000> : vector<4x8xf32>
    %27 = vector.multi_reduction <maximumf>, %26, %cst_14 [2] : vector<4x8x8xf32> to vector<4x8xf32>
    %28 = vector.shape_cast %27 : vector<4x8xf32> to vector<4x8x1xf32>
    %29 = vector.broadcast %28 : vector<4x8x1xf32> to vector<4x8x8xf32>
    %30 = arith.subf %26, %29 : vector<4x8x8xf32>
    %31 = math.exp %30 : vector<4x8x8xf32>
    %cst_15 = arith.constant dense<0.000000e+00> : vector<4x8xf32>
    %32 = vector.multi_reduction <add>, %31, %cst_15 [2] : vector<4x8x8xf32> to vector<4x8xf32>
    %33 = vector.shape_cast %32 : vector<4x8xf32> to vector<4x8x1xf32>
    %34 = tpu.reciprocal %33 : vector<4x8x1xf32> -> vector<4x8x1xf32>
    %35 = vector.broadcast %34 : vector<4x8x1xf32> to vector<4x8x8xf32>
    %36 = arith.mulf %31, %35 : vector<4x8x8xf32>
    %37 = arith.truncf %36 : vector<4x8x8xf32> to vector<4x8x8xbf16>
    %c0_16 = arith.constant 0 : index
    %c0_17 = arith.constant 0 : index
    %c0_18 = arith.constant 0 : index
    %38 = vector.load %arg22[%c0_16, %c0_17, %c0_18] : memref<4x8x8xbf16, #tpu.memory_space<vmem>>, vector<4x8x8xbf16>
    "tpu.trace_start"() <{level = 10 : i32, message = "hqk,hkd->hqd"}> : () -> ()
    %cst_19 = arith.constant dense<0.000000e+00> : vector<4x8x8xf32>
    %39 = tpu.matmul %37, %38, %cst_19 {dimension_numbers = #tpu.dot_dimension_numbers<[2], [1], [1], [2], [0, 0, 0, 1, 1, 2], [0], [0]>} : vector<4x8x8xbf16>, vector<4x8x8xbf16>, vector<4x8x8xf32> -> vector<4x8x8xf32>
    "tpu.trace_stop"() : () -> ()
    %40 = arith.truncf %39 : vector<4x8x8xf32> to vector<4x8x8xbf16>
    %41 = tpu.transpose %40, [1, 0, 2] : vector<4x8x8xbf16> -> vector<8x4x8xbf16>
    %42 = vector.shape_cast %41 : vector<8x4x8xbf16> to vector<8x32xbf16>
    %c0_20 = arith.constant 0 : index
    %c0_21 = arith.constant 0 : index
    %43 = vector.load %arg10[%c0_20, %c0_21] : memref<32x32xbf16, #tpu.memory_space<vmem>>, vector<32x32xbf16>
    %cst_22 = arith.constant dense<0.000000e+00> : vector<8x32xf32>
    %44 = tpu.matmul %42, %43, %cst_22 {dimension_numbers = #tpu.dot_dimension_numbers<[1], [0], [0], [1], [0, 0, 1, 1], [], []>} : vector<8x32xbf16>, vector<32x32xbf16>, vector<8x32xf32> -> vector<8x32xf32>
    %c0_23 = arith.constant 0 : index
    %c0_24 = arith.constant 0 : index
    %45 = vector.load %arg11[%c0_23, %c0_24] : memref<1x32xbf16, #tpu.memory_space<vmem>>, vector<1x32xbf16>
    %46 = arith.extf %45 : vector<1x32xbf16> to vector<1x32xf32>
    %47 = vector.broadcast %46 : vector<1x32xf32> to vector<8x32xf32>
    %48 = arith.addf %44, %47 : vector<8x32xf32>
    %49 = arith.addf %48, %8 : vector<8x32xf32>
    %c0_25 = arith.constant 0 : index
    %c0_26 = arith.constant 0 : index
    %50 = vector.load %arg12[%c0_25, %c0_26] : memref<1x32xf32, #tpu.memory_space<vmem>>, vector<1x32xf32>
    %c0_27 = arith.constant 0 : index
    %c0_28 = arith.constant 0 : index
    %51 = vector.load %arg13[%c0_27, %c0_28] : memref<1x32xf32, #tpu.memory_space<vmem>>, vector<1x32xf32>
    %cst_29 = arith.constant dense<0.000000e+00> : vector<8xf32>
    %52 = vector.multi_reduction <add>, %49, %cst_29 [1] : vector<8x32xf32> to vector<8xf32>
    %53 = vector.shape_cast %52 : vector<8xf32> to vector<8x1xf32>
    %cst_30 = arith.constant 3.200000e+01 : f32
    %54 = vector.broadcast %cst_30 : f32 to vector<8x1xf32>
    %55 = arith.divf %53, %54 : vector<8x1xf32>
    %56 = vector.broadcast %55 : vector<8x1xf32> to vector<8x32xf32>
    %57 = arith.subf %49, %56 : vector<8x32xf32>
    %58 = arith.mulf %57, %57 : vector<8x32xf32>
    %cst_31 = arith.constant dense<0.000000e+00> : vector<8xf32>
    %59 = vector.multi_reduction <add>, %58, %cst_31 [1] : vector<8x32xf32> to vector<8xf32>
    %60 = vector.shape_cast %59 : vector<8xf32> to vector<8x1xf32>
    %cst_32 = arith.constant 3.200000e+01 : f32
    %61 = vector.broadcast %cst_32 : f32 to vector<8x1xf32>
    %62 = arith.divf %60, %61 : vector<8x1xf32>
    %63 = vector.broadcast %55 : vector<8x1xf32> to vector<8x32xf32>
    %64 = arith.subf %49, %63 : vector<8x32xf32>
    %cst_33 = arith.constant 9.99999996E-13 : f32
    %65 = vector.broadcast %cst_33 : f32 to vector<8x1xf32>
    %66 = arith.addf %62, %65 : vector<8x1xf32>
    %67 = math.rsqrt %66 : vector<8x1xf32>
    %68 = vector.broadcast %67 : vector<8x1xf32> to vector<8x32xf32>
    %69 = arith.mulf %64, %68 : vector<8x32xf32>
    %70 = vector.broadcast %50 : vector<1x32xf32> to vector<8x32xf32>
    %71 = arith.mulf %69, %70 : vector<8x32xf32>
    %72 = vector.broadcast %51 : vector<1x32xf32> to vector<8x32xf32>
    %73 = arith.addf %71, %72 : vector<8x32xf32>
    %74 = arith.truncf %73 : vector<8x32xf32> to vector<8x32xbf16>
    %c0_34 = arith.constant 0 : index
    %c0_35 = arith.constant 0 : index
    %75 = vector.load %arg14[%c0_34, %c0_35] : memref<32x64xbf16, #tpu.memory_space<vmem>>, vector<32x64xbf16>
    %cst_36 = arith.constant dense<0.000000e+00> : vector<8x64xf32>
    %76 = tpu.matmul %74, %75, %cst_36 {dimension_numbers = #tpu.dot_dimension_numbers<[1], [0], [0], [1], [0, 0, 1, 1], [], []>} : vector<8x32xbf16>, vector<32x64xbf16>, vector<8x64xf32> -> vector<8x64xf32>
    %c0_37 = arith.constant 0 : index
    %c0_38 = arith.constant 0 : index
    %77 = vector.load %arg15[%c0_37, %c0_38] : memref<1x64xbf16, #tpu.memory_space<vmem>>, vector<1x64xbf16>
    %78 = arith.extf %77 : vector<1x64xbf16> to vector<1x64xf32>
    %79 = vector.broadcast %78 : vector<1x64xf32> to vector<8x64xf32>
    %80 = arith.addf %76, %79 : vector<8x64xf32>
    %cst_39 = arith.constant 5.000000e-01 : f32
    %81 = vector.broadcast %cst_39 : f32 to vector<8x64xf32>
    %82 = arith.mulf %81, %80 : vector<8x64xf32>
    %cst_40 = arith.constant 0.707106769 : f32
    %83 = vector.broadcast %cst_40 : f32 to vector<8x64xf32>
    %84 = arith.mulf %80, %83 : vector<8x64xf32>
    %85 = math.erf %84 : vector<8x64xf32>
    %cst_41 = arith.constant 1.000000e+00 : f32
    %86 = vector.broadcast %cst_41 : f32 to vector<8x64xf32>
    %87 = arith.addf %86, %85 : vector<8x64xf32>
    %88 = arith.mulf %82, %87 : vector<8x64xf32>
    %89 = arith.truncf %88 : vector<8x64xf32> to vector<8x64xbf16>
    %c0_42 = arith.constant 0 : index
    %c0_43 = arith.constant 0 : index
    %90 = vector.load %arg16[%c0_42, %c0_43] : memref<64x32xbf16, #tpu.memory_space<vmem>>, vector<64x32xbf16>
    %cst_44 = arith.constant dense<0.000000e+00> : vector<8x32xf32>
    %91 = tpu.matmul %89, %90, %cst_44 {dimension_numbers = #tpu.dot_dimension_numbers<[1], [0], [0], [1], [0, 0, 1, 1], [], []>} : vector<8x64xbf16>, vector<64x32xbf16>, vector<8x32xf32> -> vector<8x32xf32>
    %c0_45 = arith.constant 0 : index
    %c0_46 = arith.constant 0 : index
    %92 = vector.load %arg17[%c0_45, %c0_46] : memref<1x32xbf16, #tpu.memory_space<vmem>>, vector<1x32xbf16>
    %93 = arith.extf %92 : vector<1x32xbf16> to vector<1x32xf32>
    %94 = vector.broadcast %93 : vector<1x32xf32> to vector<8x32xf32>
    %95 = arith.addf %91, %94 : vector<8x32xf32>
    %96 = arith.addf %95, %73 : vector<8x32xf32>
    %c0_47 = arith.constant 0 : index
    %c0_48 = arith.constant 0 : index
    %97 = vector.load %arg18[%c0_47, %c0_48] : memref<1x32xf32, #tpu.memory_space<vmem>>, vector<1x32xf32>
    %c0_49 = arith.constant 0 : index
    %c0_50 = arith.constant 0 : index
    %98 = vector.load %arg19[%c0_49, %c0_50] : memref<1x32xf32, #tpu.memory_space<vmem>>, vector<1x32xf32>
    %cst_51 = arith.constant dense<0.000000e+00> : vector<8xf32>
    %99 = vector.multi_reduction <add>, %96, %cst_51 [1] : vector<8x32xf32> to vector<8xf32>
    %100 = vector.shape_cast %99 : vector<8xf32> to vector<8x1xf32>
    %cst_52 = arith.constant 3.200000e+01 : f32
    %101 = vector.broadcast %cst_52 : f32 to vector<8x1xf32>
    %102 = arith.divf %100, %101 : vector<8x1xf32>
    %103 = vector.broadcast %102 : vector<8x1xf32> to vector<8x32xf32>
    %104 = arith.subf %96, %103 : vector<8x32xf32>
    %105 = arith.mulf %104, %104 : vector<8x32xf32>
    %cst_53 = arith.constant dense<0.000000e+00> : vector<8xf32>
    %106 = vector.multi_reduction <add>, %105, %cst_53 [1] : vector<8x32xf32> to vector<8xf32>
    %107 = vector.shape_cast %106 : vector<8xf32> to vector<8x1xf32>
    %cst_54 = arith.constant 3.200000e+01 : f32
    %108 = vector.broadcast %cst_54 : f32 to vector<8x1xf32>
    %109 = arith.divf %107, %108 : vector<8x1xf32>
    %110 = vector.broadcast %102 : vector<8x1xf32> to vector<8x32xf32>
    %111 = arith.subf %96, %110 : vector<8x32xf32>
    %cst_55 = arith.constant 9.99999996E-13 : f32
    %112 = vector.broadcast %cst_55 : f32 to vector<8x1xf32>
    %113 = arith.addf %109, %112 : vector<8x1xf32>
    %114 = math.rsqrt %113 : vector<8x1xf32>
    %115 = vector.broadcast %114 : vector<8x1xf32> to vector<8x32xf32>
    %116 = arith.mulf %111, %115 : vector<8x32xf32>
    %117 = vector.broadcast %97 : vector<1x32xf32> to vector<8x32xf32>
    %118 = arith.mulf %116, %117 : vector<8x32xf32>
    %119 = vector.broadcast %98 : vector<1x32xf32> to vector<8x32xf32>
    %120 = arith.addf %118, %119 : vector<8x32xf32>
    %121 = arith.truncf %120 : vector<8x32xf32> to vector<8x32xbf16>
    %c0_56 = arith.constant 0 : index
    %c0_57 = arith.constant 0 : index
    %c0_58 = arith.constant 0 : index
    %122 = vector.load %arg20[%c0_56, %c0_57, %c0_58] : memref<1x8x32xbf16, #tpu.memory_space<vmem>>, vector<1x8x32xbf16>
    %123 = vector.shape_cast %122 : vector<1x8x32xbf16> to vector<8x32xbf16>
    %124 = vector.shape_cast %121 : vector<8x32xbf16> to vector<1x8x32xbf16>
    tpu.vector_store %arg20[%c0_56, %c0_57, %c0_58], %124 {strides = array<i32>} : memref<1x8x32xbf16, #tpu.memory_space<vmem>>, vector<1x8x32xbf16>,
    return
  }
  func.func @transform_0(%arg0: i32, %arg1: i32) -> (i32, i32, i32) {
    %c0_i32 = arith.constant 0 : i32
    %c0_i32_0 = arith.constant 0 : i32
    %c0_i32_1 = arith.constant 0 : i32
    return %arg0, %c0_i32, %c0_i32_0 : i32, i32, i32
  }
  func.func @transform_1(%arg0: i32, %arg1: i32) -> (i32, i32, i32) {
    %c0_i32 = arith.constant 0 : i32
    %c0_i32_0 = arith.constant 0 : i32
    %c0_i32_1 = arith.constant 0 : i32
    return %arg0, %c0_i32, %c0_i32_0 : i32, i32, i32
  }
  func.func @transform_2(%arg0: i32, %arg1: i32) -> (i32, i32) {
    %c0_i32 = arith.constant 0 : i32
    %c0_i32_0 = arith.constant 0 : i32
    %c0_i32_1 = arith.constant 0 : i32
    return %c0_i32, %c0_i32_0 : i32, i32
  }
  func.func @transform_3(%arg0: i32, %arg1: i32) -> (i32, i32) {
    %c0_i32 = arith.constant 0 : i32
    %c0_i32_0 = arith.constant 0 : i32
    %c0_i32_1 = arith.constant 0 : i32
    return %c0_i32, %c0_i32_0 : i32, i32
  }
  func.func @transform_4(%arg0: i32, %arg1: i32) -> (i32, i32) {
    %c0_i32 = arith.constant 0 : i32
    %c0_i32_0 = arith.constant 0 : i32
    %c0_i32_1 = arith.constant 0 : i32
    return %c0_i32, %c0_i32_0 : i32, i32
  }
  func.func @transform_5(%arg0: i32, %arg1: i32) -> (i32, i32) {
    %c0_i32 = arith.constant 0 : i32
    %c0_i32_0 = arith.constant 0 : i32
    %c0_i32_1 = arith.constant 0 : i32
    return %c0_i32, %c0_i32_0 : i32, i32
  }
  func.func @transform_6(%arg0: i32, %arg1: i32) -> (i32, i32) {
    %c0_i32 = arith.constant 0 : i32
    %c0_i32_0 = arith.constant 0 : i32
    %c0_i32_1 = arith.constant 0 : i32
    return %c0_i32, %c0_i32_0 : i32, i32
  }
  func.func @transform_7(%arg0: i32, %arg1: i32) -> (i32, i32) {
    %c0_i32 = arith.constant 0 : i32
    %c0_i32_0 = arith.constant 0 : i32
    %c0_i32_1 = arith.constant 0 : i32
    return %c0_i32, %c0_i32_0 : i32, i32
  }
  func.func @transform_8(%arg0: i32, %arg1: i32) -> (i32, i32) {
    %c0_i32 = arith.constant 0 : i32
    %c0_i32_0 = arith.constant 0 : i32
    %c0_i32_1 = arith.constant 0 : i32
    return %c0_i32, %c0_i32_0 : i32, i32
  }
  func.func @transform_9(%arg0: i32, %arg1: i32) -> (i32, i32) {
    %c0_i32 = arith.constant 0 : i32
    %c0_i32_0 = arith.constant 0 : i32
    %c0_i32_1 = arith.constant 0 : i32
    return %c0_i32, %c0_i32_0 : i32, i32
  }
  func.func @transform_10(%arg0: i32, %arg1: i32) -> (i32, i32) {
    %c0_i32 = arith.constant 0 : i32
    %c0_i32_0 = arith.constant 0 : i32
    %c0_i32_1 = arith.constant 0 : i32
    return %c0_i32, %c0_i32_0 : i32, i32
  }
  func.func @transform_11(%arg0: i32, %arg1: i32) -> (i32, i32) {
    %c0_i32 = arith.constant 0 : i32
    %c0_i32_0 = arith.constant 0 : i32
    %c0_i32_1 = arith.constant 0 : i32
    return %c0_i32, %c0_i32_0 : i32, i32
  }
  func.func @transform_12(%arg0: i32, %arg1: i32) -> (i32, i32) {
    %c0_i32 = arith.constant 0 : i32
    %c0_i32_0 = arith.constant 0 : i32
    %c0_i32_1 = arith.constant 0 : i32
    return %c0_i32, %c0_i32_0 : i32, i32
  }
  func.func @transform_13(%arg0: i32, %arg1: i32) -> (i32, i32) {
    %c0_i32 = arith.constant 0 : i32
    %c0_i32_0 = arith.constant 0 : i32
    %c0_i32_1 = arith.constant 0 : i32
    return %c0_i32, %c0_i32_0 : i32, i32
  }
  func.func @transform_14(%arg0: i32, %arg1: i32) -> (i32, i32) {
    %c0_i32 = arith.constant 0 : i32
    %c0_i32_0 = arith.constant 0 : i32
    %c0_i32_1 = arith.constant 0 : i32
    return %c0_i32, %c0_i32_0 : i32, i32
  }
  func.func @transform_15(%arg0: i32, %arg1: i32) -> (i32, i32) {
    %c0_i32 = arith.constant 0 : i32
    %c0_i32_0 = arith.constant 0 : i32
    %c0_i32_1 = arith.constant 0 : i32
    return %c0_i32, %c0_i32_0 : i32, i32
  }
  func.func @transform_16(%arg0: i32, %arg1: i32) -> (i32, i32) {
    %c0_i32 = arith.constant 0 : i32
    %c0_i32_0 = arith.constant 0 : i32
    %c0_i32_1 = arith.constant 0 : i32
    return %c0_i32, %c0_i32_0 : i32, i32
  }
  func.func @transform_17(%arg0: i32, %arg1: i32) -> (i32, i32) {
    %c0_i32 = arith.constant 0 : i32
    %c0_i32_0 = arith.constant 0 : i32
    %c0_i32_1 = arith.constant 0 : i32
    return %c0_i32, %c0_i32_0 : i32, i32
  }
  func.func @transform_18(%arg0: i32, %arg1: i32) -> (i32, i32, i32) {
    %c0_i32 = arith.constant 0 : i32
    %c0_i32_0 = arith.constant 0 : i32
    return %arg0, %arg1, %c0_i32 : i32, i32, i32
  }
}

module attributes {stable_mosaic.version = 11 : i64} {
  func.func @kernel(%arg0: i32, %arg1: i32, %arg2: memref<1x8x32xbf16, #tpu.memory_space<vmem>>, %arg3: memref<1x1x8xf32, #tpu.memory_space<vmem>>, %arg4: memref<32x32xbf16, #tpu.memory_space<vmem>>, %arg5: memref<1x32xbf16, #tpu.memory_space<vmem>>, %arg6: memref<32x32xbf16, #tpu.memory_space<vmem>>, %arg7: memref<1x32xbf16, #tpu.memory_space<vmem>>, %arg8: memref<32x32xbf16, #tpu.memory_space<vmem>>, %arg9: memref<1x32xbf16, #tpu.memory_space<vmem>>, %arg10: memref<32x32xbf16, #tpu.memory_space<vmem>>, %arg11: memref<1x32xbf16, #tpu.memory_space<vmem>>, %arg12: memref<1x32xf32, #tpu.memory_space<vmem>>, %arg13: memref<1x32xf32, #tpu.memory_space<vmem>>, %arg14: memref<32x64xbf16, #tpu.memory_space<vmem>>, %arg15: memref<1x64xbf16, #tpu.memory_space<vmem>>, %arg16: memref<64x32xbf16, #tpu.memory_space<vmem>>, %arg17: memref<1x32xbf16, #tpu.memory_space<vmem>>, %arg18: memref<1x32xf32, #tpu.memory_space<vmem>>, %arg19: memref<1x32xf32, #tpu.memory_space<vmem>>, %arg20: memref<1x8x32xbf16, #tpu.memory_space<vmem>>, %arg21: memref<4x8x8xbf16, #tpu.memory_space<vmem>>, %arg22: memref<4x8x8xbf16, #tpu.memory_space<vmem>>) attributes {dimension_semantics = [#tpu.dimension_semantics<parallel>, #tpu.dimension_semantics<arbitrary>], iteration_bounds = array<i64: 2, 1>, scalar_prefetch = 0 : i64, scratch_operands = 2 : i64, tpu.core_type = #tpu.core_type<tc>, window_params = [{transform_indices = @transform_0, window_bounds = array<i64: 1, 8, 32>}, {transform_indices = @transform_1, window_bounds = array<i64: 1, 1, 8>}, {pipeline_mode = #tpu.pipeline_mode<synchronous>, transform_indices = @transform_2, window_bounds = array<i64: 32, 32>}, {pipeline_mode = #tpu.pipeline_mode<synchronous>, transform_indices = @transform_3, window_bounds = array<i64: 1, 32>}, {pipeline_mode = #tpu.pipeline_mode<synchronous>, transform_indices = @transform_4, window_bounds = array<i64: 32, 32>}, {pipeline_mode = #tpu.pipeline_mode<synchronous>, transform_indices = @transform_5, window_bounds = array<i64: 1, 32>}, {pipeline_mode = #tpu.pipeline_mode<synchronous>, transform_indices = @transform_6, window_bounds = array<i64: 32, 32>}, {pipeline_mode = #tpu.pipeline_mode<synchronous>, transform_indices = @transform_7, window_bounds = array<i64: 1, 32>}, {pipeline_mode = #tpu.pipeline_mode<synchronous>, transform_indices = @transform_8, window_bounds = array<i64: 32, 32>}, {pipeline_mode = #tpu.pipeline_mode<synchronous>, transform_indices = @transform_9, window_bounds = array<i64: 1, 32>}, {pipeline_mode = #tpu.pipeline_mode<synchronous>, transform_indices = @transform_10, window_bounds = array<i64: 1, 32>}, {pipeline_mode = #tpu.pipeline_mode<synchronous>, transform_indices = @transform_11, window_bounds = array<i64: 1, 32>}, {pipeline_mode = #tpu.pipeline_mode<synchronous>, transform_indices = @transform_12, window_bounds = array<i64: 32, 64>}, {pipeline_mode = #tpu.pipeline_mode<synchronous>, transform_indices = @transform_13, window_bounds = array<i64: 1, 64>}, {pipeline_mode = #tpu.pipeline_mode<synchronous>, transform_indices = @transform_14, window_bounds = array<i64: 64, 32>}, {pipeline_mode = #tpu.pipeline_mode<synchronous>, transform_indices = @transform_15, window_bounds = array<i64: 1, 32>}, {pipeline_mode = #tpu.pipeline_mode<synchronous>, transform_indices = @transform_16, window_bounds = array<i64: 1, 32>}, {pipeline_mode = #tpu.pipeline_mode<synchronous>, transform_indices = @transform_17, window_bounds = array<i64: 1, 32>}, {transform_indices = @transform_18, window_bounds = array<i64: 1, 8, 32>}]} {
    %c0_i32 = arith.constant 0 : i32
    %0 = arith.cmpi eq, %arg1, %c0_i32 : i32
    %1 = arith.extui %0 : i1 to i32
    %c0_i32_0 = arith.constant 0 : i32
    %2 = arith.cmpi ne, %1, %c0_i32_0 : i32
    scf.if %2 {
      %c0_59 = arith.constant 0 : index
      %c0_60 = arith.constant 0 : index
      %c0_61 = arith.constant 0 : index
      %125 = vector.load %arg2[%c0_59, %c0_60, %c0_61] : memref<1x8x32xbf16, #tpu.memory_space<vmem>>, vector<1x8x32xbf16>
      %126 = vector.shape_cast %125 : vector<1x8x32xbf16> to vector<8x32xbf16>
      %c0_62 = arith.constant 0 : index
      %c0_63 = arith.constant 0 : index
      %127 = vector.load %arg6[%c0_62, %c0_63] : memref<32x32xbf16, #tpu.memory_space<vmem>>, vector<32x32xbf16>
      %cst_64 = arith.constant dense<0.000000e+00> : vector<8x32xf32>
      %128 = tpu.matmul %126, %127, %cst_64 {dimension_numbers = #tpu.dot_dimension_numbers<[1], [0], [0], [1], [0, 0, 1, 1], [], []>} : vector<8x32xbf16>, vector<32x32xbf16>, vector<8x32xf32> -> vector<8x32xf32>
      %c0_65 = arith.constant 0 : index
      %c0_66 = arith.constant 0 : index
      %129 = vector.load %arg7[%c0_65, %c0_66] : memref<1x32xbf16, #tpu.memory_space<vmem>>, vector<1x32xbf16>
      %130 = arith.extf %129 : vector<1x32xbf16> to vector<1x32xf32>
      %131 = vector.broadcast %130 : vector<1x32xf32> to vector<8x32xf32>
      %132 = arith.addf %128, %131 : vector<8x32xf32>
      %c0_67 = arith.constant 0 : index
      %c0_68 = arith.constant 0 : index
      %133 = vector.load %arg8[%c0_67, %c0_68] : memref<32x32xbf16, #tpu.memory_space<vmem>>, vector<32x32xbf16>
      %cst_69 = arith.constant dense<0.000000e+00> : vector<8x32xf32>
      %134 = tpu.matmul %126, %133, %cst_69 {dimension_numbers = #tpu.dot_dimension_numbers<[1], [0], [0], [1], [0, 0, 1, 1], [], []>} : vector<8x32xbf16>, vector<32x32xbf16>, vector<8x32xf32> -> vector<8x32xf32>
      %c0_70 = arith.constant 0 : index
      %c0_71 = arith.constant 0 : index
      %135 = vector.load %arg9[%c0_70, %c0_71] : memref<1x32xbf16, #tpu.memory_space<vmem>>, vector<1x32xbf16>
      %136 = arith.extf %135 : vector<1x32xbf16> to vector<1x32xf32>
      %137 = vector.broadcast %136 : vector<1x32xf32> to vector<8x32xf32>
      %138 = arith.addf %134, %137 : vector<8x32xf32>
      %139 = arith.truncf %132 : vector<8x32xf32> to vector<8x32xbf16>
      %140 = vector.shape_cast %139 : vector<8x32xbf16> to vector<8x4x8xbf16>
      %141 = tpu.transpose %140, [1, 0, 2] : vector<8x4x8xbf16> -> vector<4x8x8xbf16>
      %c0_72 = arith.constant 0 : index
      %c0_73 = arith.constant 0 : index
      %c0_74 = arith.constant 0 : index
      %142 = vector.load %arg21[%c0_72, %c0_73, %c0_74] : memref<4x8x8xbf16, #tpu.memory_space<vmem>>, vector<4x8x8xbf16>
      tpu.vector_store %arg21[%c0_72, %c0_73, %c0_74], %141 {strides = array<i32>} : memref<4x8x8xbf16, #tpu.memory_space<vmem>>, vector<4x8x8xbf16>,
      %143 = arith.truncf %138 : vector<8x32xf32> to vector<8x32xbf16>
      %144 = vector.shape_cast %143 : vector<8x32xbf16> to vector<8x4x8xbf16>
      %145 = tpu.transpose %144, [1, 0, 2] : vector<8x4x8xbf16> -> vector<4x8x8xbf16>
      %c0_75 = arith.constant 0 : index
      %c0_76 = arith.constant 0 : index
      %c0_77 = arith.constant 0 : index
      %146 = vector.load %arg22[%c0_75, %c0_76, %c0_77] : memref<4x8x8xbf16, #tpu.memory_space<vmem>>, vector<4x8x8xbf16>
      tpu.vector_store %arg22[%c0_75, %c0_76, %c0_77], %145 {strides = array<i32>} : memref<4x8x8xbf16, #tpu.memory_space<vmem>>, vector<4x8x8xbf16>,
    } else {
    }
    %c8_i32 = arith.constant 8 : i32
    %3 = arith.muli %arg1, %c8_i32 : i32
    %4 = tpu.assume_multiple %3, 8 : i32
    %c0 = arith.constant 0 : index
    %5 = arith.index_cast %4 : i32 to index
    %c0_1 = arith.constant 0 : index
    %6 = vector.load %arg2[%c0, %5, %c0_1] : memref<1x8x32xbf16, #tpu.memory_space<vmem>>, vector<1x8x32xbf16>
    %7 = vector.shape_cast %6 : vector<1x8x32xbf16> to vector<8x32xbf16>
    %8 = arith.extf %7 : vector<8x32xbf16> to vector<8x32xf32>
    %c0_2 = arith.constant 0 : index
    %c0_3 = arith.constant 0 : index
    %9 = vector.load %arg4[%c0_2, %c0_3] : memref<32x32xbf16, #tpu.memory_space<vmem>>, vector<32x32xbf16>
    %cst = arith.constant dense<0.000000e+00> : vector<8x32xf32>
    %10 = tpu.matmul %7, %9, %cst {dimension_numbers = #tpu.dot_dimension_numbers<[1], [0], [0], [1], [0, 0, 1, 1], [], []>} : vector<8x32xbf16>, vector<32x32xbf16>, vector<8x32xf32> -> vector<8x32xf32>
    %c0_4 = arith.constant 0 : index
    %c0_5 = arith.constant 0 : index
    %11 = vector.load %arg5[%c0_4, %c0_5] : memref<1x32xbf16, #tpu.memory_space<vmem>>, vector<1x32xbf16>
    %12 = arith.extf %11 : vector<1x32xbf16> to vector<1x32xf32>
    %13 = vector.broadcast %12 : vector<1x32xf32> to vector<8x32xf32>
    %14 = arith.addf %10, %13 : vector<8x32xf32>
    %cst_6 = arith.constant 0.353553385 : f32
    %15 = vector.broadcast %cst_6 : f32 to vector<8x32xf32>
    %16 = arith.mulf %14, %15 : vector<8x32xf32>
    %17 = arith.truncf %16 : vector<8x32xf32> to vector<8x32xbf16>
    %18 = vector.shape_cast %17 : vector<8x32xbf16> to vector<8x4x8xbf16>
    %19 = tpu.transpose %18, [1, 0, 2] : vector<8x4x8xbf16> -> vector<4x8x8xbf16>
    %c0_7 = arith.constant 0 : index
    %c0_8 = arith.constant 0 : index
    %c0_9 = arith.constant 0 : index
    %20 = vector.load %arg3[%c0_7, %c0_8, %c0_9] : memref<1x1x8xf32, #tpu.memory_space<vmem>>, vector<1x1x8xf32>
    %21 = vector.shape_cast %20 : vector<1x1x8xf32> to vector<1x8xf32>
    %c0_10 = arith.constant 0 : index
    %c0_11 = arith.constant 0 : index
    %c0_12 = arith.constant 0 : index
    %22 = vector.load %arg21[%c0_10, %c0_11, %c0_12] : memref<4x8x8xbf16, #tpu.memory_space<vmem>>, vector<4x8x8xbf16>
    "tpu.trace_start"() <{level = 10 : i32, message = "hqd,hkd->hqk"}> : () -> ()
    %cst_13 = arith.constant dense<0.000000e+00> : vector<4x8x8xf32>
    %23 = tpu.matmul %19, %22, %cst_13 {dimension_numbers = #tpu.dot_dimension_numbers<[2], [2], [1], [1], [0, 0, 0, 1, 1, 1], [0], [0]>} : vector<4x8x8xbf16>, vector<4x8x8xbf16>, vector<4x8x8xf32> -> vector<4x8x8xf32>
    "tpu.trace_stop"() : () -> ()
    %24 = vector.shape_cast %21 : vector<1x8xf32> to vector<1x1x8xf32>
    %25 = vector.broadcast %24 : vector<1x1x8xf32> to vector<4x8x8xf32>
    %26 = arith.addf %23, %25 : vector<4x8x8xf32>
    %cst_14 = arith.constant dense<0xFF800000> : vector<4x8xf32>
    %27 = vector.multi_reduction <maximumf>, %26, %cst_14 [2] : vector<4x8x8xf32> to vector<4x8xf32>
    %28 = vector.shape_cast %27 : vector<4x8xf32> to vector<4x8x1xf32>
    %29 = vector.broadcast %28 : vector<4x8x1xf32> to vector<4x8x8xf32>
    %30 = arith.subf %26, %29 : vector<4x8x8xf32>
    %31 = math.exp %30 : vector<4x8x8xf32>
    %cst_15 = arith.constant dense<0.000000e+00> : vector<4x8xf32>
    %32 = vector.multi_reduction <add>, %31, %cst_15 [2] : vector<4x8x8xf32> to vector<4x8xf32>
    %33 = vector.shape_cast %32 : vector<4x8xf32> to vector<4x8x1xf32>
    %34 = tpu.reciprocal %33 : vector<4x8x1xf32> -> vector<4x8x1xf32>
    %35 = vector.broadcast %34 : vector<4x8x1xf32> to vector<4x8x8xf32>
    %36 = arith.mulf %31, %35 : vector<4x8x8xf32>
    %37 = arith.truncf %36 : vector<4x8x8xf32> to vector<4x8x8xbf16>
    %c0_16 = arith.constant 0 : index
    %c0_17 = arith.constant 0 : index
    %c0_18 = arith.constant 0 : index
    %38 = vector.load %arg22[%c0_16, %c0_17, %c0_18] : memref<4x8x8xbf16, #tpu.memory_space<vmem>>, vector<4x8x8xbf16>
    "tpu.trace_start"() <{level = 10 : i32, message = "hqk,hkd->hqd"}> : () -> ()
    %cst_19 = arith.constant dense<0.000000e+00> : vector<4x8x8xf32>
    %39 = tpu.matmul %37, %38, %cst_19 {dimension_numbers = #tpu.dot_dimension_numbers<[2], [1], [1], [2], [0, 0, 0, 1, 1, 2], [0], [0]>} : vector<4x8x8xbf16>, vector<4x8x8xbf16>, vector<4x8x8xf32> -> vector<4x8x8xf32>
    "tpu.trace_stop"() : () -> ()
    %40 = arith.truncf %39 : vector<4x8x8xf32> to vector<4x8x8xbf16>
    %41 = tpu.transpose %40, [1, 0, 2] : vector<4x8x8xbf16> -> vector<8x4x8xbf16>
    %42 = vector.shape_cast %41 : vector<8x4x8xbf16> to vector<8x32xbf16>
    %c0_20 = arith.constant 0 : index
    %c0_21 = arith.constant 0 : index
    %43 = vector.load %arg10[%c0_20, %c0_21] : memref<32x32xbf16, #tpu.memory_space<vmem>>, vector<32x32xbf16>
    %cst_22 = arith.constant dense<0.000000e+00> : vector<8x32xf32>
    %44 = tpu.matmul %42, %43, %cst_22 {dimension_numbers = #tpu.dot_dimension_numbers<[1], [0], [0], [1], [0, 0, 1, 1], [], []>} : vector<8x32xbf16>, vector<32x32xbf16>, vector<8x32xf32> -> vector<8x32xf32>
    %c0_23 = arith.constant 0 : index
    %c0_24 = arith.constant 0 : index
    %45 = vector.load %arg11[%c0_23, %c0_24] : memref<1x32xbf16, #tpu.memory_space<vmem>>, vector<1x32xbf16>
    %46 = arith.extf %45 : vector<1x32xbf16> to vector<1x32xf32>
    %47 = vector.broadcast %46 : vector<1x32xf32> to vector<8x32xf32>
    %48 = arith.addf %44, %47 : vector<8x32xf32>
    %49 = arith.addf %48, %8 : vector<8x32xf32>
    %c0_25 = arith.constant 0 : index
    %c0_26 = arith.constant 0 : index
    %50 = vector.load %arg12[%c0_25, %c0_26] : memref<1x32xf32, #tpu.memory_space<vmem>>, vector<1x32xf32>
    %c0_27 = arith.constant 0 : index
    %c0_28 = arith.constant 0 : index
    %51 = vector.load %arg13[%c0_27, %c0_28] : memref<1x32xf32, #tpu.memory_space<vmem>>, vector<1x32xf32>
    %cst_29 = arith.constant dense<0.000000e+00> : vector<8xf32>
    %52 = vector.multi_reduction <add>, %49, %cst_29 [1] : vector<8x32xf32> to vector<8xf32>
    %53 = vector.shape_cast %52 : vector<8xf32> to vector<8x1xf32>
    %cst_30 = arith.constant 3.200000e+01 : f32
    %54 = vector.broadcast %cst_30 : f32 to vector<8x1xf32>
    %55 = arith.divf %53, %54 : vector<8x1xf32>
    %56 = vector.broadcast %55 : vector<8x1xf32> to vector<8x32xf32>
    %57 = arith.subf %49, %56 : vector<8x32xf32>
    %58 = arith.mulf %57, %57 : vector<8x32xf32>
    %cst_31 = arith.constant dense<0.000000e+00> : vector<8xf32>
    %59 = vector.multi_reduction <add>, %58, %cst_31 [1] : vector<8x32xf32> to vector<8xf32>
    %60 = vector.shape_cast %59 : vector<8xf32> to vector<8x1xf32>
    %cst_32 = arith.constant 3.200000e+01 : f32
    %61 = vector.broadcast %cst_32 : f32 to vector<8x1xf32>
    %62 = arith.divf %60, %61 : vector<8x1xf32>
    %63 = vector.broadcast %55 : vector<8x1xf32> to vector<8x32xf32>
    %64 = arith.subf %49, %63 : vector<8x32xf32>
    %cst_33 = arith.constant 9.99999996E-13 : f32
    %65 = vector.broadcast %cst_33 : f32 to vector<8x1xf32>
    %66 = arith.addf %62, %65 : vector<8x1xf32>
    %67 = math.rsqrt %66 : vector<8x1xf32>
    %68 = vector.broadcast %67 : vector<8x1xf32> to vector<8x32xf32>
    %69 = arith.mulf %64, %68 : vector<8x32xf32>
    %70 = vector.broadcast %50 : vector<1x32xf32> to vector<8x32xf32>
    %71 = arith.mulf %69, %70 : vector<8x32xf32>
    %72 = vector.broadcast %51 : vector<1x32xf32> to vector<8x32xf32>
    %73 = arith.addf %71, %72 : vector<8x32xf32>
    %74 = arith.truncf %73 : vector<8x32xf32> to vector<8x32xbf16>
    %c0_34 = arith.constant 0 : index
    %c0_35 = arith.constant 0 : index
    %75 = vector.load %arg14[%c0_34, %c0_35] : memref<32x64xbf16, #tpu.memory_space<vmem>>, vector<32x64xbf16>
    %cst_36 = arith.constant dense<0.000000e+00> : vector<8x64xf32>
    %76 = tpu.matmul %74, %75, %cst_36 {dimension_numbers = #tpu.dot_dimension_numbers<[1], [0], [0], [1], [0, 0, 1, 1], [], []>} : vector<8x32xbf16>, vector<32x64xbf16>, vector<8x64xf32> -> vector<8x64xf32>
    %c0_37 = arith.constant 0 : index
    %c0_38 = arith.constant 0 : index
    %77 = vector.load %arg15[%c0_37, %c0_38] : memref<1x64xbf16, #tpu.memory_space<vmem>>, vector<1x64xbf16>
    %78 = arith.extf %77 : vector<1x64xbf16> to vector<1x64xf32>
    %79 = vector.broadcast %78 : vector<1x64xf32> to vector<8x64xf32>
    %80 = arith.addf %76, %79 : vector<8x64xf32>
    %cst_39 = arith.constant 5.000000e-01 : f32
    %81 = vector.broadcast %cst_39 : f32 to vector<8x64xf32>
    %82 = arith.mulf %81, %80 : vector<8x64xf32>
    %cst_40 = arith.constant 0.707106769 : f32
    %83 = vector.broadcast %cst_40 : f32 to vector<8x64xf32>
    %84 = arith.mulf %80, %83 : vector<8x64xf32>
    %85 = math.erf %84 : vector<8x64xf32>
    %cst_41 = arith.constant 1.000000e+00 : f32
    %86 = vector.broadcast %cst_41 : f32 to vector<8x64xf32>
    %87 = arith.addf %86, %85 : vector<8x64xf32>
    %88 = arith.mulf %82, %87 : vector<8x64xf32>
    %89 = arith.truncf %88 : vector<8x64xf32> to vector<8x64xbf16>
    %c0_42 = arith.constant 0 : index
    %c0_43 = arith.constant 0 : index
    %90 = vector.load %arg16[%c0_42, %c0_43] : memref<64x32xbf16, #tpu.memory_space<vmem>>, vector<64x32xbf16>
    %cst_44 = arith.constant dense<0.000000e+00> : vector<8x32xf32>
    %91 = tpu.matmul %89, %90, %cst_44 {dimension_numbers = #tpu.dot_dimension_numbers<[1], [0], [0], [1], [0, 0, 1, 1], [], []>} : vector<8x64xbf16>, vector<64x32xbf16>, vector<8x32xf32> -> vector<8x32xf32>
    %c0_45 = arith.constant 0 : index
    %c0_46 = arith.constant 0 : index
    %92 = vector.load %arg17[%c0_45, %c0_46] : memref<1x32xbf16, #tpu.memory_space<vmem>>, vector<1x32xbf16>
    %93 = arith.extf %92 : vector<1x32xbf16> to vector<1x32xf32>
    %94 = vector.broadcast %93 : vector<1x32xf32> to vector<8x32xf32>
    %95 = arith.addf %91, %94 : vector<8x32xf32>
    %96 = arith.addf %95, %73 : vector<8x32xf32>
    %c0_47 = arith.constant 0 : index
    %c0_48 = arith.constant 0 : index
    %97 = vector.load %arg18[%c0_47, %c0_48] : memref<1x32xf32, #tpu.memory_space<vmem>>, vector<1x32xf32>
    %c0_49 = arith.constant 0 : index
    %c0_50 = arith.constant 0 : index
    %98 = vector.load %arg19[%c0_49, %c0_50] : memref<1x32xf32, #tpu.memory_space<vmem>>, vector<1x32xf32>
    %cst_51 = arith.constant dense<0.000000e+00> : vector<8xf32>
    %99 = vector.multi_reduction <add>, %96, %cst_51 [1] : vector<8x32xf32> to vector<8xf32>
    %100 = vector.shape_cast %99 : vector<8xf32> to vector<8x1xf32>
    %cst_52 = arith.constant 3.200000e+01 : f32
    %101 = vector.broadcast %cst_52 : f32 to vector<8x1xf32>
    %102 = arith.divf %100, %101 : vector<8x1xf32>
    %103 = vector.broadcast %102 : vector<8x1xf32> to vector<8x32xf32>
    %104 = arith.subf %96, %103 : vector<8x32xf32>
    %105 = arith.mulf %104, %104 : vector<8x32xf32>
    %cst_53 = arith.constant dense<0.000000e+00> : vector<8xf32>
    %106 = vector.multi_reduction <add>, %105, %cst_53 [1] : vector<8x32xf32> to vector<8xf32>
    %107 = vector.shape_cast %106 : vector<8xf32> to vector<8x1xf32>
    %cst_54 = arith.constant 3.200000e+01 : f32
    %108 = vector.broadcast %cst_54 : f32 to vector<8x1xf32>
    %109 = arith.divf %107, %108 : vector<8x1xf32>
    %110 = vector.broadcast %102 : vector<8x1xf32> to vector<8x32xf32>
    %111 = arith.subf %96, %110 : vector<8x32xf32>
    %cst_55 = arith.constant 9.99999996E-13 : f32
    %112 = vector.broadcast %cst_55 : f32 to vector<8x1xf32>
    %113 = arith.addf %109, %112 : vector<8x1xf32>
    %114 = math.rsqrt %113 : vector<8x1xf32>
    %115 = vector.broadcast %114 : vector<8x1xf32> to vector<8x32xf32>
    %116 = arith.mulf %111, %115 : vector<8x32xf32>
    %117 = vector.broadcast %97 : vector<1x32xf32> to vector<8x32xf32>
    %118 = arith.mulf %116, %117 : vector<8x32xf32>
    %119 = vector.broadcast %98 : vector<1x32xf32> to vector<8x32xf32>
    %120 = arith.addf %118, %119 : vector<8x32xf32>
    %121 = arith.truncf %120 : vector<8x32xf32> to vector<8x32xbf16>
    %c0_56 = arith.constant 0 : index
    %c0_57 = arith.constant 0 : index
    %c0_58 = arith.constant 0 : index
    %122 = vector.load %arg20[%c0_56, %c0_57, %c0_58] : memref<1x8x32xbf16, #tpu.memory_space<vmem>>, vector<1x8x32xbf16>
    %123 = vector.shape_cast %122 : vector<1x8x32xbf16> to vector<8x32xbf16>
    %124 = vector.shape_cast %121 : vector<8x32xbf16> to vector<1x8x32xbf16>
    tpu.vector_store %arg20[%c0_56, %c0_57, %c0_58], %124 {strides = array<i32>} : memref<1x8x32xbf16, #tpu.memory_space<vmem>>, vector<1x8x32xbf16>,
    return
  }
  func.func @transform_0(%arg0: i32, %arg1: i32) -> (i32, i32, i32) {
    %c0_i32 = arith.constant 0 : i32
    %c0_i32_0 = arith.constant 0 : i32
    %c0_i32_1 = arith.constant 0 : i32
    return %arg0, %c0_i32, %c0_i32_0 : i32, i32, i32
  }
  func.func @transform_1(%arg0: i32, %arg1: i32) -> (i32, i32, i32) {
    %c0_i32 = arith.constant 0 : i32
    %c0_i32_0 = arith.constant 0 : i32
    %c0_i32_1 = arith.constant 0 : i32
    return %arg0, %c0_i32, %c0_i32_0 : i32, i32, i32
  }
  func.func @transform_2(%arg0: i32, %arg1: i32) -> (i32, i32) {
    %c0_i32 = arith.constant 0 : i32
    %c0_i32_0 = arith.constant 0 : i32
    %c0_i32_1 = arith.constant 0 : i32
    return %c0_i32, %c0_i32_0 : i32, i32
  }
  func.func @transform_3(%arg0: i32, %arg1: i32) -> (i32, i32) {
    %c0_i32 = arith.constant 0 : i32
    %c0_i32_0 = arith.constant 0 : i32
    %c0_i32_1 = arith.constant 0 : i32
    return %c0_i32, %c0_i32_0 : i32, i32
  }
  func.func @transform_4(%arg0: i32, %arg1: i32) -> (i32, i32) {
    %c0_i32 = arith.constant 0 : i32
    %c0_i32_0 = arith.constant 0 : i32
    %c0_i32_1 = arith.constant 0 : i32
    return %c0_i32, %c0_i32_0 : i32, i32
  }
  func.func @transform_5(%arg0: i32, %arg1: i32) -> (i32, i32) {
    %c0_i32 = arith.constant 0 : i32
    %c0_i32_0 = arith.constant 0 : i32
    %c0_i32_1 = arith.constant 0 : i32
    return %c0_i32, %c0_i32_0 : i32, i32
  }
  func.func @transform_6(%arg0: i32, %arg1: i32) -> (i32, i32) {
    %c0_i32 = arith.constant 0 : i32
    %c0_i32_0 = arith.constant 0 : i32
    %c0_i32_1 = arith.constant 0 : i32
    return %c0_i32, %c0_i32_0 : i32, i32
  }
  func.func @transform_7(%arg0: i32, %arg1: i32) -> (i32, i32) {
    %c0_i32 = arith.constant 0 : i32
    %c0_i32_0 = arith.constant 0 : i32
    %c0_i32_1 = arith.constant 0 : i32
    return %c0_i32, %c0_i32_0 : i32, i32
  }
  func.func @transform_8(%arg0: i32, %arg1: i32) -> (i32, i32) {
    %c0_i32 = arith.constant 0 : i32
    %c0_i32_0 = arith.constant 0 : i32
    %c0_i32_1 = arith.constant 0 : i32
    return %c0_i32, %c0_i32_0 : i32, i32
  }
  func.func @transform_9(%arg0: i32, %arg1: i32) -> (i32, i32) {
    %c0_i32 = arith.constant 0 : i32
    %c0_i32_0 = arith.constant 0 : i32
    %c0_i32_1 = arith.constant 0 : i32
    return %c0_i32, %c0_i32_0 : i32, i32
  }
  func.func @transform_10(%arg0: i32, %arg1: i32) -> (i32, i32) {
    %c0_i32 = arith.constant 0 : i32
    %c0_i32_0 = arith.constant 0 : i32
    %c0_i32_1 = arith.constant 0 : i32
    return %c0_i32, %c0_i32_0 : i32, i32
  }
  func.func @transform_11(%arg0: i32, %arg1: i32) -> (i32, i32) {
    %c0_i32 = arith.constant 0 : i32
    %c0_i32_0 = arith.constant 0 : i32
    %c0_i32_1 = arith.constant 0 : i32
    return %c0_i32, %c0_i32_0 : i32, i32
  }
  func.func @transform_12(%arg0: i32, %arg1: i32) -> (i32, i32) {
    %c0_i32 = arith.constant 0 : i32
    %c0_i32_0 = arith.constant 0 : i32
    %c0_i32_1 = arith.constant 0 : i32
    return %c0_i32, %c0_i32_0 : i32, i32
  }
  func.func @transform_13(%arg0: i32, %arg1: i32) -> (i32, i32) {
    %c0_i32 = arith.constant 0 : i32
    %c0_i32_0 = arith.constant 0 : i32
    %c0_i32_1 = arith.constant 0 : i32
    return %c0_i32, %c0_i32_0 : i32, i32
  }
  func.func @transform_14(%arg0: i32, %arg1: i32) -> (i32, i32) {
    %c0_i32 = arith.constant 0 : i32
    %c0_i32_0 = arith.constant 0 : i32
    %c0_i32_1 = arith.constant 0 : i32
    return %c0_i32, %c0_i32_0 : i32, i32
  }
  func.func @transform_15(%arg0: i32, %arg1: i32) -> (i32, i32) {
    %c0_i32 = arith.constant 0 : i32
    %c0_i32_0 = arith.constant 0 : i32
    %c0_i32_1 = arith.constant 0 : i32
    return %c0_i32, %c0_i32_0 : i32, i32
  }
  func.func @transform_16(%arg0: i32, %arg1: i32) -> (i32, i32) {
    %c0_i32 = arith.constant 0 : i32
    %c0_i32_0 = arith.constant 0 : i32
    %c0_i32_1 = arith.constant 0 : i32
    return %c0_i32, %c0_i32_0 : i32, i32
  }
  func.func @transform_17(%arg0: i32, %arg1: i32) -> (i32, i32) {
    %c0_i32 = arith.constant 0 : i32
    %c0_i32_0 = arith.constant 0 : i32
    %c0_i32_1 = arith.constant 0 : i32
    return %c0_i32, %c0_i32_0 : i32, i32
  }
  func.func @transform_18(%arg0: i32, %arg1: i32) -> (i32, i32, i32) {
    %c0_i32 = arith.constant 0 : i32
    %c0_i32_0 = arith.constant 0 : i32
    return %arg0, %arg1, %c0_i32 : i32, i32, i32
  }
}

</mosaic_0001>

<llo_original>
// kernel: tpu_custom_call.1
$region0: #{tpu_custom_call.1}
  #allocation0 [shape = 'u32[]', space=smem, size = 0x4, offset = 0x4, fixed_abs, tag = 'smem constant byte address 0x4 - core index']
  #allocation1 [shape = 'u32[72,128]{1,0:T(1,128)}', space=vmem, size = 0x9000, scoped, tag = 'internal scratch']
  #allocation2 [shape = 'bf16[4,8,8]{2,1,0:T(8,128)(2,1)}', space=vmem, size = 0x2000, scoped, tag = 'scratch operand']
  #allocation3 [shape = 'bf16[4,8,8]{2,1,0:T(8,128)(2,1)}', space=vmem, size = 0x2000, scoped, tag = 'scratch operand']
  %s0 = inlined_call_operand.hbm [shape: bf16[2,8,32], index: 0, kind: input, shape index: {}]
  %s1 = inlined_call_operand.hbm [shape: f32[2,1,8], index: 1, kind: input, shape index: {}]
  %s2 = inlined_call_operand.vmem [shape: bf16[32,32], index: 2, kind: input, shape index: {}]
  %s3 = inlined_call_operand.vmem [shape: bf16[1,32], index: 3, kind: input, shape index: {}]
  %s4 = inlined_call_operand.vmem [shape: bf16[32,32], index: 4, kind: input, shape index: {}]
  %s5 = inlined_call_operand.vmem [shape: bf16[1,32], index: 5, kind: input, shape index: {}]
  %s6 = inlined_call_operand.vmem [shape: bf16[32,32], index: 6, kind: input, shape index: {}]
  %s7 = inlined_call_operand.vmem [shape: bf16[1,32], index: 7, kind: input, shape index: {}]
  %s8 = inlined_call_operand.hbm [shape: bf16[32,32], index: 8, kind: input, shape index: {}]
  %s9 = inlined_call_operand.vmem [shape: bf16[1,32], index: 9, kind: input, shape index: {}]
  %s10 = inlined_call_operand.vmem [shape: f32[1,32], index: 10, kind: input, shape index: {}]
  %s11 = inlined_call_operand.vmem [shape: f32[1,32], index: 11, kind: input, shape index: {}]
  %s12 = inlined_call_operand.hbm [shape: bf16[32,64], index: 12, kind: input, shape index: {}]
  %s13 = inlined_call_operand.vmem [shape: bf16[1,64], index: 13, kind: input, shape index: {}]
  %s14 = inlined_call_operand.vmem [shape: bf16[64,32], index: 14, kind: input, shape index: {}]
  %s15 = inlined_call_operand.vmem [shape: bf16[1,32], index: 15, kind: input, shape index: {}]
  %s16 = inlined_call_operand.vmem [shape: f32[1,32], index: 16, kind: input, shape index: {}]
  %s17 = inlined_call_operand.vmem [shape: f32[1,32], index: 17, kind: input, shape index: {}]
  %s18 = inlined_call_operand.hbm [shape: bf16[2,8,32], index: 18, kind: output, shape index: {}]
  %s19 = sld [smem:[#allocation0]]
  $region125: #{tpu_custom_call.1} parent=0
    _
  %s21 = ssub.s32 1, %s19
  %s22 = scalar_select 0, %s21, %s19
  $region1: #{tpu_custom_call.1} parent=0
    #allocation4 [shape = 'u8[4096]{0}', space=vmem, size = 0x1000, scoped, tag = 'input window, operand 0']
    #allocation5 [shape = 's32[2]{0}', space=sflag, size = 0x8, scoped, tag = 'scoped memory for tpu_custom_call.1']
    #allocation6 [shape = 's32[2]{0}', space=sflag, size = 0x8, scoped, tag = 'scoped memory for tpu_custom_call.1']
    #allocation7 [shape = 'u8[1024]{0}', space=vmem, size = 0x400, scoped, tag = 'input window, operand 1']
    #allocation8 [shape = 's32[2]{0}', space=sflag, size = 0x8, scoped, tag = 'scoped memory for tpu_custom_call.1']
    #allocation9 [shape = 'u8[8192]{0}', space=vmem, size = 0x2000, scoped, tag = 'input window, operand 8, single buffered']
    #allocation10 [shape = 'u8[8192]{0}', space=vmem, size = 0x2000, scoped, tag = 'input window, operand 12, single buffered']
    #allocation11 [shape = 's32[1]{0}', space=sflag, size = 0x4, scoped, tag = 'scoped memory for tpu_custom_call.1']
    #allocation12 [shape = 'u8[4096]{0}', space=vmem, size = 0x1000, scoped, tag = 'output window, operand 0']
    %23 = vsyncpa [#allocation5], 0
    %s24 = scalar_lea.sflag [#allocation5], 1
    %25 = vsyncpa %s24, 0
    %26 = vsyncpa [#allocation8], 0
    %s27 = scalar_lea.sflag [#allocation8], 1
    %28 = vsyncpa %s27, 0
    %29 = vsyncpa [#allocation11], 0
    %30 = vsyncpa [#allocation6], 0
    %s31 = scalar_lea.sflag [#allocation6], 1
    %32 = vsyncpa %s31, 0
    loop: start=0, step=1, limit=4
    $region2: #{tpu_custom_call.1} parent=1 // loop_pre_header
      _
    $region3: #{tpu_custom_call.1} parent=1 // loop_header
      %s34 = sphi 0, %s38
      %p35 = scmp.ge.s32.totalorder %s34, 4
      %s41 = sphi 0, %s53
      %s42 = sphi 0, %s49
      %s43 = sphi 0, %s41
      %s44 = sphi 0, %s42
      %s45 = sphi 0, %s43
      %s46 = sphi 0, %s44
      %s56 = sphi 0, %s58
      %s59 = sphi 0, %s56
      %s60 = sphi 0, %s59
      %s76 = sphi 0, %s60
      %s82 = sphi 0, %s84
      %s85 = sphi 0, %s82
      %s86 = sphi 0, %s85
      %s102 = sphi 0, %s86
      %s106 = sphi 0, %s106
      %s108 = sphi 0, %s106
      %s109 = sphi 0, %s108
      %s123 = sphi 0, %s109
      %s127 = sphi 0, %s127
      %s129 = sphi 0, %s127
      %s130 = sphi 0, %s129
      %s144 = sphi 0, %s130
      %s148 = sphi 0, %s148
      %s150 = sphi 0, %s148
      %s151 = sphi 0, %s150
      %s165 = sphi 0, %s151
      %s169 = sphi 0, %s169
      %s171 = sphi 0, %s169
      %s172 = sphi 0, %s171
      %s186 = sphi 0, %s172
      %s190 = sphi 0, %s190
      %s192 = sphi 0, %s190
      %s193 = sphi 0, %s192
      %s207 = sphi 0, %s193
      %s211 = sphi 0, %s211
      %s213 = sphi 0, %s211
      %s214 = sphi 0, %s213
      %s228 = sphi 0, %s214
      %s232 = sphi 0, %s232
      %s234 = sphi 0, %s232
      %s235 = sphi 0, %s234
      %s249 = sphi 0, %s235
      %s253 = sphi 0, %s253
      %s255 = sphi 0, %s253
      %s256 = sphi 0, %s255
      %s270 = sphi 0, %s256
      %s274 = sphi 0, %s274
      %s276 = sphi 0, %s274
      %s277 = sphi 0, %s276
      %s291 = sphi 0, %s277
      %s295 = sphi 0, %s295
      %s297 = sphi 0, %s295
      %s298 = sphi 0, %s297
      %s312 = sphi 0, %s298
      %s316 = sphi 0, %s316
      %s318 = sphi 0, %s316
      %s319 = sphi 0, %s318
      %s333 = sphi 0, %s319
      %s337 = sphi 0, %s337
      %s339 = sphi 0, %s337
      %s340 = sphi 0, %s339
      %s354 = sphi 0, %s340
      %s358 = sphi 0, %s358
      %s360 = sphi 0, %s358
      %s361 = sphi 0, %s360
      %s375 = sphi 0, %s361
      %s379 = sphi 0, %s379
      %s381 = sphi 0, %s379
      %s382 = sphi 0, %s381
      %s396 = sphi 0, %s382
      %s400 = sphi 0, %s400
      %s402 = sphi 0, %s400
      %s403 = sphi 0, %s402
      %s417 = sphi 0, %s403
      %s421 = sphi 0, %s421
      %s423 = sphi 0, %s421
      %s424 = sphi 0, %s423
      %s438 = sphi 0, %s424
      %s446 = sphi 0, %s448
      %s449 = sphi 0, %s446
      %s450 = sphi 0, %s449
      %s466 = sphi 0, %s450
    $region4: #{tpu_custom_call.1} parent=1 // loop_header_branch
      %37 = sbr.rel (%p35) target = $region8
    $region5: #{tpu_custom_call.1} parent=1 // loop_body
      %s39 = ssub.s32 %s34, 1
      %s40 = ssub.s32 %s34, 2
      %s47 = sadd.s32 1, %s42
      %p48 = scmp.ge.s32.totalorder %s47, 1
      %s49 = scalar_select %p48, 0, %s47
      %s50 = sadd.s32 1, %s41
      %s51 = scalar_select %p48, %s50, %s41
      %p52 = scmp.ge.s32.totalorder %s51, 2
      %s53 = scalar_select %p52, 0, %s51
      %s54 = ssub.s32 %s41, %s53
      %p55 = scmp.eq.s32.totalorder %s54, 0
      %s57 = sadd.s32 %s56, 1
      %s58 = scalar_select %p55, %s56, %s57
      %p61 = pneg %p55
      %p62 = scmp.eq.s32.totalorder %s34, 1
      %p63 = por %p61, %p62
      %p64 = scmp.ne.s32.totalorder %s56, %s59
      %p65 = scmp.eq.s32.totalorder %s34, 0
      %p66 = por %p64, %p65
      %p67 = scmp.ne.s32.totalorder %s56, %s59
      %p68 = scmp.eq.s32.totalorder %s39, 1
      %p69 = por %p67, %p68
      %p70 = scmp.ne.s32.totalorder %s59, %s60
      %p71 = scmp.eq.s32.totalorder %s39, 0
      %p72 = por %p70, %p71
      %p73 = scmp.ne.s32.totalorder %s59, %s60
      %p74 = scmp.eq.s32.totalorder %s40, 1
      %p75 = por %p73, %p74
      %p77 = scmp.ne.s32.totalorder %s60, %s76
      %p78 = scmp.eq.s32.totalorder %s40, 0
      %p79 = por %p77, %p78
      %s80 = ssub.s32 %s41, %s53
      %p81 = scmp.eq.s32.totalorder %s80, 0
      %s83 = sadd.s32 %s82, 1
      %s84 = scalar_select %p81, %s82, %s83
      %p87 = pneg %p81
      %p88 = scmp.eq.s32.totalorder %s34, 1
      %p89 = por %p87, %p88
      %p90 = scmp.ne.s32.totalorder %s82, %s85
      %p91 = scmp.eq.s32.totalorder %s34, 0
      %p92 = por %p90, %p91
      %p93 = scmp.ne.s32.totalorder %s82, %s85
      %p94 = scmp.eq.s32.totalorder %s39, 1
      %p95 = por %p93, %p94
      %p96 = scmp.ne.s32.totalorder %s85, %s86
      %p97 = scmp.eq.s32.totalorder %s39, 0
      %p98 = por %p96, %p97
      %p99 = scmp.ne.s32.totalorder %s85, %s86
      %p100 = scmp.eq.s32.totalorder %s40, 1
      %p101 = por %p99, %p100
      %p103 = scmp.ne.s32.totalorder %s86, %s102
      %p104 = scmp.eq.s32.totalorder %s40, 0
      %p105 = por %p103, %p104
      %s107 = sadd.s32 %s106, 1
      %p110 = scmp.eq.s32.totalorder %s34, 1
      %p111 = scmp.ne.s32.totalorder %s106, %s108
      %p112 = scmp.eq.s32.totalorder %s34, 0
      %p113 = por %p111, %p112
      %p114 = scmp.ne.s32.totalorder %s106, %s108
      %p115 = scmp.eq.s32.totalorder %s39, 1
      %p116 = por %p114, %p115
      %p117 = scmp.ne.s32.totalorder %s108, %s109
      %p118 = scmp.eq.s32.totalorder %s39, 0
      %p119 = por %p117, %p118
      %p120 = scmp.ne.s32.totalorder %s108, %s109
      %p121 = scmp.eq.s32.totalorder %s40, 1
      %p122 = por %p120, %p121
      %p124 = scmp.ne.s32.totalorder %s109, %s123
      %p125 = scmp.eq.s32.totalorder %s40, 0
      %p126 = por %p124, %p125
      %s128 = sadd.s32 %s127, 1
      %p131 = scmp.eq.s32.totalorder %s34, 1
      %p132 = scmp.ne.s32.totalorder %s127, %s129
      %p133 = scmp.eq.s32.totalorder %s34, 0
      %p134 = por %p132, %p133
      %p135 = scmp.ne.s32.totalorder %s127, %s129
      %p136 = scmp.eq.s32.totalorder %s39, 1
      %p137 = por %p135, %p136
      %p138 = scmp.ne.s32.totalorder %s129, %s130
      %p139 = scmp.eq.s32.totalorder %s39, 0
      %p140 = por %p138, %p139
      %p141 = scmp.ne.s32.totalorder %s129, %s130
      %p142 = scmp.eq.s32.totalorder %s40, 1
      %p143 = por %p141, %p142
      %p145 = scmp.ne.s32.totalorder %s130, %s144
      %p146 = scmp.eq.s32.totalorder %s40, 0
      %p147 = por %p145, %p146
      %s149 = sadd.s32 %s148, 1
      %p152 = scmp.eq.s32.totalorder %s34, 1
      %p153 = scmp.ne.s32.totalorder %s148, %s150
      %p154 = scmp.eq.s32.totalorder %s34, 0
      %p155 = por %p153, %p154
      %p156 = scmp.ne.s32.totalorder %s148, %s150
      %p157 = scmp.eq.s32.totalorder %s39, 1
      %p158 = por %p156, %p157
      %p159 = scmp.ne.s32.totalorder %s150, %s151
      %p160 = scmp.eq.s32.totalorder %s39, 0
      %p161 = por %p159, %p160
      %p162 = scmp.ne.s32.totalorder %s150, %s151
      %p163 = scmp.eq.s32.totalorder %s40, 1
      %p164 = por %p162, %p163
      %p166 = scmp.ne.s32.totalorder %s151, %s165
      %p167 = scmp.eq.s32.totalorder %s40, 0
      %p168 = por %p166, %p167
      %s170 = sadd.s32 %s169, 1
      %p173 = scmp.eq.s32.totalorder %s34, 1
      %p174 = scmp.ne.s32.totalorder %s169, %s171
      %p175 = scmp.eq.s32.totalorder %s34, 0
      %p176 = por %p174, %p175
      %p177 = scmp.ne.s32.totalorder %s169, %s171
      %p178 = scmp.eq.s32.totalorder %s39, 1
      %p179 = por %p177, %p178
      %p180 = scmp.ne.s32.totalorder %s171, %s172
      %p181 = scmp.eq.s32.totalorder %s39, 0
      %p182 = por %p180, %p181
      %p183 = scmp.ne.s32.totalorder %s171, %s172
      %p184 = scmp.eq.s32.totalorder %s40, 1
      %p185 = por %p183, %p184
      %p187 = scmp.ne.s32.totalorder %s172, %s186
      %p188 = scmp.eq.s32.totalorder %s40, 0
      %p189 = por %p187, %p188
      %s191 = sadd.s32 %s190, 1
      %p194 = scmp.eq.s32.totalorder %s34, 1
      %p195 = scmp.ne.s32.totalorder %s190, %s192
      %p196 = scmp.eq.s32.totalorder %s34, 0
      %p197 = por %p195, %p196
      %p198 = scmp.ne.s32.totalorder %s190, %s192
      %p199 = scmp.eq.s32.totalorder %s39, 1
      %p200 = por %p198, %p199
      %p201 = scmp.ne.s32.totalorder %s192, %s193
      %p202 = scmp.eq.s32.totalorder %s39, 0
      %p203 = por %p201, %p202
      %p204 = scmp.ne.s32.totalorder %s192, %s193
      %p205 = scmp.eq.s32.totalorder %s40, 1
      %p206 = por %p204, %p205
      %p208 = scmp.ne.s32.totalorder %s193, %s207
      %p209 = scmp.eq.s32.totalorder %s40, 0
      %p210 = por %p208, %p209
      %s212 = sadd.s32 %s211, 1
      %p215 = scmp.eq.s32.totalorder %s34, 1
      %p216 = scmp.ne.s32.totalorder %s211, %s213
      %p217 = scmp.eq.s32.totalorder %s34, 0
      %p218 = por %p216, %p217
      %p219 = scmp.ne.s32.totalorder %s211, %s213
      %p220 = scmp.eq.s32.totalorder %s39, 1
      %p221 = por %p219, %p220
      %p222 = scmp.ne.s32.totalorder %s213, %s214
      %p223 = scmp.eq.s32.totalorder %s39, 0
      %p224 = por %p222, %p223
      %p225 = scmp.ne.s32.totalorder %s213, %s214
      %p226 = scmp.eq.s32.totalorder %s40, 1
      %p227 = por %p225, %p226
      %p229 = scmp.ne.s32.totalorder %s214, %s228
      %p230 = scmp.eq.s32.totalorder %s40, 0
      %p231 = por %p229, %p230
      %s233 = sadd.s32 %s232, 1
      %p236 = scmp.eq.s32.totalorder %s34, 1
      %p237 = scmp.ne.s32.totalorder %s232, %s234
      %p238 = scmp.eq.s32.totalorder %s34, 0
      %p239 = por %p237, %p238
      %p240 = scmp.ne.s32.totalorder %s232, %s234
      %p241 = scmp.eq.s32.totalorder %s39, 1
      %p242 = por %p240, %p241
      %p243 = scmp.ne.s32.totalorder %s234, %s235
      %p244 = scmp.eq.s32.totalorder %s39, 0
      %p245 = por %p243, %p244
      %p246 = scmp.ne.s32.totalorder %s234, %s235
      %p247 = scmp.eq.s32.totalorder %s40, 1
      %p248 = por %p246, %p247
      %p250 = scmp.ne.s32.totalorder %s235, %s249
      %p251 = scmp.eq.s32.totalorder %s40, 0
      %p252 = por %p250, %p251
      %s254 = sadd.s32 %s253, 1
      %p257 = scmp.eq.s32.totalorder %s34, 1
      %p258 = scmp.ne.s32.totalorder %s253, %s255
      %p259 = scmp.eq.s32.totalorder %s34, 0
      %p260 = por %p258, %p259
      %p261 = scmp.ne.s32.totalorder %s253, %s255
      %p262 = scmp.eq.s32.totalorder %s39, 1
      %p263 = por %p261, %p262
      %p264 = scmp.ne.s32.totalorder %s255, %s256
      %p265 = scmp.eq.s32.totalorder %s39, 0
      %p266 = por %p264, %p265
      %p267 = scmp.ne.s32.totalorder %s255, %s256
      %p268 = scmp.eq.s32.totalorder %s40, 1
      %p269 = por %p267, %p268
      %p271 = scmp.ne.s32.totalorder %s256, %s270
      %p272 = scmp.eq.s32.totalorder %s40, 0
      %p273 = por %p271, %p272
      %s275 = sadd.s32 %s274, 1
      %p278 = scmp.eq.s32.totalorder %s34, 1
      %p279 = scmp.ne.s32.totalorder %s274, %s276
      %p280 = scmp.eq.s32.totalorder %s34, 0
      %p281 = por %p279, %p280
      %p282 = scmp.ne.s32.totalorder %s274, %s276
      %p283 = scmp.eq.s32.totalorder %s39, 1
      %p284 = por %p282, %p283
      %p285 = scmp.ne.s32.totalorder %s276, %s277
      %p286 = scmp.eq.s32.totalorder %s39, 0
      %p287 = por %p285, %p286
      %p288 = scmp.ne.s32.totalorder %s276, %s277
      %p289 = scmp.eq.s32.totalorder %s40, 1
      %p290 = por %p288, %p289
      %p292 = scmp.ne.s32.totalorder %s277, %s291
      %p293 = scmp.eq.s32.totalorder %s40, 0
      %p294 = por %p292, %p293
      %s296 = sadd.s32 %s295, 1
      %p299 = scmp.eq.s32.totalorder %s34, 1
      %p300 = scmp.ne.s32.totalorder %s295, %s297
      %p301 = scmp.eq.s32.totalorder %s34, 0
      %p302 = por %p300, %p301
      %p303 = scmp.ne.s32.totalorder %s295, %s297
      %p304 = scmp.eq.s32.totalorder %s39, 1
      %p305 = por %p303, %p304
      %p306 = scmp.ne.s32.totalorder %s297, %s298
      %p307 = scmp.eq.s32.totalorder %s39, 0
      %p308 = por %p306, %p307
      %p309 = scmp.ne.s32.totalorder %s297, %s298
      %p310 = scmp.eq.s32.totalorder %s40, 1
      %p311 = por %p309, %p310
      %p313 = scmp.ne.s32.totalorder %s298, %s312
      %p314 = scmp.eq.s32.totalorder %s40, 0
      %p315 = por %p313, %p314
      %s317 = sadd.s32 %s316, 1
      %p320 = scmp.eq.s32.totalorder %s34, 1
      %p321 = scmp.ne.s32.totalorder %s316, %s318
      %p322 = scmp.eq.s32.totalorder %s34, 0
      %p323 = por %p321, %p322
      %p324 = scmp.ne.s32.totalorder %s316, %s318
      %p325 = scmp.eq.s32.totalorder %s39, 1
      %p326 = por %p324, %p325
      %p327 = scmp.ne.s32.totalorder %s318, %s319
      %p328 = scmp.eq.s32.totalorder %s39, 0
      %p329 = por %p327, %p328
      %p330 = scmp.ne.s32.totalorder %s318, %s319
      %p331 = scmp.eq.s32.totalorder %s40, 1
      %p332 = por %p330, %p331
      %p334 = scmp.ne.s32.totalorder %s319, %s333
      %p335 = scmp.eq.s32.totalorder %s40, 0
      %p336 = por %p334, %p335
      %s338 = sadd.s32 %s337, 1
      %p341 = scmp.eq.s32.totalorder %s34, 1
      %p342 = scmp.ne.s32.totalorder %s337, %s339
      %p343 = scmp.eq.s32.totalorder %s34, 0
      %p344 = por %p342, %p343
      %p345 = scmp.ne.s32.totalorder %s337, %s339
      %p346 = scmp.eq.s32.totalorder %s39, 1
      %p347 = por %p345, %p346
      %p348 = scmp.ne.s32.totalorder %s339, %s340
      %p349 = scmp.eq.s32.totalorder %s39, 0
      %p350 = por %p348, %p349
      %p351 = scmp.ne.s32.totalorder %s339, %s340
      %p352 = scmp.eq.s32.totalorder %s40, 1
      %p353 = por %p351, %p352
      %p355 = scmp.ne.s32.totalorder %s340, %s354
      %p356 = scmp.eq.s32.totalorder %s40, 0
      %p357 = por %p355, %p356
      %s359 = sadd.s32 %s358, 1
      %p362 = scmp.eq.s32.totalorder %s34, 1
      %p363 = scmp.ne.s32.totalorder %s358, %s360
      %p364 = scmp.eq.s32.totalorder %s34, 0
      %p365 = por %p363, %p364
      %p366 = scmp.ne.s32.totalorder %s358, %s360
      %p367 = scmp.eq.s32.totalorder %s39, 1
      %p368 = por %p366, %p367
      %p369 = scmp.ne.s32.totalorder %s360, %s361
      %p370 = scmp.eq.s32.totalorder %s39, 0
      %p371 = por %p369, %p370
      %p372 = scmp.ne.s32.totalorder %s360, %s361
      %p373 = scmp.eq.s32.totalorder %s40, 1
      %p374 = por %p372, %p373
      %p376 = scmp.ne.s32.totalorder %s361, %s375
      %p377 = scmp.eq.s32.totalorder %s40, 0
      %p378 = por %p376, %p377
      %s380 = sadd.s32 %s379, 1
      %p383 = scmp.eq.s32.totalorder %s34, 1
      %p384 = scmp.ne.s32.totalorder %s379, %s381
      %p385 = scmp.eq.s32.totalorder %s34, 0
      %p386 = por %p384, %p385
      %p387 = scmp.ne.s32.totalorder %s379, %s381
      %p388 = scmp.eq.s32.totalorder %s39, 1
      %p389 = por %p387, %p388
      %p390 = scmp.ne.s32.totalorder %s381, %s382
      %p391 = scmp.eq.s32.totalorder %s39, 0
      %p392 = por %p390, %p391
      %p393 = scmp.ne.s32.totalorder %s381, %s382
      %p394 = scmp.eq.s32.totalorder %s40, 1
      %p395 = por %p393, %p394
      %p397 = scmp.ne.s32.totalorder %s382, %s396
      %p398 = scmp.eq.s32.totalorder %s40, 0
      %p399 = por %p397, %p398
      %s401 = sadd.s32 %s400, 1
      %p404 = scmp.eq.s32.totalorder %s34, 1
      %p405 = scmp.ne.s32.totalorder %s400, %s402
      %p406 = scmp.eq.s32.totalorder %s34, 0
      %p407 = por %p405, %p406
      %p408 = scmp.ne.s32.totalorder %s400, %s402
      %p409 = scmp.eq.s32.totalorder %s39, 1
      %p410 = por %p408, %p409
      %p411 = scmp.ne.s32.totalorder %s402, %s403
      %p412 = scmp.eq.s32.totalorder %s39, 0
      %p413 = por %p411, %p412
      %p414 = scmp.ne.s32.totalorder %s402, %s403
      %p415 = scmp.eq.s32.totalorder %s40, 1
      %p416 = por %p414, %p415
      %p418 = scmp.ne.s32.totalorder %s403, %s417
      %p419 = scmp.eq.s32.totalorder %s40, 0
      %p420 = por %p418, %p419
      %s422 = sadd.s32 %s421, 1
      %p425 = scmp.eq.s32.totalorder %s34, 1
      %p426 = scmp.ne.s32.totalorder %s421, %s423
      %p427 = scmp.eq.s32.totalorder %s34, 0
      %p428 = por %p426, %p427
      %p429 = scmp.ne.s32.totalorder %s421, %s423
      %p430 = scmp.eq.s32.totalorder %s39, 1
      %p431 = por %p429, %p430
      %p432 = scmp.ne.s32.totalorder %s423, %s424
      %p433 = scmp.eq.s32.totalorder %s39, 0
      %p434 = por %p432, %p433
      %p435 = scmp.ne.s32.totalorder %s423, %s424
      %p436 = scmp.eq.s32.totalorder %s40, 1
      %p437 = por %p435, %p436
      %p439 = scmp.ne.s32.totalorder %s424, %s438
      %p440 = scmp.eq.s32.totalorder %s40, 0
      %p441 = por %p439, %p440
      %s442 = ssub.s32 %s41, %s53
      %s443 = ssub.s32 %s42, %s49
      %s444 = sor.u32 %s442, %s443
      %p445 = scmp.eq.s32.totalorder %s444, 0
      %s447 = sadd.s32 %s446, 1
      %s448 = scalar_select %p445, %s446, %s447
      %p451 = pneg %p445
      %p452 = scmp.eq.s32.totalorder %s34, 1
      %p453 = por %p451, %p452
      %p454 = scmp.ne.s32.totalorder %s446, %s449
      %p455 = scmp.eq.s32.totalorder %s34, 0
      %p456 = por %p454, %p455
      %p457 = scmp.ne.s32.totalorder %s446, %s449
      %p458 = scmp.eq.s32.totalorder %s39, 1
      %p459 = por %p457, %p458
      %p460 = scmp.ne.s32.totalorder %s449, %s450
      %p461 = scmp.eq.s32.totalorder %s39, 0
      %p462 = por %p460, %p461
      %p463 = scmp.ne.s32.totalorder %s449, %s450
      %p464 = scmp.eq.s32.totalorder %s40, 1
      %p465 = por %p463, %p464
      %p467 = scmp.ne.s32.totalorder %s450, %s466
      %p468 = scmp.eq.s32.totalorder %s40, 0
      %p469 = por %p467, %p468
      %p470 = scmp.le.s32.totalorder 1, %s34
      %p471 = scmp.lt.s32.totalorder %s34, 3
      %p472 = pnand %p470, %p471
      %p473 = pneg %p472
      // Predicated region
      $region9: #{tpu_custom_call.1} parent=5 // pred_check
        _
      $region10: #{tpu_custom_call.1} parent=5 // pred_check_branch
        %475 = sbr.rel (%p472) target = $region12
      $region11: #{tpu_custom_call.1} parent=5 // pred_region
        %s476 = ssub.s32 %s34, 1
        // Predicated region
        $region13: #{tpu_custom_call.1} parent=11 // pred_check
          %p477 = pneg %p119
        $region14: #{tpu_custom_call.1} parent=11 // pred_check_branch
          %479 = sbr.rel (%p477) target = $region16
        $region15: #{tpu_custom_call.1} parent=11 // pred_region
          _
        $region16: #{tpu_custom_call.1} parent=11 // pred_fallthru
          _
        // Predicated region
        $region17: #{tpu_custom_call.1} parent=11 // pred_check
          %p480 = pneg %p140
        $region18: #{tpu_custom_call.1} parent=11 // pred_check_branch
          %482 = sbr.rel (%p480) target = $region20
        $region19: #{tpu_custom_call.1} parent=11 // pred_region
          _
        $region20: #{tpu_custom_call.1} parent=11 // pred_fallthru
          _
        // Predicated region
        $region21: #{tpu_custom_call.1} parent=11 // pred_check
          %p483 = pneg %p161
        $region22: #{tpu_custom_call.1} parent=11 // pred_check_branch
          %485 = sbr.rel (%p483) target = $region24
        $region23: #{tpu_custom_call.1} parent=11 // pred_region
          _
        $region24: #{tpu_custom_call.1} parent=11 // pred_fallthru
          _
        // Predicated region
        $region25: #{tpu_custom_call.1} parent=11 // pred_check
          %p486 = pneg %p182
        $region26: #{tpu_custom_call.1} parent=11 // pred_check_branch
          %488 = sbr.rel (%p486) target = $region28
        $region27: #{tpu_custom_call.1} parent=11 // pred_region
          _
        $region28: #{tpu_custom_call.1} parent=11 // pred_fallthru
          _
        // Predicated region
        $region29: #{tpu_custom_call.1} parent=11 // pred_check
          %p489 = pneg %p203
        $region30: #{tpu_custom_call.1} parent=11 // pred_check_branch
          %491 = sbr.rel (%p489) target = $region32
        $region31: #{tpu_custom_call.1} parent=11 // pred_region
          _
        $region32: #{tpu_custom_call.1} parent=11 // pred_fallthru
          _
        // Predicated region
        $region33: #{tpu_custom_call.1} parent=11 // pred_check
          %p492 = pneg %p224
        $region34: #{tpu_custom_call.1} parent=11 // pred_check_branch
          %494 = sbr.rel (%p492) target = $region36
        $region35: #{tpu_custom_call.1} parent=11 // pred_region
          _
        $region36: #{tpu_custom_call.1} parent=11 // pred_fallthru
          _
        // Predicated region
        $region37: #{tpu_custom_call.1} parent=11 // pred_check
          %p495 = pneg %p245
        $region38: #{tpu_custom_call.1} parent=11 // pred_check_branch
          %497 = sbr.rel (%p495) target = $region40
        $region39: #{tpu_custom_call.1} parent=11 // pred_region
          %499 = vsyncadd [#allocation8], 0
          %s500 = sshll.u32 %s8, 4
          %s501 = int_to_ptr.hbm [resolvable:$true] %s500
          %s502 = sshll.u32 [#allocation9], 4
          %s503 = int_to_ptr.vmem [resolvable:$true] %s502
          %508 = dma.hbm_to_vmem [thread:$0]  %s501, 256, %s503, [#allocation8], 64, 64, 4
        $region40: #{tpu_custom_call.1} parent=11 // pred_fallthru
          _
        // Predicated region
        $region41: #{tpu_custom_call.1} parent=11 // pred_check
          %p509 = pneg %p266
        $region42: #{tpu_custom_call.1} parent=11 // pred_check_branch
          %511 = sbr.rel (%p509) target = $region44
        $region43: #{tpu_custom_call.1} parent=11 // pred_region
          _
        $region44: #{tpu_custom_call.1} parent=11 // pred_fallthru
          _
        // Predicated region
        $region45: #{tpu_custom_call.1} parent=11 // pred_check
          %p512 = pneg %p287
        $region46: #{tpu_custom_call.1} parent=11 // pred_check_branch
          %514 = sbr.rel (%p512) target = $region48
        $region47: #{tpu_custom_call.1} parent=11 // pred_region
          _
        $region48: #{tpu_custom_call.1} parent=11 // pred_fallthru
          _
        // Predicated region
        $region49: #{tpu_custom_call.1} parent=11 // pred_check
          %p515 = pneg %p308
        $region50: #{tpu_custom_call.1} parent=11 // pred_check_branch
          %517 = sbr.rel (%p515) target = $region52
        $region51: #{tpu_custom_call.1} parent=11 // pred_region
          _
        $region52: #{tpu_custom_call.1} parent=11 // pred_fallthru
          _
        // Predicated region
        $region53: #{tpu_custom_call.1} parent=11 // pred_check
          %p518 = pneg %p329
        $region54: #{tpu_custom_call.1} parent=11 // pred_check_branch
          %520 = sbr.rel (%p518) target = $region56
        $region55: #{tpu_custom_call.1} parent=11 // pred_region
          %522 = vsyncadd [#allocation11], 0
          %s523 = sshll.u32 %s12, 4
          %s524 = int_to_ptr.hbm [resolvable:$true] %s523
          %s525 = sshll.u32 [#allocation10], 4
          %s526 = int_to_ptr.vmem [resolvable:$true] %s525
          %531 = dma.hbm_to_vmem [thread:$0]  %s524, 256, %s526, [#allocation11], 64, 64, 4
        $region56: #{tpu_custom_call.1} parent=11 // pred_fallthru
          _
        // Predicated region
        $region57: #{tpu_custom_call.1} parent=11 // pred_check
          %p532 = pneg %p350
        $region58: #{tpu_custom_call.1} parent=11 // pred_check_branch
          %534 = sbr.rel (%p532) target = $region60
        $region59: #{tpu_custom_call.1} parent=11 // pred_region
          _
        $region60: #{tpu_custom_call.1} parent=11 // pred_fallthru
          _
        // Predicated region
        $region61: #{tpu_custom_call.1} parent=11 // pred_check
          %p535 = pneg %p371
        $region62: #{tpu_custom_call.1} parent=11 // pred_check_branch
          %537 = sbr.rel (%p535) target = $region64
        $region63: #{tpu_custom_call.1} parent=11 // pred_region
          _
        $region64: #{tpu_custom_call.1} parent=11 // pred_fallthru
          _
        // Predicated region
        $region65: #{tpu_custom_call.1} parent=11 // pred_check
          %p538 = pneg %p392
        $region66: #{tpu_custom_call.1} parent=11 // pred_check_branch
          %540 = sbr.rel (%p538) target = $region68
        $region67: #{tpu_custom_call.1} parent=11 // pred_region
          _
        $region68: #{tpu_custom_call.1} parent=11 // pred_fallthru
          _
        // Predicated region
        $region69: #{tpu_custom_call.1} parent=11 // pred_check
          %p541 = pneg %p413
        $region70: #{tpu_custom_call.1} parent=11 // pred_check_branch
          %543 = sbr.rel (%p541) target = $region72
        $region71: #{tpu_custom_call.1} parent=11 // pred_region
          _
        $region72: #{tpu_custom_call.1} parent=11 // pred_fallthru
          _
        // Predicated region
        $region73: #{tpu_custom_call.1} parent=11 // pred_check
          %p544 = pneg %p434
        $region74: #{tpu_custom_call.1} parent=11 // pred_check_branch
          %546 = sbr.rel (%p544) target = $region76
        $region75: #{tpu_custom_call.1} parent=11 // pred_region
          _
        $region76: #{tpu_custom_call.1} parent=11 // pred_fallthru
          _
      $region12: #{tpu_custom_call.1} parent=5 // pred_fallthru
        _
      %p547 = scmp.lt.s32.totalorder %s34, 2
      // Predicated region
      $region77: #{tpu_custom_call.1} parent=5 // pred_check
        %p548 = pneg %p547
      $region78: #{tpu_custom_call.1} parent=5 // pred_check_branch
        %550 = sbr.rel (%p548) target = $region80
      $region79: #{tpu_custom_call.1} parent=5 // pred_region
        // Predicated region
        $region81: #{tpu_custom_call.1} parent=79 // pred_check
          %p551 = pneg %p66
        $region82: #{tpu_custom_call.1} parent=79 // pred_check_branch
          %553 = sbr.rel (%p551) target = $region84
        $region83: #{tpu_custom_call.1} parent=79 // pred_region
          %s554 = sand.u32 %s56, 1
          %s555 = scalar_lea.sflag [#allocation5], %s554
          %s556 = sand.u32 %s56, 1
          %s557 = smul.addr %s556, 4
          %s558 = scalar_lea.vmem [#allocation4], %s557
          %560 = vsyncadd %s555, 0
          %s561 = smul.addr %s41, 4
          %s562 = scalar_lea.hbm %s0, %s561
          %s564 = sshll.u32 %s562, 4
          %s565 = int_to_ptr.hbm [resolvable:$true] %s564
          %s566 = sshll.u32 %s558, 4
          %s567 = int_to_ptr.vmem [resolvable:$true] %s566
          %569 = dma.hbm_to_vmem [thread:$0]  %s565, 64, %s567, %s555
        $region84: #{tpu_custom_call.1} parent=79 // pred_fallthru
          _
        // Predicated region
        $region85: #{tpu_custom_call.1} parent=79 // pred_check
          %p570 = pneg %p92
        $region86: #{tpu_custom_call.1} parent=79 // pred_check_branch
          %572 = sbr.rel (%p570) target = $region88
        $region87: #{tpu_custom_call.1} parent=79 // pred_region
          %s573 = sand.u32 %s34, 1
          %s574 = scalar_lea.sflag [#allocation8], %s573
          %s575 = sand.u32 %s82, 1
          %s576 = scalar_lea.vmem [#allocation7], %s575
          %578 = vsyncadd %s574, 0
          %s579 = scalar_lea.hbm %s1, %s41
          %s581 = sshll.u32 %s579, 4
          %s582 = int_to_ptr.hbm [resolvable:$true] %s581
          %s583 = sshll.u32 %s576, 4
          %s584 = int_to_ptr.vmem [resolvable:$true] %s583
          %586 = dma.hbm_to_vmem [thread:$0]  %s582, 16, %s584, %s574
        $region88: #{tpu_custom_call.1} parent=79 // pred_fallthru
          _
      $region80: #{tpu_custom_call.1} parent=5 // pred_fallthru
        _
      %p587 = scmp.le.s32.totalorder 1, %s34
      %p588 = scmp.lt.s32.totalorder %s34, 3
      %p589 = pnand %p587, %p588
      %p590 = pneg %p589
      // Predicated region
      $region89: #{tpu_custom_call.1} parent=5 // pred_check
        _
      $region90: #{tpu_custom_call.1} parent=5 // pred_check_branch
        %592 = sbr.rel (%p589) target = $region92
      $region91: #{tpu_custom_call.1} parent=5 // pred_region
        %s593 = ssub.s32 %s34, 1
        %s594 = sand.u32 %s59, 1
        %s595 = scalar_lea.sflag [#allocation5], %s594
        %s596 = sand.u32 %s59, 1
        %s597 = smul.addr %s596, 4
        %s598 = scalar_lea.vmem [#allocation4], %s597
        // Predicated region
        $region93: #{tpu_custom_call.1} parent=91 // pred_check
          %p599 = pneg %p72
        $region94: #{tpu_custom_call.1} parent=91 // pred_check_branch
          %601 = sbr.rel (%p599) target = $region96
        $region95: #{tpu_custom_call.1} parent=91 // pred_region
          %603 = dma.done %s595, 64
        $region96: #{tpu_custom_call.1} parent=91 // pred_fallthru
          _
        %s604 = sand.u32 %s39, 1
        %s605 = scalar_lea.sflag [#allocation8], %s604
        %s606 = sand.u32 %s85, 1
        %s607 = scalar_lea.vmem [#allocation7], %s606
        // Predicated region
        $region97: #{tpu_custom_call.1} parent=91 // pred_check
          %p608 = pneg %p98
        $region98: #{tpu_custom_call.1} parent=91 // pred_check_branch
          %610 = sbr.rel (%p608) target = $region100
        $region99: #{tpu_custom_call.1} parent=91 // pred_region
          %612 = dma.done %s605, 16
        $region100: #{tpu_custom_call.1} parent=91 // pred_fallthru
          _
        // Predicated region
        $region101: #{tpu_custom_call.1} parent=91 // pred_check
          %p613 = pneg %p245
        $region102: #{tpu_custom_call.1} parent=91 // pred_check_branch
          %615 = sbr.rel (%p613) target = $region104
        $region103: #{tpu_custom_call.1} parent=91 // pred_region
          %617 = dma.done [#allocation8], 256
        $region104: #{tpu_custom_call.1} parent=91 // pred_fallthru
          _
        // Predicated region
        $region105: #{tpu_custom_call.1} parent=91 // pred_check
          %p618 = pneg %p329
        $region106: #{tpu_custom_call.1} parent=91 // pred_check_branch
          %620 = sbr.rel (%p618) target = $region108
        $region107: #{tpu_custom_call.1} parent=91 // pred_region
          %622 = dma.done [#allocation11], 256
        $region108: #{tpu_custom_call.1} parent=91 // pred_fallthru
          _
        %s623 = sand.u32 %s59, 1
        %s624 = scalar_lea.sflag [#allocation5], %s623
        %s625 = sand.u32 %s59, 1
        %s626 = smul.addr %s625, 4
        %s627 = scalar_lea.vmem [#allocation4], %s626
        %p628 = pneg %p72
        %p629 = pneg %p69
        %s630 = sand.u32 %s39, 1
        %s631 = scalar_lea.sflag [#allocation8], %s630
        %s632 = sand.u32 %s85, 1
        %s633 = scalar_lea.vmem [#allocation7], %s632
        %p634 = pneg %p98
        %p635 = pneg %p95
        %p636 = pneg %p119
        %p637 = pneg %p116
        %p638 = pneg %p140
        %p639 = pneg %p137
        %p640 = pneg %p161
        %p641 = pneg %p158
        %p642 = pneg %p182
        %p643 = pneg %p179
        %p644 = pneg %p203
        %p645 = pneg %p200
        %p646 = pneg %p224
        %p647 = pneg %p221
        %p648 = pneg %p245
        %p649 = pneg %p242
        %p650 = pneg %p266
        %p651 = pneg %p263
        %p652 = pneg %p287
        %p653 = pneg %p284
        %p654 = pneg %p308
        %p655 = pneg %p305
        %p656 = pneg %p329
        %p657 = pneg %p326
        %p658 = pneg %p350
        %p659 = pneg %p347
        %p660 = pneg %p371
        %p661 = pneg %p368
        %p662 = pneg %p392
        %p663 = pneg %p389
        %p664 = pneg %p413
        %p665 = pneg %p410
        %p666 = pneg %p434
        %p667 = pneg %p431
        %p668 = pneg %p462
        %p669 = pneg %p459
        %s670 = sand.u32 %s449, 1
        %s671 = scalar_lea.sflag [#allocation6], %s670
        %s672 = sand.u32 %s449, 1
        %s673 = smul.addr %s672, 4
        %s674 = scalar_lea.vmem [#allocation12], %s673
        %p676 = scmp.eq.s32.totalorder %s44, 0
        // Predicated region
        $region109: #{tpu_custom_call.1} parent=91 // pred_check
          %p677 = pneg %p676
        $region110: #{tpu_custom_call.1} parent=91 // pred_check_branch
          %679 = sbr.rel (%p677) target = $region112
        $region111: #{tpu_custom_call.1} parent=91 // pred_region
          %v680 = vld [vmem:[%s598] sm:$0xf]
          %v681 = vld [vmem:[%s4] sm:$0xf]
          %v682 = vld [vmem:[%s4 + $0x4] sm:$0xf]
          %v683 = vld [vmem:[%s4 + $0x8] sm:$0xf]
          %v684 = vld [vmem:[%s4 + $0xc] sm:$0xf]
          %v685 = vld [vmem:[%s5] sm:$0x1]
          %v686 = vunpack.c.l.bf16 %v685
          %v687 = vperm.slane %v686, 0
          %v692 = vunpack.c.l.b16 %v681
          %v693 = vunpack.c.l.b16 %v682
          %v694 = vunpack.c.l.b16 %v683
          %v695 = vunpack.c.l.b16 %v684
          %v696 = vpack.c.b16 %v693, %v692
          %v697 = vpack.c.b16 %v695, %v694
          %vm700 = vcmask 261120
          %v702 = vsel %vm700, %v680, 0
          %704 = vmatpush.bf16.msra.mxu0 0
          %705 = vmatpush.bf16.msra.mxu0 0
          %706 = vmatpush.bf16.msra.mxu0 0
          %707 = vmatpush.bf16.msra.mxu0 0
          %708 = vmatpush.bf16.msra.mxu0 0
          %709 = vmatpush.bf16.msra.mxu0 0
          %710 = vmatpush.bf16.msra.mxu0 %v697
          %711 = vmatpush.bf16.msra.mxu0 %v696
          %712 = vmatmul.bf16.gmra.mxu0 %v702
          %v713 = vpop.f32.mrf.mxu0
          %v714 = vadd.f32 %v687, %v713
          %v715 = vpop.f32.mrf.mxu0
          %716 = vdwg.mxu0
          %v717 = vld [vmem:[%s6] sm:$0xf]
          %v718 = vld [vmem:[%s6 + $0x4] sm:$0xf]
          %v719 = vld [vmem:[%s6 + $0x8] sm:$0xf]
          %v720 = vld [vmem:[%s6 + $0xc] sm:$0xf]
          %v721 = vld [vmem:[%s7] sm:$0x1]
          %v722 = vunpack.c.l.bf16 %v721
          %v723 = vperm.slane %v722, 0
          %v728 = vunpack.c.l.b16 %v717
          %v729 = vunpack.c.l.b16 %v718
          %v730 = vunpack.c.l.b16 %v719
          %v731 = vunpack.c.l.b16 %v720
          %v732 = vpack.c.b16 %v729, %v728
          %v733 = vpack.c.b16 %v731, %v730
          %736 = vmatpush.bf16.msra.mxu0 0
          %737 = vmatpush.bf16.msra.mxu0 0
          %738 = vmatpush.bf16.msra.mxu0 0
          %739 = vmatpush.bf16.msra.mxu0 0
          %740 = vmatpush.bf16.msra.mxu0 0
          %741 = vmatpush.bf16.msra.mxu0 0
          %742 = vmatpush.bf16.msra.mxu0 %v733
          %743 = vmatpush.bf16.msra.mxu0 %v732
          %744 = vmatmul.bf16.gmra.mxu0 %v702
          %v745 = vpop.f32.mrf.mxu0
          %v746 = vadd.f32 %v723, %v745
          %v747 = vpop.f32.mrf.mxu0
          %748 = vdwg.mxu0
          %v749 = vpack.c.bf16 %v714, %v714
          %751 = vrot.lane.b32.xlu0 %v749, 120
          %v752 = vpop.permute.xlu0 %751
          %753 = vrot.lane.b32.xlu0 %v749, 112
          %v754 = vpop.permute.xlu0 %753
          %755 = vrot.lane.b32.xlu0 %v749, 104
          %v756 = vpop.permute.xlu0 %755
          %v759 = vpack.i.b16 %v752, %v749
          %v760 = vshrl.u32 %v749, 16
          %v761 = vshrl.u32 %v752, 16
          %v762 = vpack.i.b16 %v761, %v760
          %v765 = vpack.i.b16 %v756, %v754
          %v766 = vshrl.u32 %v754, 16
          %v767 = vshrl.u32 %v756, 16
          %v768 = vpack.i.b16 %v767, %v766
          %v771 = vunpack.c.l.s4 1983009808
          %v772 = vunpack.c.0.s8 %v771
          %v773 = vperm.slane %v759, %v772
          %v776 = vunpack.c.l.s4 1983009808
          %v777 = vunpack.c.0.s8 %v776
          %v778 = vperm.slane %v765, %v777
          %v779 = vrot.slane %v778, 4
          %vm780 = vcmask 1047556
          %v781 = vsel %vm780, %v779, %v773
          %v782 = vrot.slane %v773, 4
          %v783 = vsel %vm780, %v778, %v782
          %v785 = vunpack.c.l.s4 1934713408
          %v786 = vunpack.c.0.s8 %v785
          %v787 = vperm.slane %v781, %v786
          %v789 = vunpack.c.l.s4 1934713408
          %v790 = vunpack.c.0.s8 %v789
          %v791 = vperm.slane %v783, %v790
          %v792 = vrot.slane %v787, 4
          %v793 = vsel %vm780, 0, %v792
          %v794 = vrot.slane %v791, 4
          %v795 = vsel %vm780, 0, %v794
          %v798 = vunpack.c.l.s4 1983009808
          %v799 = vunpack.c.0.s8 %v798
          %v800 = vperm.slane %v762, %v799
          %v803 = vunpack.c.l.s4 1983009808
          %v804 = vunpack.c.0.s8 %v803
          %v805 = vperm.slane %v768, %v804
          %v806 = vrot.slane %v805, 4
          %v807 = vsel %vm780, %v806, %v800
          %v808 = vrot.slane %v800, 4
          %v809 = vsel %vm780, %v805, %v808
          %v811 = vunpack.c.l.s4 1934713408
          %v812 = vunpack.c.0.s8 %v811
          %v813 = vperm.slane %v807, %v812
          %v815 = vunpack.c.l.s4 1934713408
          %v816 = vunpack.c.0.s8 %v815
          %v817 = vperm.slane %v809, %v816
          %v818 = vrot.slane %v813, 4
          %v819 = vsel %vm780, 0, %v818
          %v820 = vrot.slane %v817, 4
          %v821 = vsel %vm780, 0, %v820
          %v822 = vsel %vm780, %v794, %v787
          %v824 = vunpack.c.l.s4 1983009808
          %v825 = vunpack.c.0.s8 %v824
          %v826 = vperm.slane %v822, %v825
          %v827 = vrot.slane %v795, 4
          %v828 = vsel %vm780, %v827, %v793
          %v830 = vunpack.c.l.s4 1983009808
          %v831 = vunpack.c.0.s8 %v830
          %v832 = vperm.slane %v828, %v831
          %v833 = vrot.slane %v832, 4
          %v834 = vsel %vm780, %v833, %v826
          %v836 = vunpack.c.l.s4 1934713408
          %v837 = vunpack.c.0.s8 %v836
          %v838 = vperm.slane %v834, %v837
          %v839 = vrot.slane %v838, 4
          %v840 = vsel %vm780, 0, %v839
          %v841 = vsel %vm780, %v820, %v813
          %v843 = vunpack.c.l.s4 1983009808
          %v844 = vunpack.c.0.s8 %v843
          %v845 = vperm.slane %v841, %v844
          %v846 = vrot.slane %v821, 4
          %v847 = vsel %vm780, %v846, %v819
          %v849 = vunpack.c.l.s4 1983009808
          %v850 = vunpack.c.0.s8 %v849
          %v851 = vperm.slane %v847, %v850
          %v852 = vrot.slane %v851, 4
          %v853 = vsel %vm780, %v852, %v845
          %v855 = vunpack.c.l.s4 1934713408
          %v856 = vunpack.c.0.s8 %v855
          %v857 = vperm.slane %v853, %v856
          %v858 = vrot.slane %v857, 4
          %v859 = vsel %vm780, 0, %v858
          %v862 = vpack.i.b16 %v857, %v838
          %v864 = vshrl.u32 %v838, 16
          %v865 = vshrl.u32 %v857, 16
          %v866 = vpack.i.b16 %v865, %v864
          %v870 = vpack.i.b16 %v859, %v840
          %v872 = vshrl.u32 %v840, 16
          %v873 = vshrl.u32 %v859, 16
          %v874 = vpack.i.b16 %v873, %v872
          %vm876 = vcmask 60416
          %877 = vst.msk [vmem:[#allocation2] sm:$0xf] %vm876, %v862
          %878 = vst.msk [vmem:[#allocation2 + $0x4] sm:$0xf] %vm876, %v866
          %879 = vst.msk [vmem:[#allocation2 + $0x8] sm:$0xf] %vm876, %v870
          %880 = vst.msk [vmem:[#allocation2 + $0xc] sm:$0xf] %vm876, %v874
          %v881 = vpack.c.bf16 %v746, %v746
          %883 = vrot.lane.b32.xlu0 %v881, 120
          %v884 = vpop.permute.xlu0 %883
          %885 = vrot.lane.b32.xlu0 %v881, 112
          %v886 = vpop.permute.xlu0 %885
          %887 = vrot.lane.b32.xlu0 %v881, 104
          %v888 = vpop.permute.xlu0 %887
          %v891 = vpack.i.b16 %v884, %v881
          %v892 = vshrl.u32 %v881, 16
          %v893 = vshrl.u32 %v884, 16
          %v894 = vpack.i.b16 %v893, %v892
          %v897 = vpack.i.b16 %v888, %v886
          %v898 = vshrl.u32 %v886, 16
          %v899 = vshrl.u32 %v888, 16
          %v900 = vpack.i.b16 %v899, %v898
          %v903 = vunpack.c.l.s4 1983009808
          %v904 = vunpack.c.0.s8 %v903
          %v905 = vperm.slane %v891, %v904
          %v908 = vunpack.c.l.s4 1983009808
          %v909 = vunpack.c.0.s8 %v908
          %v910 = vperm.slane %v897, %v909
          %v911 = vrot.slane %v910, 4
          %v912 = vsel %vm780, %v911, %v905
          %v913 = vrot.slane %v905, 4
          %v914 = vsel %vm780, %v910, %v913
          %v916 = vunpack.c.l.s4 1934713408
          %v917 = vunpack.c.0.s8 %v916
          %v918 = vperm.slane %v912, %v917
          %v920 = vunpack.c.l.s4 1934713408
          %v921 = vunpack.c.0.s8 %v920
          %v922 = vperm.slane %v914, %v921
          %v923 = vrot.slane %v918, 4
          %v924 = vsel %vm780, 0, %v923
          %v925 = vrot.slane %v922, 4
          %v926 = vsel %vm780, 0, %v925
          %v929 = vunpack.c.l.s4 1983009808
          %v930 = vunpack.c.0.s8 %v929
          %v931 = vperm.slane %v894, %v930
          %v934 = vunpack.c.l.s4 1983009808
          %v935 = vunpack.c.0.s8 %v934
          %v936 = vperm.slane %v900, %v935
          %v937 = vrot.slane %v936, 4
          %v938 = vsel %vm780, %v937, %v931
          %v939 = vrot.slane %v931, 4
          %v940 = vsel %vm780, %v936, %v939
          %v942 = vunpack.c.l.s4 1934713408
          %v943 = vunpack.c.0.s8 %v942
          %v944 = vperm.slane %v938, %v943
          %v946 = vunpack.c.l.s4 1934713408
          %v947 = vunpack.c.0.s8 %v946
          %v948 = vperm.slane %v940, %v947
          %v949 = vrot.slane %v944, 4
          %v950 = vsel %vm780, 0, %v949
          %v951 = vrot.slane %v948, 4
          %v952 = vsel %vm780, 0, %v951
          %v953 = vsel %vm780, %v925, %v918
          %v955 = vunpack.c.l.s4 1983009808
          %v956 = vunpack.c.0.s8 %v955
          %v957 = vperm.slane %v953, %v956
          %v958 = vrot.slane %v926, 4
          %v959 = vsel %vm780, %v958, %v924
          %v961 = vunpack.c.l.s4 1983009808
          %v962 = vunpack.c.0.s8 %v961
          %v963 = vperm.slane %v959, %v962
          %v964 = vrot.slane %v963, 4
          %v965 = vsel %vm780, %v964, %v957
          %v967 = vunpack.c.l.s4 1934713408
          %v968 = vunpack.c.0.s8 %v967
          %v969 = vperm.slane %v965, %v968
          %v970 = vrot.slane %v969, 4
          %v971 = vsel %vm780, 0, %v970
          %v972 = vsel %vm780, %v951, %v944
          %v974 = vunpack.c.l.s4 1983009808
          %v975 = vunpack.c.0.s8 %v974
          %v976 = vperm.slane %v972, %v975
          %v977 = vrot.slane %v952, 4
          %v978 = vsel %vm780, %v977, %v950
          %v980 = vunpack.c.l.s4 1983009808
          %v981 = vunpack.c.0.s8 %v980
          %v982 = vperm.slane %v978, %v981
          %v983 = vrot.slane %v982, 4
          %v984 = vsel %vm780, %v983, %v976
          %v986 = vunpack.c.l.s4 1934713408
          %v987 = vunpack.c.0.s8 %v986
          %v988 = vperm.slane %v984, %v987
          %v989 = vrot.slane %v988, 4
          %v990 = vsel %vm780, 0, %v989
          %v993 = vpack.i.b16 %v988, %v969
          %v995 = vshrl.u32 %v969, 16
          %v996 = vshrl.u32 %v988, 16
          %v997 = vpack.i.b16 %v996, %v995
          %v1001 = vpack.i.b16 %v990, %v971
          %v1003 = vshrl.u32 %v971, 16
          %v1004 = vshrl.u32 %v990, 16
          %v1005 = vpack.i.b16 %v1004, %v1003
          %1007 = vst.msk [vmem:[#allocation3] sm:$0xf] %vm876, %v993
          %1008 = vst.msk [vmem:[#allocation3 + $0x4] sm:$0xf] %vm876, %v997
          %1009 = vst.msk [vmem:[#allocation3 + $0x8] sm:$0xf] %vm876, %v1001
          %1010 = vst.msk [vmem:[#allocation3 + $0xc] sm:$0xf] %vm876, %v1005
        $region112: #{tpu_custom_call.1} parent=91 // pred_fallthru
          _
        %s1011 = smul.u32 %s44, 8
        %s1012 = sshra.s32 %s1011, 3
        %s1013 = sand.u32 %s1011, 7
        %s1014 = smul.addr %s1012, 4
        %s1015 = scalar_lea.vmem %s598, %s1014 [#allocation4]
        %v1016 = vld [vmem:[%s1015] sm:$0xf]
        %v1017 = vunpack.c.l.bf16 %v1016
        %v1018 = vld [vmem:[%s2] sm:$0xf]
        %v1019 = vld [vmem:[%s2 + $0x4] sm:$0xf]
        %v1020 = vld [vmem:[%s2 + $0x8] sm:$0xf]
        %v1021 = vld [vmem:[%s2 + $0xc] sm:$0xf]
        %v1022 = vld [vmem:[%s3] sm:$0x1]
        %v1023 = vunpack.c.l.bf16 %v1022
        %v1024 = vperm.slane %v1023, 0
        %v1029 = vunpack.c.l.b16 %v1018
        %v1030 = vunpack.c.l.b16 %v1019
        %v1031 = vunpack.c.l.b16 %v1020
        %v1032 = vunpack.c.l.b16 %v1021
        %v1033 = vpack.c.b16 %v1030, %v1029
        %v1034 = vpack.c.b16 %v1032, %v1031
        %vm1037 = vcmask 261120
        %v1039 = vsel %vm1037, %v1016, 0
        %1041 = vmatpush.bf16.msra.mxu0 0
        %1042 = vmatpush.bf16.msra.mxu0 0
        %1043 = vmatpush.bf16.msra.mxu0 0
        %1044 = vmatpush.bf16.msra.mxu0 0
        %1045 = vmatpush.bf16.msra.mxu0 0
        %1046 = vmatpush.bf16.msra.mxu0 0
        %1047 = vmatpush.bf16.msra.mxu0 %v1034
        %1048 = vmatpush.bf16.msra.mxu0 %v1033
        %1049 = vmatmul.bf16.gmra.mxu0 %v1039
        %v1050 = vpop.f32.mrf.mxu0
        %v1051 = vadd.f32 %v1024, %v1050
        %v1052 = vpop.f32.mrf.mxu0
        %1053 = vdwg.mxu0
        %v1054 = vmul.f32 %v1051, 0.35355338
        %v1055 = vpack.c.bf16 %v1054, %v1054
        %1057 = vrot.lane.b32.xlu0 %v1055, 120
        %v1058 = vpop.permute.xlu0 %1057
        %1059 = vrot.lane.b32.xlu0 %v1055, 112
        %v1060 = vpop.permute.xlu0 %1059
        %1061 = vrot.lane.b32.xlu0 %v1055, 104
        %v1062 = vpop.permute.xlu0 %1061
        %v1065 = vpack.i.b16 %v1058, %v1055
        %v1066 = vshrl.u32 %v1055, 16
        %v1067 = vshrl.u32 %v1058, 16
        %v1068 = vpack.i.b16 %v1067, %v1066
        %v1071 = vpack.i.b16 %v1062, %v1060
        %v1072 = vshrl.u32 %v1060, 16
        %v1073 = vshrl.u32 %v1062, 16
        %v1074 = vpack.i.b16 %v1073, %v1072
        %v1077 = vunpack.c.l.s4 1983009808
        %v1078 = vunpack.c.0.s8 %v1077
        %v1079 = vperm.slane %v1065, %v1078
        %v1082 = vunpack.c.l.s4 1983009808
        %v1083 = vunpack.c.0.s8 %v1082
        %v1084 = vperm.slane %v1071, %v1083
        %v1085 = vrot.slane %v1084, 4
        %vm1086 = vcmask 1047556
        %v1087 = vsel %vm1086, %v1085, %v1079
        %v1088 = vrot.slane %v1079, 4
        %v1089 = vsel %vm1086, %v1084, %v1088
        %v1091 = vunpack.c.l.s4 1934713408
        %v1092 = vunpack.c.0.s8 %v1091
        %v1093 = vperm.slane %v1087, %v1092
        %v1095 = vunpack.c.l.s4 1934713408
        %v1096 = vunpack.c.0.s8 %v1095
        %v1097 = vperm.slane %v1089, %v1096
        %v1098 = vrot.slane %v1093, 4
        %v1099 = vsel %vm1086, 0, %v1098
        %v1100 = vrot.slane %v1097, 4
        %v1101 = vsel %vm1086, 0, %v1100
        %v1104 = vunpack.c.l.s4 1983009808
        %v1105 = vunpack.c.0.s8 %v1104
        %v1106 = vperm.slane %v1068, %v1105
        %v1109 = vunpack.c.l.s4 1983009808
        %v1110 = vunpack.c.0.s8 %v1109
        %v1111 = vperm.slane %v1074, %v1110
        %v1112 = vrot.slane %v1111, 4
        %v1113 = vsel %vm1086, %v1112, %v1106
        %v1114 = vrot.slane %v1106, 4
        %v1115 = vsel %vm1086, %v1111, %v1114
        %v1117 = vunpack.c.l.s4 1934713408
        %v1118 = vunpack.c.0.s8 %v1117
        %v1119 = vperm.slane %v1113, %v1118
        %v1121 = vunpack.c.l.s4 1934713408
        %v1122 = vunpack.c.0.s8 %v1121
        %v1123 = vperm.slane %v1115, %v1122
        %v1124 = vrot.slane %v1119, 4
        %v1125 = vsel %vm1086, 0, %v1124
        %v1126 = vrot.slane %v1123, 4
        %v1127 = vsel %vm1086, 0, %v1126
        %v1128 = vsel %vm1086, %v1100, %v1093
        %v1130 = vunpack.c.l.s4 1983009808
        %v1131 = vunpack.c.0.s8 %v1130
        %v1132 = vperm.slane %v1128, %v1131
        %v1133 = vrot.slane %v1101, 4
        %v1134 = vsel %vm1086, %v1133, %v1099
        %v1136 = vunpack.c.l.s4 1983009808
        %v1137 = vunpack.c.0.s8 %v1136
        %v1138 = vperm.slane %v1134, %v1137
        %v1139 = vrot.slane %v1138, 4
        %v1140 = vsel %vm1086, %v1139, %v1132
        %v1142 = vunpack.c.l.s4 1934713408
        %v1143 = vunpack.c.0.s8 %v1142
        %v1144 = vperm.slane %v1140, %v1143
        %v1145 = vrot.slane %v1144, 4
        %v1146 = vsel %vm1086, 0, %v1145
        %v1147 = vsel %vm1086, %v1126, %v1119
        %v1149 = vunpack.c.l.s4 1983009808
        %v1150 = vunpack.c.0.s8 %v1149
        %v1151 = vperm.slane %v1147, %v1150
        %v1152 = vrot.slane %v1127, 4
        %v1153 = vsel %vm1086, %v1152, %v1125
        %v1155 = vunpack.c.l.s4 1983009808
        %v1156 = vunpack.c.0.s8 %v1155
        %v1157 = vperm.slane %v1153, %v1156
        %v1158 = vrot.slane %v1157, 4
        %v1159 = vsel %vm1086, %v1158, %v1151
        %v1161 = vunpack.c.l.s4 1934713408
        %v1162 = vunpack.c.0.s8 %v1161
        %v1163 = vperm.slane %v1159, %v1162
        %v1164 = vrot.slane %v1163, 4
        %v1165 = vsel %vm1086, 0, %v1164
        %v1168 = vpack.i.b16 %v1163, %v1144
        %v1169 = vshrl.u32 %v1144, 16
        %v1170 = vshrl.u32 %v1163, 16
        %v1171 = vpack.i.b16 %v1170, %v1169
        %v1174 = vpack.i.b16 %v1165, %v1146
        %v1175 = vshrl.u32 %v1146, 16
        %v1176 = vshrl.u32 %v1165, 16
        %v1177 = vpack.i.b16 %v1176, %v1175
        %v1178 = vld [vmem:[%s607] sm:$0x1]
        %v1179 = vld [vmem:[#allocation2] sm:$0xf]
        %v1180 = vld [vmem:[#allocation2 + $0x4] sm:$0xf]
        %v1181 = vld [vmem:[#allocation2 + $0x8] sm:$0xf]
        %v1182 = vld [vmem:[#allocation2 + $0xc] sm:$0xf]
        %v1184 = vperm.slane %v1178, 0
        %vm1186 = vcmask 64512
        %v1188 = vsel %vm1186, %v1168, 0
        %v1191 = vsel %vm1186, %v1179, 0
        %1193 = vmatpush.bf16.xpose.msra.mxu0 0
        %1194 = vmatpush.bf16.xpose.msra.mxu0 0
        %1195 = vmatpush.bf16.xpose.msra.mxu0 0
        %1196 = vmatpush.bf16.xpose.msra.mxu0 0
        %1197 = vmatpush.bf16.xpose.msra.mxu0 0
        %1198 = vmatpush.bf16.xpose.msra.mxu0 0
        %1199 = vmatpush.bf16.xpose.msra.mxu0 0
        %1200 = vmatpush.bf16.xpose.msra.mxu0 %v1191
        %1201 = vmatmul.bf16.gmra.mxu0 %v1188
        %v1202 = vpop.f32.mrf.mxu0
        %v1203 = vadd.f32 %v1184, %v1202
        %v1204 = vpop.f32.mrf.mxu0
        %1205 = vdwg.mxu0
        %v1207 = vsel %vm1186, %v1171, 0
        %v1210 = vsel %vm1186, %v1180, 0
        %1212 = vmatpush.bf16.xpose.msra.mxu0 0
        %1213 = vmatpush.bf16.xpose.msra.mxu0 0
        %1214 = vmatpush.bf16.xpose.msra.mxu0 0
        %1215 = vmatpush.bf16.xpose.msra.mxu0 0
        %1216 = vmatpush.bf16.xpose.msra.mxu0 0
        %1217 = vmatpush.bf16.xpose.msra.mxu0 0
        %1218 = vmatpush.bf16.xpose.msra.mxu0 0
        %1219 = vmatpush.bf16.xpose.msra.mxu0 %v1210
        %1220 = vmatmul.bf16.gmra.mxu0 %v1207
        %v1221 = vpop.f32.mrf.mxu0
        %v1222 = vadd.f32 %v1184, %v1221
        %v1223 = vpop.f32.mrf.mxu0
        %1224 = vdwg.mxu0
        %v1226 = vsel %vm1186, %v1174, 0
        %v1229 = vsel %vm1186, %v1181, 0
        %1231 = vmatpush.bf16.xpose.msra.mxu0 0
        %1232 = vmatpush.bf16.xpose.msra.mxu0 0
        %1233 = vmatpush.bf16.xpose.msra.mxu0 0
        %1234 = vmatpush.bf16.xpose.msra.mxu0 0
        %1235 = vmatpush.bf16.xpose.msra.mxu0 0
        %1236 = vmatpush.bf16.xpose.msra.mxu0 0
        %1237 = vmatpush.bf16.xpose.msra.mxu0 0
        %1238 = vmatpush.bf16.xpose.msra.mxu0 %v1229
        %1239 = vmatmul.bf16.gmra.mxu0 %v1226
        %v1240 = vpop.f32.mrf.mxu0
        %v1241 = vadd.f32 %v1184, %v1240
        %v1242 = vpop.f32.mrf.mxu0
        %1243 = vdwg.mxu0
        %v1245 = vsel %vm1186, %v1177, 0
        %v1248 = vsel %vm1186, %v1182, 0
        %1250 = vmatpush.bf16.xpose.msra.mxu0 0
        %1251 = vmatpush.bf16.xpose.msra.mxu0 0
        %1252 = vmatpush.bf16.xpose.msra.mxu0 0
        %1253 = vmatpush.bf16.xpose.msra.mxu0 0
        %1254 = vmatpush.bf16.xpose.msra.mxu0 0
        %1255 = vmatpush.bf16.xpose.msra.mxu0 0
        %1256 = vmatpush.bf16.xpose.msra.mxu0 0
        %1257 = vmatpush.bf16.xpose.msra.mxu0 %v1248
        %1258 = vmatmul.bf16.gmra.mxu0 %v1245
        %v1259 = vpop.f32.mrf.mxu0
        %v1260 = vadd.f32 %v1184, %v1259
        %v1261 = vpop.f32.mrf.mxu0
        %1262 = vdwg.mxu0
        %v1263 = vsel %vm1186, %v1203, -inf
        %1264 = vmax.xlane.f32.xlu0 %v1263
        %v1265 = vpop.xlane.xlu0 %1264
        %v1266 = vsel %vm1186, %v1222, -inf
        %1267 = vmax.xlane.f32.xlu0 %v1266
        %v1268 = vpop.xlane.xlu0 %1267
        %v1269 = vsel %vm1186, %v1241, -inf
        %1270 = vmax.xlane.f32.xlu0 %v1269
        %v1271 = vpop.xlane.xlu0 %1270
        %v1272 = vsel %vm1186, %v1260, -inf
        %1273 = vmax.xlane.f32.xlu0 %v1272
        %v1274 = vpop.xlane.xlu0 %1273
        %v1275 = vsub.f32 %v1203, %v1265
        %v1276 = vsub.f32 %v1222, %v1268
        %v1277 = vsub.f32 %v1241, %v1271
        %v1278 = vsub.f32 %v1260, %v1274
        %v1279 = vmul.f32 %v1275, 1.442695
        %v1280 = vpow.pop %v1279
        %v1281 = vmul.f32 %v1276, 1.442695
        %v1282 = vpow.pop %v1281
        %v1283 = vmul.f32 %v1277, 1.442695
        %v1284 = vpow.pop %v1283
        %v1285 = vmul.f32 %v1278, 1.442695
        %v1286 = vpow.pop %v1285
        %v1287 = vsel %vm1186, %v1280, 0.0
        %1288 = vadd.xlane.f32.xlu0 %v1287
        %v1289 = vpop.xlane.xlu0 %1288
        %v1290 = vsel %vm1186, %v1282, 0.0
        %1291 = vadd.xlane.f32.xlu0 %v1290
        %v1292 = vpop.xlane.xlu0 %1291
        %v1293 = vsel %vm1186, %v1284, 0.0
        %1294 = vadd.xlane.f32.xlu0 %v1293
        %v1295 = vpop.xlane.xlu0 %1294
        %v1296 = vsel %vm1186, %v1286, 0.0
        %1297 = vadd.xlane.f32.xlu0 %v1296
        %v1298 = vpop.xlane.xlu0 %1297
        %v1299 = vrcp.pop %v1289
        %v1300 = vmul.f32 %v1289, %v1299
        %v1301 = vsub.f32 1.0, %v1300
        %v1302 = vmul.f32 %v1299, %v1301
        %v1303 = vadd.f32 %v1299, %v1302
        %vm1304 = vweird.f32 %v1289
        %vm1305 = vweird.f32 %v1299
        %vm1306 = vmor %vm1304, %vm1305
        %v1307 = vsel %vm1306, %v1299, %v1303
        %v1308 = vand.u32 2147483647, %v1289
        %vm1309 = vcmp.eq.f32.partialorder %v1308, 8.507059e+37
        %v1310 = vand.u32 %v1289, 2147483648
        %v1311 = vor.u32 1.1754944e-38, %v1310
        %v1312 = vsel %vm1309, %v1311, %v1307
        %v1313 = vrcp.pop %v1292
        %v1314 = vmul.f32 %v1292, %v1313
        %v1315 = vsub.f32 1.0, %v1314
        %v1316 = vmul.f32 %v1313, %v1315
        %v1317 = vadd.f32 %v1313, %v1316
        %vm1318 = vweird.f32 %v1292
        %vm1319 = vweird.f32 %v1313
        %vm1320 = vmor %vm1318, %vm1319
        %v1321 = vsel %vm1320, %v1313, %v1317
        %v1322 = vand.u32 2147483647, %v1292
        %vm1323 = vcmp.eq.f32.partialorder %v1322, 8.507059e+37
        %v1324 = vand.u32 %v1292, 2147483648
        %v1325 = vor.u32 1.1754944e-38, %v1324
        %v1326 = vsel %vm1323, %v1325, %v1321
        %v1327 = vrcp.pop %v1295
        %v1328 = vmul.f32 %v1295, %v1327
        %v1329 = vsub.f32 1.0, %v1328
        %v1330 = vmul.f32 %v1327, %v1329
        %v1331 = vadd.f32 %v1327, %v1330
        %vm1332 = vweird.f32 %v1295
        %vm1333 = vweird.f32 %v1327
        %vm1334 = vmor %vm1332, %vm1333
        %v1335 = vsel %vm1334, %v1327, %v1331
        %v1336 = vand.u32 2147483647, %v1295
        %vm1337 = vcmp.eq.f32.partialorder %v1336, 8.507059e+37
        %v1338 = vand.u32 %v1295, 2147483648
        %v1339 = vor.u32 1.1754944e-38, %v1338
        %v1340 = vsel %vm1337, %v1339, %v1335
        %v1341 = vrcp.pop %v1298
        %v1342 = vmul.f32 %v1298, %v1341
        %v1343 = vsub.f32 1.0, %v1342
        %v1344 = vmul.f32 %v1341, %v1343
        %v1345 = vadd.f32 %v1341, %v1344
        %vm1346 = vweird.f32 %v1298
        %vm1347 = vweird.f32 %v1341
        %vm1348 = vmor %vm1346, %vm1347
        %v1349 = vsel %vm1348, %v1341, %v1345
        %v1350 = vand.u32 2147483647, %v1298
        %vm1351 = vcmp.eq.f32.partialorder %v1350, 8.507059e+37
        %v1352 = vand.u32 %v1298, 2147483648
        %v1353 = vor.u32 1.1754944e-38, %v1352
        %v1354 = vsel %vm1351, %v1353, %v1349
        %v1355 = vmul.f32 %v1280, %v1312
        %v1356 = vmul.f32 %v1282, %v1326
        %v1357 = vmul.f32 %v1284, %v1340
        %v1358 = vmul.f32 %v1286, %v1354
        %v1359 = vpack.c.bf16 %v1355, %v1355
        %v1360 = vpack.c.bf16 %v1356, %v1356
        %v1361 = vpack.c.bf16 %v1357, %v1357
        %v1362 = vpack.c.bf16 %v1358, %v1358
        %v1363 = vld [vmem:[#allocation3] sm:$0xf]
        %v1364 = vld [vmem:[#allocation3 + $0x4] sm:$0xf]
        %v1365 = vld [vmem:[#allocation3 + $0x8] sm:$0xf]
        %v1366 = vld [vmem:[#allocation3 + $0xc] sm:$0xf]
        %v1368 = vsel %vm1186, %v1359, 0
        %vm1370 = vcmask 1043456
        %v1372 = vsel %vm1370, %v1363, 0
        %1374 = vmatpush.bf16.msra.mxu0 0
        %1375 = vmatpush.bf16.msra.mxu0 0
        %1376 = vmatpush.bf16.msra.mxu0 0
        %1377 = vmatpush.bf16.msra.mxu0 0
        %1378 = vmatpush.bf16.msra.mxu0 0
        %1379 = vmatpush.bf16.msra.mxu0 0
        %1380 = vmatpush.bf16.msra.mxu0 0
        %1381 = vmatpush.bf16.msra.mxu0 %v1372
        %1382 = vmatmul.bf16.gmra.mxu0 %v1368
        %v1383 = vpop.f32.mrf.mxu0
        %v1384 = vadd.f32 0.0, %v1383
        %v1385 = vpop.f32.mrf.mxu0
        %1386 = vdwg.mxu0
        %v1388 = vsel %vm1186, %v1360, 0
        %v1391 = vsel %vm1370, %v1364, 0
        %1393 = vmatpush.bf16.msra.mxu0 0
        %1394 = vmatpush.bf16.msra.mxu0 0
        %1395 = vmatpush.bf16.msra.mxu0 0
        %1396 = vmatpush.bf16.msra.mxu0 0
        %1397 = vmatpush.bf16.msra.mxu0 0
        %1398 = vmatpush.bf16.msra.mxu0 0
        %1399 = vmatpush.bf16.msra.mxu0 0
        %1400 = vmatpush.bf16.msra.mxu0 %v1391
        %1401 = vmatmul.bf16.gmra.mxu0 %v1388
        %v1402 = vpop.f32.mrf.mxu0
        %v1403 = vadd.f32 0.0, %v1402
        %v1404 = vpop.f32.mrf.mxu0
        %1405 = vdwg.mxu0
        %v1407 = vsel %vm1186, %v1361, 0
        %v1410 = vsel %vm1370, %v1365, 0
        %1412 = vmatpush.bf16.msra.mxu0 0
        %1413 = vmatpush.bf16.msra.mxu0 0
        %1414 = vmatpush.bf16.msra.mxu0 0
        %1415 = vmatpush.bf16.msra.mxu0 0
        %1416 = vmatpush.bf16.msra.mxu0 0
        %1417 = vmatpush.bf16.msra.mxu0 0
        %1418 = vmatpush.bf16.msra.mxu0 0
        %1419 = vmatpush.bf16.msra.mxu0 %v1410
        %1420 = vmatmul.bf16.gmra.mxu0 %v1407
        %v1421 = vpop.f32.mrf.mxu0
        %v1422 = vadd.f32 0.0, %v1421
        %v1423 = vpop.f32.mrf.mxu0
        %1424 = vdwg.mxu0
        %v1426 = vsel %vm1186, %v1362, 0
        %v1429 = vsel %vm1370, %v1366, 0
        %1431 = vmatpush.bf16.msra.mxu0 0
        %1432 = vmatpush.bf16.msra.mxu0 0
        %1433 = vmatpush.bf16.msra.mxu0 0
        %1434 = vmatpush.bf16.msra.mxu0 0
        %1435 = vmatpush.bf16.msra.mxu0 0
        %1436 = vmatpush.bf16.msra.mxu0 0
        %1437 = vmatpush.bf16.msra.mxu0 0
        %1438 = vmatpush.bf16.msra.mxu0 %v1429
        %1439 = vmatmul.bf16.gmra.mxu0 %v1426
        %v1440 = vpop.f32.mrf.mxu0
        %v1441 = vadd.f32 0.0, %v1440
        %v1442 = vpop.f32.mrf.mxu0
        %1443 = vdwg.mxu0
        %v1444 = vpack.c.bf16 %v1384, %v1384
        %v1445 = vpack.c.bf16 %v1403, %v1403
        %v1446 = vpack.c.bf16 %v1422, %v1422
        %v1447 = vpack.c.bf16 %v1441, %v1441
        %v1450 = vpack.i.b16 %v1445, %v1444
        %v1451 = vshrl.u32 %v1444, 16
        %v1452 = vshrl.u32 %v1445, 16
        %v1453 = vpack.i.b16 %v1452, %v1451
        %v1456 = vpack.i.b16 %v1447, %v1446
        %v1457 = vshrl.u32 %v1446, 16
        %v1458 = vshrl.u32 %v1447, 16
        %v1459 = vpack.i.b16 %v1458, %v1457
        %v1462 = vunpack.c.l.s4 1983009808
        %v1463 = vunpack.c.0.s8 %v1462
        %v1464 = vperm.slane %v1450, %v1463
        %v1467 = vunpack.c.l.s4 1983009808
        %v1468 = vunpack.c.0.s8 %v1467
        %v1469 = vperm.slane %v1456, %v1468
        %v1470 = vrot.slane %v1469, 4
        %v1471 = vsel %vm1086, %v1470, %v1464
        %v1472 = vrot.slane %v1464, 4
        %v1473 = vsel %vm1086, %v1469, %v1472
        %v1475 = vunpack.c.l.s4 1934713408
        %v1476 = vunpack.c.0.s8 %v1475
        %v1477 = vperm.slane %v1471, %v1476
        %v1479 = vunpack.c.l.s4 1934713408
        %v1480 = vunpack.c.0.s8 %v1479
        %v1481 = vperm.slane %v1473, %v1480
        %v1482 = vrot.slane %v1477, 4
        %v1483 = vsel %vm1086, 0, %v1482
        %v1484 = vrot.slane %v1481, 4
        %v1485 = vsel %vm1086, 0, %v1484
        %v1488 = vunpack.c.l.s4 1983009808
        %v1489 = vunpack.c.0.s8 %v1488
        %v1490 = vperm.slane %v1453, %v1489
        %v1493 = vunpack.c.l.s4 1983009808
        %v1494 = vunpack.c.0.s8 %v1493
        %v1495 = vperm.slane %v1459, %v1494
        %v1496 = vrot.slane %v1495, 4
        %v1497 = vsel %vm1086, %v1496, %v1490
        %v1498 = vrot.slane %v1490, 4
        %v1499 = vsel %vm1086, %v1495, %v1498
        %v1501 = vunpack.c.l.s4 1934713408
        %v1502 = vunpack.c.0.s8 %v1501
        %v1503 = vperm.slane %v1497, %v1502
        %v1505 = vunpack.c.l.s4 1934713408
        %v1506 = vunpack.c.0.s8 %v1505
        %v1507 = vperm.slane %v1499, %v1506
        %v1508 = vrot.slane %v1503, 4
        %v1509 = vsel %vm1086, 0, %v1508
        %v1510 = vrot.slane %v1507, 4
        %v1511 = vsel %vm1086, 0, %v1510
        %v1512 = vsel %vm1086, %v1484, %v1477
        %v1514 = vunpack.c.l.s4 1983009808
        %v1515 = vunpack.c.0.s8 %v1514
        %v1516 = vperm.slane %v1512, %v1515
        %v1517 = vrot.slane %v1485, 4
        %v1518 = vsel %vm1086, %v1517, %v1483
        %v1520 = vunpack.c.l.s4 1983009808
        %v1521 = vunpack.c.0.s8 %v1520
        %v1522 = vperm.slane %v1518, %v1521
        %v1523 = vrot.slane %v1522, 4
        %v1524 = vsel %vm1086, %v1523, %v1516
        %v1526 = vunpack.c.l.s4 1934713408
        %v1527 = vunpack.c.0.s8 %v1526
        %v1528 = vperm.slane %v1524, %v1527
        %v1529 = vrot.slane %v1528, 4
        %v1530 = vsel %vm1086, 0, %v1529
        %v1531 = vsel %vm1086, %v1510, %v1503
        %v1533 = vunpack.c.l.s4 1983009808
        %v1534 = vunpack.c.0.s8 %v1533
        %v1535 = vperm.slane %v1531, %v1534
        %v1536 = vrot.slane %v1511, 4
        %v1537 = vsel %vm1086, %v1536, %v1509
        %v1539 = vunpack.c.l.s4 1983009808
        %v1540 = vunpack.c.0.s8 %v1539
        %v1541 = vperm.slane %v1537, %v1540
        %v1542 = vrot.slane %v1541, 4
        %v1543 = vsel %vm1086, %v1542, %v1535
        %v1545 = vunpack.c.l.s4 1934713408
        %v1546 = vunpack.c.0.s8 %v1545
        %v1547 = vperm.slane %v1543, %v1546
        %v1548 = vrot.slane %v1547, 4
        %v1549 = vsel %vm1086, 0, %v1548
        %v1552 = vpack.i.b16 %v1547, %v1528
        %v1553 = vshrl.u32 %v1528, 16
        %v1554 = vshrl.u32 %v1547, 16
        %v1555 = vpack.i.b16 %v1554, %v1553
        %v1558 = vpack.i.b16 %v1549, %v1530
        %v1559 = vshrl.u32 %v1530, 16
        %v1560 = vshrl.u32 %v1549, 16
        %v1561 = vpack.i.b16 %v1560, %v1559
        %v1562 = vunpack.c.l.b16 %v1555
        %v1563 = vpack.c.b16 %v1562, %v1562
        %1564 = vrot.lane.b32.xlu0 %v1563, 8
        %v1565 = vpop.permute.xlu0 %1564
        %v1566 = vunpack.c.l.b16 %v1558
        %v1567 = vpack.c.b16 %v1566, %v1566
        %1568 = vrot.lane.b32.xlu0 %v1567, 16
        %v1569 = vpop.permute.xlu0 %1568
        %v1570 = vunpack.c.l.b16 %v1561
        %v1571 = vpack.c.b16 %v1570, %v1570
        %1572 = vrot.lane.b32.xlu0 %v1571, 24
        %v1573 = vpop.permute.xlu0 %1572
        %v1576 = vsel %vm1186, %v1552, %v1565
        %vm1577 = vcmask 130048
        %v1579 = vsel %vm1577, %v1576, %v1569
        %vm1580 = vcmask 195584
        %v1582 = vsel %vm1580, %v1579, %v1573
        %v1583 = vld [vmem:[#allocation9] sm:$0xf]
        %v1584 = vld [vmem:[#allocation9 + $0x4] sm:$0xf]
        %v1585 = vld [vmem:[#allocation9 + $0x8] sm:$0xf]
        %v1586 = vld [vmem:[#allocation9 + $0xc] sm:$0xf]
        %v1587 = vld [vmem:[%s9] sm:$0x1]
        %v1588 = vunpack.c.l.bf16 %v1587
        %v1589 = vperm.slane %v1588, 0
        %v1594 = vunpack.c.l.b16 %v1583
        %v1595 = vunpack.c.l.b16 %v1584
        %v1596 = vunpack.c.l.b16 %v1585
        %v1597 = vunpack.c.l.b16 %v1586
        %v1598 = vpack.c.b16 %v1595, %v1594
        %v1599 = vpack.c.b16 %v1597, %v1596
        %v1602 = vsel %vm1037, %v1582, 0
        %1604 = vmatpush.bf16.msra.mxu0 0
        %1605 = vmatpush.bf16.msra.mxu0 0
        %1606 = vmatpush.bf16.msra.mxu0 0
        %1607 = vmatpush.bf16.msra.mxu0 0
        %1608 = vmatpush.bf16.msra.mxu0 0
        %1609 = vmatpush.bf16.msra.mxu0 0
        %1610 = vmatpush.bf16.msra.mxu0 %v1599
        %1611 = vmatpush.bf16.msra.mxu0 %v1598
        %1612 = vmatmul.bf16.gmra.mxu0 %v1602
        %v1613 = vpop.f32.mrf.mxu0
        %v1614 = vadd.f32 %v1589, %v1613
        %v1615 = vpop.f32.mrf.mxu0
        %1616 = vdwg.mxu0
        %v1617 = vadd.f32 %v1614, %v1017
        %v1618 = vld [vmem:[%s10] sm:$0x1]
        %v1619 = vld [vmem:[%s11] sm:$0x1]
        %v1620 = vsel %vm1037, %v1617, 0.0
        %1621 = vadd.xlane.f32.xlu0 %v1620
        %v1622 = vpop.xlane.xlu0 %1621
        %v1623 = vrcp.pop 32.0
        %v1624 = vmul.f32 32.0, %v1623
        %v1625 = vsub.f32 1.0, %v1624
        %v1626 = vmul.f32 %v1623, %v1625
        %v1627 = vadd.f32 %v1623, %v1626
        %vm1628 = vweird.f32 %v1623
        %v1629 = vsel %vm1628, %v1623, %v1627
        %v1630 = vmul.f32 %v1622, %v1629
        %v1631 = vsub.f32 %v1617, %v1630
        %v1632 = vmul.f32 %v1631, %v1631
        %v1633 = vsel %vm1037, %v1632, 0.0
        %1634 = vadd.xlane.f32.xlu0 %v1633
        %v1635 = vpop.xlane.xlu0 %1634
        %v1636 = vmul.f32 %v1635, %v1629
        %v1637 = vadd.f32 %v1636, 1e-12
        %v1638 = vrsqrt.pop %v1637
        %v1639 = vmul.f32 %v1638, %v1637
        %v1640 = vmul.f32 %v1639, %v1638
        %v1641 = vmul.f32 0.5, %v1640
        %v1642 = vsub.f32 1.5, %v1641
        %v1643 = vmul.f32 %v1638, %v1642
        %vm1644 = vweird.f32 %v1637
        %vm1645 = vweird.f32 %v1638
        %vm1646 = vmor %vm1644, %vm1645
        %v1647 = vsel %vm1646, %v1638, %v1643
        %v1648 = vmul.f32 %v1631, %v1647
        %v1650 = vperm.slane %v1618, 0
        %v1652 = vmul.f32 %v1648, %v1650
        %v1654 = vperm.slane %v1619, 0
        %v1656 = vadd.f32 %v1652, %v1654
        %v1657 = vpack.c.bf16 %v1656, %v1656
        %v1658 = vld [vmem:[#allocation10] sm:$0xf]
        %v1659 = vld [vmem:[#allocation10 + $0x4] sm:$0xf]
        %v1660 = vld [vmem:[#allocation10 + $0x8] sm:$0xf]
        %v1661 = vld [vmem:[#allocation10 + $0xc] sm:$0xf]
        %v1662 = vld [vmem:[%s13] sm:$0x1]
        %v1663 = vunpack.c.l.bf16 %v1662
        %v1664 = vperm.slane %v1663, 0
        %v1669 = vunpack.c.l.b16 %v1658
        %v1670 = vunpack.c.l.b16 %v1659
        %v1671 = vunpack.c.l.b16 %v1660
        %v1672 = vunpack.c.l.b16 %v1661
        %v1673 = vpack.c.b16 %v1670, %v1669
        %v1674 = vpack.c.b16 %v1672, %v1671
        %v1678 = vsel %vm1037, %v1657, 0
        %1680 = vmatpush.bf16.msra.mxu0 0
        %1681 = vmatpush.bf16.msra.mxu0 0
        %1682 = vmatpush.bf16.msra.mxu0 0
        %1683 = vmatpush.bf16.msra.mxu0 0
        %1684 = vmatpush.bf16.msra.mxu0 0
        %1685 = vmatpush.bf16.msra.mxu0 0
        %1686 = vmatpush.bf16.msra.mxu0 %v1674
        %1687 = vmatpush.bf16.msra.mxu0 %v1673
        %1688 = vmatmul.bf16.gmra.mxu0 %v1678
        %v1689 = vpop.f32.mrf.mxu0
        %v1690 = vadd.f32 %v1664, %v1689
        %v1691 = vpop.f32.mrf.mxu0
        %1692 = vdwg.mxu0
        %v1693 = vmul.f32 %v1690, 0.5
        %v1694 = vmul.f32 %v1690, 0.70710677
        %v1695 = vmul.f32 %v1694, %v1694
        %v1696 = vmin.f32 16.0, %v1695
        %v1697 = vmul.f32 %v1696, 2.1237322e-06
        %v1698 = vadd.f32 %v1697, 0.00028619796
        %v1699 = vmul.f32 %v1696, %v1698
        %v1700 = vadd.f32 %v1699, 0.0036580483
        %v1701 = vmul.f32 %v1696, %v1700
        %v1702 = vadd.f32 %v1701, 0.05243302
        %v1703 = vmul.f32 %v1696, %v1702
        %v1704 = vadd.f32 %v1703, 0.18741608
        %v1705 = vmul.f32 %v1696, %v1704
        %v1706 = vadd.f32 %v1705, 1.1283791
        %v1707 = vmul.f32 %v1694, %v1706
        %v1708 = vmul.f32 %v1696, 3.8918573e-05
        %v1709 = vadd.f32 %v1708, 0.001143296
        %v1710 = vmul.f32 %v1696, %v1709
        %v1711 = vadd.f32 %v1710, 0.014752088
        %v1712 = vmul.f32 %v1696, %v1711
        %v1713 = vadd.f32 %v1712, 0.112945676
        %v1714 = vmul.f32 %v1696, %v1713
        %v1715 = vadd.f32 %v1714, 0.4994258
        %v1716 = vmul.f32 %v1696, %v1715
        %v1717 = vadd.f32 %v1716, 1.0
        %v1718 = vrcp.pop %v1717
        %v1719 = vmul.f32 %v1717, %v1718
        %v1720 = vsub.f32 1.0, %v1719
        %v1721 = vmul.f32 %v1718, %v1720
        %v1722 = vadd.f32 %v1718, %v1721
        %vm1723 = vweird.f32 %v1717
        %vm1724 = vweird.f32 %v1718
        %vm1725 = vmor %vm1723, %vm1724
        %v1726 = vsel %vm1725, %v1718, %v1722
        %v1727 = vand.u32 2147483647, %v1717
        %vm1728 = vcmp.eq.f32.partialorder %v1727, 8.507059e+37
        %v1729 = vand.u32 %v1717, 2147483648
        %v1730 = vor.u32 1.1754944e-38, %v1729
        %v1731 = vsel %vm1728, %v1730, %v1726
        %v1732 = vmul.f32 %v1707, %v1731
        %v1733 = vmin.f32 %v1732, 1.0
        %v1734 = vmax.f32 %v1733, -1.0
        %v1735 = vadd.f32 %v1734, 1.0
        %v1736 = vmul.f32 %v1693, %v1735
        %v1737 = vpack.c.bf16 %v1736, %v1736
        %v1738 = vld [vmem:[%s14] sm:$0xf]
        %v1739 = vld [vmem:[%s14 + $0x4] sm:$0xf]
        %v1740 = vld [vmem:[%s14 + $0x8] sm:$0xf]
        %v1741 = vld [vmem:[%s14 + $0xc] sm:$0xf]
        %v1742 = vld [vmem:[%s14 + $0x10] sm:$0xf]
        %v1743 = vld [vmem:[%s14 + $0x14] sm:$0xf]
        %v1744 = vld [vmem:[%s14 + $0x18] sm:$0xf]
        %v1745 = vld [vmem:[%s14 + $0x1c] sm:$0xf]
        %v1746 = vld [vmem:[%s15] sm:$0x1]
        %v1747 = vunpack.c.l.bf16 %v1746
        %v1748 = vperm.slane %v1747, 0
        %v1757 = vunpack.c.l.b16 %v1738
        %v1758 = vunpack.c.l.b16 %v1739
        %v1759 = vunpack.c.l.b16 %v1740
        %v1760 = vunpack.c.l.b16 %v1741
        %v1761 = vunpack.c.l.b16 %v1742
        %v1762 = vunpack.c.l.b16 %v1743
        %v1763 = vunpack.c.l.b16 %v1744
        %v1764 = vunpack.c.l.b16 %v1745
        %v1765 = vpack.c.b16 %v1758, %v1757
        %v1766 = vpack.c.b16 %v1760, %v1759
        %v1767 = vpack.c.b16 %v1762, %v1761
        %v1768 = vpack.c.b16 %v1764, %v1763
        %vm1773 = vcmask 523264
        %v1775 = vsel %vm1773, %v1737, 0
        %1777 = vmatpush.bf16.msra.mxu0 0
        %1778 = vmatpush.bf16.msra.mxu0 0
        %1779 = vmatpush.bf16.msra.mxu0 0
        %1780 = vmatpush.bf16.msra.mxu0 0
        %1781 = vmatpush.bf16.msra.mxu0 %v1768
        %1782 = vmatpush.bf16.msra.mxu0 %v1767
        %1783 = vmatpush.bf16.msra.mxu0 %v1766
        %1784 = vmatpush.bf16.msra.mxu0 %v1765
        %1785 = vmatmul.bf16.gmra.mxu0 %v1775
        %v1786 = vpop.f32.mrf.mxu0
        %v1787 = vadd.f32 %v1748, %v1786
        %v1788 = vpop.f32.mrf.mxu0
        %1789 = vdwg.mxu0
        %v1790 = vadd.f32 %v1787, %v1656
        %v1791 = vld [vmem:[%s16] sm:$0x1]
        %v1792 = vld [vmem:[%s17] sm:$0x1]
        %v1793 = vsel %vm1037, %v1790, 0.0
        %1794 = vadd.xlane.f32.xlu0 %v1793
        %v1795 = vpop.xlane.xlu0 %1794
        %v1796 = vmul.f32 %v1795, %v1629
        %v1797 = vsub.f32 %v1790, %v1796
        %v1798 = vmul.f32 %v1797, %v1797
        %v1799 = vsel %vm1037, %v1798, 0.0
        %1800 = vadd.xlane.f32.xlu0 %v1799
        %v1801 = vpop.xlane.xlu0 %1800
        %v1802 = vmul.f32 %v1801, %v1629
        %v1803 = vadd.f32 %v1802, 1e-12
        %v1804 = vrsqrt.pop %v1803
        %v1805 = vmul.f32 %v1804, %v1803
        %v1806 = vmul.f32 %v1805, %v1804
        %v1807 = vmul.f32 0.5, %v1806
        %v1808 = vsub.f32 1.5, %v1807
        %v1809 = vmul.f32 %v1804, %v1808
        %vm1810 = vweird.f32 %v1803
        %vm1811 = vweird.f32 %v1804
        %vm1812 = vmor %vm1810, %vm1811
        %v1813 = vsel %vm1812, %v1804, %v1809
        %v1814 = vmul.f32 %v1797, %v1813
        %v1816 = vperm.slane %v1791, 0
        %v1818 = vmul.f32 %v1814, %v1816
        %v1820 = vperm.slane %v1792, 0
        %v1822 = vadd.f32 %v1818, %v1820
        %v1823 = vpack.c.bf16 %v1822, %v1822
        %vm1824 = vcmask 257024
        %1825 = vst.msk [vmem:[%s674] sm:$0xf] %vm1824, %v1823
        %s1826 = sand.u32 %s449, 1
        %s1827 = scalar_lea.sflag [#allocation6], %s1826
        %s1828 = sand.u32 %s449, 1
        %s1829 = smul.addr %s1828, 4
        %s1830 = scalar_lea.vmem [#allocation12], %s1829
        // Predicated region
        $region113: #{tpu_custom_call.1} parent=91 // pred_check
          %p1831 = pneg %p459
        $region114: #{tpu_custom_call.1} parent=91 // pred_check_branch
          %1833 = sbr.rel (%p1831) target = $region116
        $region115: #{tpu_custom_call.1} parent=91 // pred_region
          %1835 = vsyncadd %s1827, 0
          %s1836 = sadd.s32 %s44, %s43
          %s1837 = smul.addr %s1836, 4
          %s1838 = scalar_lea.hbm %s18, %s1837
          %s1840 = sshll.u32 %s1830, 4
          %s1841 = int_to_ptr.vmem [resolvable:$true] %s1840
          %s1842 = sshll.u32 %s1838, 4
          %s1843 = int_to_ptr.hbm [resolvable:$true] %s1842
          %1845 = dma.vmem_to_hbm [thread:$0]  %s1841, 64, %s1843, %s1827
        $region116: #{tpu_custom_call.1} parent=91 // pred_fallthru
          _
      $region92: #{tpu_custom_call.1} parent=5 // pred_fallthru
        _
      %p1846 = scmp.le.s32.totalorder 2, %s34
      // Predicated region
      $region117: #{tpu_custom_call.1} parent=5 // pred_check
        %p1847 = pneg %p1846
      $region118: #{tpu_custom_call.1} parent=5 // pred_check_branch
        %1849 = sbr.rel (%p1847) target = $region120
      $region119: #{tpu_custom_call.1} parent=5 // pred_region
        %s1850 = ssub.s32 %s34, 2
        // Predicated region
        $region121: #{tpu_custom_call.1} parent=119 // pred_check
          %p1851 = pneg %p465
        $region122: #{tpu_custom_call.1} parent=119 // pred_check_branch
          %1853 = sbr.rel (%p1851) target = $region124
        $region123: #{tpu_custom_call.1} parent=119 // pred_region
          %s1854 = sand.u32 %s450, 1
          %s1855 = scalar_lea.sflag [#allocation6], %s1854
          %s1856 = sand.u32 %s450, 1
          %s1857 = smul.addr %s1856, 4
          %s1858 = scalar_lea.vmem [#allocation12], %s1857
          %1860 = dma.done %s1855, 64
        $region124: #{tpu_custom_call.1} parent=119 // pred_fallthru
          _
      $region120: #{tpu_custom_call.1} parent=5 // pred_fallthru
        _
    $region6: #{tpu_custom_call.1} parent=1 // loop_footer
      %s38 = sadd.s32 1, %s34
    $region7: #{tpu_custom_call.1} parent=1 // loop_footer_branch
      %33 = sbr.rel target = $region3
    $region8: #{tpu_custom_call.1} parent=1 // loop_exit
      _
    %1861 = vsyncpa [#allocation5], 1
    %s1862 = scalar_lea.sflag [#allocation5], 1
    %1863 = vsyncpa %s1862, 1
    %1864 = vsyncpa [#allocation8], 1
    %s1865 = scalar_lea.sflag [#allocation8], 1
    %1866 = vsyncpa %s1865, 1
    %1867 = vsyncpa [#allocation11], 1
    %1868 = vsyncpa [#allocation6], 1
    %s1869 = scalar_lea.sflag [#allocation6], 1
    %1870 = vsyncpa %s1869, 1

// kernel: tpu_custom_call.1
$region0: #{tpu_custom_call.1}
  #allocation0 [shape = 'u32[]', space=smem, size = 0x4, offset = 0x4, fixed_abs, tag = 'smem constant byte address 0x4 - core index']
  #allocation1 [shape = 'u32[72,128]{1,0:T(1,128)}', space=vmem, size = 0x9000, scoped, tag = 'internal scratch']
  #allocation2 [shape = 'bf16[4,8,8]{2,1,0:T(8,128)(2,1)}', space=vmem, size = 0x2000, scoped, tag = 'scratch operand']
  #allocation3 [shape = 'bf16[4,8,8]{2,1,0:T(8,128)(2,1)}', space=vmem, size = 0x2000, scoped, tag = 'scratch operand']
  %s0 = inlined_call_operand.hbm [shape: bf16[2,8,32], index: 0, kind: input, shape index: {}]
  %s1 = inlined_call_operand.hbm [shape: f32[2,1,8], index: 1, kind: input, shape index: {}]
  %s2 = inlined_call_operand.vmem [shape: bf16[32,32], index: 2, kind: input, shape index: {}]
  %s3 = inlined_call_operand.vmem [shape: bf16[1,32], index: 3, kind: input, shape index: {}]
  %s4 = inlined_call_operand.vmem [shape: bf16[32,32], index: 4, kind: input, shape index: {}]
  %s5 = inlined_call_operand.vmem [shape: bf16[1,32], index: 5, kind: input, shape index: {}]
  %s6 = inlined_call_operand.vmem [shape: bf16[32,32], index: 6, kind: input, shape index: {}]
  %s7 = inlined_call_operand.vmem [shape: bf16[1,32], index: 7, kind: input, shape index: {}]
  %s8 = inlined_call_operand.hbm [shape: bf16[32,32], index: 8, kind: input, shape index: {}]
  %s9 = inlined_call_operand.vmem [shape: bf16[1,32], index: 9, kind: input, shape index: {}]
  %s10 = inlined_call_operand.vmem [shape: f32[1,32], index: 10, kind: input, shape index: {}]
  %s11 = inlined_call_operand.vmem [shape: f32[1,32], index: 11, kind: input, shape index: {}]
  %s12 = inlined_call_operand.hbm [shape: bf16[32,64], index: 12, kind: input, shape index: {}]
  %s13 = inlined_call_operand.vmem [shape: bf16[1,64], index: 13, kind: input, shape index: {}]
  %s14 = inlined_call_operand.vmem [shape: bf16[64,32], index: 14, kind: input, shape index: {}]
  %s15 = inlined_call_operand.vmem [shape: bf16[1,32], index: 15, kind: input, shape index: {}]
  %s16 = inlined_call_operand.vmem [shape: f32[1,32], index: 16, kind: input, shape index: {}]
  %s17 = inlined_call_operand.vmem [shape: f32[1,32], index: 17, kind: input, shape index: {}]
  %s18 = inlined_call_operand.hbm [shape: bf16[2,8,32], index: 18, kind: output, shape index: {}]
  %s19 = sld [smem:[#allocation0]]
  $region125: #{tpu_custom_call.1} parent=0
    _
  %s21 = ssub.s32 1, %s19
  %s22 = scalar_select 0, %s21, %s19
  $region1: #{tpu_custom_call.1} parent=0
    #allocation4 [shape = 'u8[4096]{0}', space=vmem, size = 0x1000, scoped, tag = 'input window, operand 0']
    #allocation5 [shape = 's32[2]{0}', space=sflag, size = 0x8, scoped, tag = 'scoped memory for tpu_custom_call.1']
    #allocation6 [shape = 's32[2]{0}', space=sflag, size = 0x8, scoped, tag = 'scoped memory for tpu_custom_call.1']
    #allocation7 [shape = 'u8[1024]{0}', space=vmem, size = 0x400, scoped, tag = 'input window, operand 1']
    #allocation8 [shape = 's32[2]{0}', space=sflag, size = 0x8, scoped, tag = 'scoped memory for tpu_custom_call.1']
    #allocation9 [shape = 'u8[8192]{0}', space=vmem, size = 0x2000, scoped, tag = 'input window, operand 8, single buffered']
    #allocation10 [shape = 'u8[8192]{0}', space=vmem, size = 0x2000, scoped, tag = 'input window, operand 12, single buffered']
    #allocation11 [shape = 's32[1]{0}', space=sflag, size = 0x4, scoped, tag = 'scoped memory for tpu_custom_call.1']
    #allocation12 [shape = 'u8[4096]{0}', space=vmem, size = 0x1000, scoped, tag = 'output window, operand 0']
    %23 = vsyncpa [#allocation5], 0
    %s24 = scalar_lea.sflag [#allocation5], 1
    %25 = vsyncpa %s24, 0
    %26 = vsyncpa [#allocation8], 0
    %s27 = scalar_lea.sflag [#allocation8], 1
    %28 = vsyncpa %s27, 0
    %29 = vsyncpa [#allocation11], 0
    %30 = vsyncpa [#allocation6], 0
    %s31 = scalar_lea.sflag [#allocation6], 1
    %32 = vsyncpa %s31, 0
    loop: start=0, step=1, limit=4
    $region2: #{tpu_custom_call.1} parent=1 // loop_pre_header
      _
    $region3: #{tpu_custom_call.1} parent=1 // loop_header
      %s34 = sphi 0, %s38
      %p35 = scmp.ge.s32.totalorder %s34, 4
      %s41 = sphi 0, %s53
      %s42 = sphi 0, %s49
      %s43 = sphi 0, %s41
      %s44 = sphi 0, %s42
      %s45 = sphi 0, %s43
      %s46 = sphi 0, %s44
      %s56 = sphi 0, %s58
      %s59 = sphi 0, %s56
      %s60 = sphi 0, %s59
      %s76 = sphi 0, %s60
      %s82 = sphi 0, %s84
      %s85 = sphi 0, %s82
      %s86 = sphi 0, %s85
      %s102 = sphi 0, %s86
      %s106 = sphi 0, %s106
      %s108 = sphi 0, %s106
      %s109 = sphi 0, %s108
      %s123 = sphi 0, %s109
      %s127 = sphi 0, %s127
      %s129 = sphi 0, %s127
      %s130 = sphi 0, %s129
      %s144 = sphi 0, %s130
      %s148 = sphi 0, %s148
      %s150 = sphi 0, %s148
      %s151 = sphi 0, %s150
      %s165 = sphi 0, %s151
      %s169 = sphi 0, %s169
      %s171 = sphi 0, %s169
      %s172 = sphi 0, %s171
      %s186 = sphi 0, %s172
      %s190 = sphi 0, %s190
      %s192 = sphi 0, %s190
      %s193 = sphi 0, %s192
      %s207 = sphi 0, %s193
      %s211 = sphi 0, %s211
      %s213 = sphi 0, %s211
      %s214 = sphi 0, %s213
      %s228 = sphi 0, %s214
      %s232 = sphi 0, %s232
      %s234 = sphi 0, %s232
      %s235 = sphi 0, %s234
      %s249 = sphi 0, %s235
      %s253 = sphi 0, %s253
      %s255 = sphi 0, %s253
      %s256 = sphi 0, %s255
      %s270 = sphi 0, %s256
      %s274 = sphi 0, %s274
      %s276 = sphi 0, %s274
      %s277 = sphi 0, %s276
      %s291 = sphi 0, %s277
      %s295 = sphi 0, %s295
      %s297 = sphi 0, %s295
      %s298 = sphi 0, %s297
      %s312 = sphi 0, %s298
      %s316 = sphi 0, %s316
      %s318 = sphi 0, %s316
      %s319 = sphi 0, %s318
      %s333 = sphi 0, %s319
      %s337 = sphi 0, %s337
      %s339 = sphi 0, %s337
      %s340 = sphi 0, %s339
      %s354 = sphi 0, %s340
      %s358 = sphi 0, %s358
      %s360 = sphi 0, %s358
      %s361 = sphi 0, %s360
      %s375 = sphi 0, %s361
      %s379 = sphi 0, %s379
      %s381 = sphi 0, %s379
      %s382 = sphi 0, %s381
      %s396 = sphi 0, %s382
      %s400 = sphi 0, %s400
      %s402 = sphi 0, %s400
      %s403 = sphi 0, %s402
      %s417 = sphi 0, %s403
      %s421 = sphi 0, %s421
      %s423 = sphi 0, %s421
      %s424 = sphi 0, %s423
      %s438 = sphi 0, %s424
      %s446 = sphi 0, %s448
      %s449 = sphi 0, %s446
      %s450 = sphi 0, %s449
      %s466 = sphi 0, %s450
    $region4: #{tpu_custom_call.1} parent=1 // loop_header_branch
      %37 = sbr.rel (%p35) target = $region8
    $region5: #{tpu_custom_call.1} parent=1 // loop_body
      %s39 = ssub.s32 %s34, 1
      %s40 = ssub.s32 %s34, 2
      %s47 = sadd.s32 1, %s42
      %p48 = scmp.ge.s32.totalorder %s47, 1
      %s49 = scalar_select %p48, 0, %s47
      %s50 = sadd.s32 1, %s41
      %s51 = scalar_select %p48, %s50, %s41
      %p52 = scmp.ge.s32.totalorder %s51, 2
      %s53 = scalar_select %p52, 0, %s51
      %s54 = ssub.s32 %s41, %s53
      %p55 = scmp.eq.s32.totalorder %s54, 0
      %s57 = sadd.s32 %s56, 1
      %s58 = scalar_select %p55, %s56, %s57
      %p61 = pneg %p55
      %p62 = scmp.eq.s32.totalorder %s34, 1
      %p63 = por %p61, %p62
      %p64 = scmp.ne.s32.totalorder %s56, %s59
      %p65 = scmp.eq.s32.totalorder %s34, 0
      %p66 = por %p64, %p65
      %p67 = scmp.ne.s32.totalorder %s56, %s59
      %p68 = scmp.eq.s32.totalorder %s39, 1
      %p69 = por %p67, %p68
      %p70 = scmp.ne.s32.totalorder %s59, %s60
      %p71 = scmp.eq.s32.totalorder %s39, 0
      %p72 = por %p70, %p71
      %p73 = scmp.ne.s32.totalorder %s59, %s60
      %p74 = scmp.eq.s32.totalorder %s40, 1
      %p75 = por %p73, %p74
      %p77 = scmp.ne.s32.totalorder %s60, %s76
      %p78 = scmp.eq.s32.totalorder %s40, 0
      %p79 = por %p77, %p78
      %s80 = ssub.s32 %s41, %s53
      %p81 = scmp.eq.s32.totalorder %s80, 0
      %s83 = sadd.s32 %s82, 1
      %s84 = scalar_select %p81, %s82, %s83
      %p87 = pneg %p81
      %p88 = scmp.eq.s32.totalorder %s34, 1
      %p89 = por %p87, %p88
      %p90 = scmp.ne.s32.totalorder %s82, %s85
      %p91 = scmp.eq.s32.totalorder %s34, 0
      %p92 = por %p90, %p91
      %p93 = scmp.ne.s32.totalorder %s82, %s85
      %p94 = scmp.eq.s32.totalorder %s39, 1
      %p95 = por %p93, %p94
      %p96 = scmp.ne.s32.totalorder %s85, %s86
      %p97 = scmp.eq.s32.totalorder %s39, 0
      %p98 = por %p96, %p97
      %p99 = scmp.ne.s32.totalorder %s85, %s86
      %p100 = scmp.eq.s32.totalorder %s40, 1
      %p101 = por %p99, %p100
      %p103 = scmp.ne.s32.totalorder %s86, %s102
      %p104 = scmp.eq.s32.totalorder %s40, 0
      %p105 = por %p103, %p104
      %s107 = sadd.s32 %s106, 1
      %p110 = scmp.eq.s32.totalorder %s34, 1
      %p111 = scmp.ne.s32.totalorder %s106, %s108
      %p112 = scmp.eq.s32.totalorder %s34, 0
      %p113 = por %p111, %p112
      %p114 = scmp.ne.s32.totalorder %s106, %s108
      %p115 = scmp.eq.s32.totalorder %s39, 1
      %p116 = por %p114, %p115
      %p117 = scmp.ne.s32.totalorder %s108, %s109
      %p118 = scmp.eq.s32.totalorder %s39, 0
      %p119 = por %p117, %p118
      %p120 = scmp.ne.s32.totalorder %s108, %s109
      %p121 = scmp.eq.s32.totalorder %s40, 1
      %p122 = por %p120, %p121
      %p124 = scmp.ne.s32.totalorder %s109, %s123
      %p125 = scmp.eq.s32.totalorder %s40, 0
      %p126 = por %p124, %p125
      %s128 = sadd.s32 %s127, 1
      %p131 = scmp.eq.s32.totalorder %s34, 1
      %p132 = scmp.ne.s32.totalorder %s127, %s129
      %p133 = scmp.eq.s32.totalorder %s34, 0
      %p134 = por %p132, %p133
      %p135 = scmp.ne.s32.totalorder %s127, %s129
      %p136 = scmp.eq.s32.totalorder %s39, 1
      %p137 = por %p135, %p136
      %p138 = scmp.ne.s32.totalorder %s129, %s130
      %p139 = scmp.eq.s32.totalorder %s39, 0
      %p140 = por %p138, %p139
      %p141 = scmp.ne.s32.totalorder %s129, %s130
      %p142 = scmp.eq.s32.totalorder %s40, 1
      %p143 = por %p141, %p142
      %p145 = scmp.ne.s32.totalorder %s130, %s144
      %p146 = scmp.eq.s32.totalorder %s40, 0
      %p147 = por %p145, %p146
      %s149 = sadd.s32 %s148, 1
      %p152 = scmp.eq.s32.totalorder %s34, 1
      %p153 = scmp.ne.s32.totalorder %s148, %s150
      %p154 = scmp.eq.s32.totalorder %s34, 0
      %p155 = por %p153, %p154
      %p156 = scmp.ne.s32.totalorder %s148, %s150
      %p157 = scmp.eq.s32.totalorder %s39, 1
      %p158 = por %p156, %p157
      %p159 = scmp.ne.s32.totalorder %s150, %s151
      %p160 = scmp.eq.s32.totalorder %s39, 0
      %p161 = por %p159, %p160
      %p162 = scmp.ne.s32.totalorder %s150, %s151
      %p163 = scmp.eq.s32.totalorder %s40, 1
      %p164 = por %p162, %p163
      %p166 = scmp.ne.s32.totalorder %s151, %s165
      %p167 = scmp.eq.s32.totalorder %s40, 0
      %p168 = por %p166, %p167
      %s170 = sadd.s32 %s169, 1
      %p173 = scmp.eq.s32.totalorder %s34, 1
      %p174 = scmp.ne.s32.totalorder %s169, %s171
      %p175 = scmp.eq.s32.totalorder %s34, 0
      %p176 = por %p174, %p175
      %p177 = scmp.ne.s32.totalorder %s169, %s171
      %p178 = scmp.eq.s32.totalorder %s39, 1
      %p179 = por %p177, %p178
      %p180 = scmp.ne.s32.totalorder %s171, %s172
      %p181 = scmp.eq.s32.totalorder %s39, 0
      %p182 = por %p180, %p181
      %p183 = scmp.ne.s32.totalorder %s171, %s172
      %p184 = scmp.eq.s32.totalorder %s40, 1
      %p185 = por %p183, %p184
      %p187 = scmp.ne.s32.totalorder %s172, %s186
      %p188 = scmp.eq.s32.totalorder %s40, 0
      %p189 = por %p187, %p188
      %s191 = sadd.s32 %s190, 1
      %p194 = scmp.eq.s32.totalorder %s34, 1
      %p195 = scmp.ne.s32.totalorder %s190, %s192
      %p196 = scmp.eq.s32.totalorder %s34, 0
      %p197 = por %p195, %p196
      %p198 = scmp.ne.s32.totalorder %s190, %s192
      %p199 = scmp.eq.s32.totalorder %s39, 1
      %p200 = por %p198, %p199
      %p201 = scmp.ne.s32.totalorder %s192, %s193
      %p202 = scmp.eq.s32.totalorder %s39, 0
      %p203 = por %p201, %p202
      %p204 = scmp.ne.s32.totalorder %s192, %s193
      %p205 = scmp.eq.s32.totalorder %s40, 1
      %p206 = por %p204, %p205
      %p208 = scmp.ne.s32.totalorder %s193, %s207
      %p209 = scmp.eq.s32.totalorder %s40, 0
      %p210 = por %p208, %p209
      %s212 = sadd.s32 %s211, 1
      %p215 = scmp.eq.s32.totalorder %s34, 1
      %p216 = scmp.ne.s32.totalorder %s211, %s213
      %p217 = scmp.eq.s32.totalorder %s34, 0
      %p218 = por %p216, %p217
      %p219 = scmp.ne.s32.totalorder %s211, %s213
      %p220 = scmp.eq.s32.totalorder %s39, 1
      %p221 = por %p219, %p220
      %p222 = scmp.ne.s32.totalorder %s213, %s214
      %p223 = scmp.eq.s32.totalorder %s39, 0
      %p224 = por %p222, %p223
      %p225 = scmp.ne.s32.totalorder %s213, %s214
      %p226 = scmp.eq.s32.totalorder %s40, 1
      %p227 = por %p225, %p226
      %p229 = scmp.ne.s32.totalorder %s214, %s228
      %p230 = scmp.eq.s32.totalorder %s40, 0
      %p231 = por %p229, %p230
      %s233 = sadd.s32 %s232, 1
      %p236 = scmp.eq.s32.totalorder %s34, 1
      %p237 = scmp.ne.s32.totalorder %s232, %s234
      %p238 = scmp.eq.s32.totalorder %s34, 0
      %p239 = por %p237, %p238
      %p240 = scmp.ne.s32.totalorder %s232, %s234
      %p241 = scmp.eq.s32.totalorder %s39, 1
      %p242 = por %p240, %p241
      %p243 = scmp.ne.s32.totalorder %s234, %s235
      %p244 = scmp.eq.s32.totalorder %s39, 0
      %p245 = por %p243, %p244
      %p246 = scmp.ne.s32.totalorder %s234, %s235
      %p247 = scmp.eq.s32.totalorder %s40, 1
      %p248 = por %p246, %p247
      %p250 = scmp.ne.s32.totalorder %s235, %s249
      %p251 = scmp.eq.s32.totalorder %s40, 0
      %p252 = por %p250, %p251
      %s254 = sadd.s32 %s253, 1
      %p257 = scmp.eq.s32.totalorder %s34, 1
      %p258 = scmp.ne.s32.totalorder %s253, %s255
      %p259 = scmp.eq.s32.totalorder %s34, 0
      %p260 = por %p258, %p259
      %p261 = scmp.ne.s32.totalorder %s253, %s255
      %p262 = scmp.eq.s32.totalorder %s39, 1
      %p263 = por %p261, %p262
      %p264 = scmp.ne.s32.totalorder %s255, %s256
      %p265 = scmp.eq.s32.totalorder %s39, 0
      %p266 = por %p264, %p265
      %p267 = scmp.ne.s32.totalorder %s255, %s256
      %p268 = scmp.eq.s32.totalorder %s40, 1
      %p269 = por %p267, %p268
      %p271 = scmp.ne.s32.totalorder %s256, %s270
      %p272 = scmp.eq.s32.totalorder %s40, 0
      %p273 = por %p271, %p272
      %s275 = sadd.s32 %s274, 1
      %p278 = scmp.eq.s32.totalorder %s34, 1
      %p279 = scmp.ne.s32.totalorder %s274, %s276
      %p280 = scmp.eq.s32.totalorder %s34, 0
      %p281 = por %p279, %p280
      %p282 = scmp.ne.s32.totalorder %s274, %s276
      %p283 = scmp.eq.s32.totalorder %s39, 1
      %p284 = por %p282, %p283
      %p285 = scmp.ne.s32.totalorder %s276, %s277
      %p286 = scmp.eq.s32.totalorder %s39, 0
      %p287 = por %p285, %p286
      %p288 = scmp.ne.s32.totalorder %s276, %s277
      %p289 = scmp.eq.s32.totalorder %s40, 1
      %p290 = por %p288, %p289
      %p292 = scmp.ne.s32.totalorder %s277, %s291
      %p293 = scmp.eq.s32.totalorder %s40, 0
      %p294 = por %p292, %p293
      %s296 = sadd.s32 %s295, 1
      %p299 = scmp.eq.s32.totalorder %s34, 1
      %p300 = scmp.ne.s32.totalorder %s295, %s297
      %p301 = scmp.eq.s32.totalorder %s34, 0
      %p302 = por %p300, %p301
      %p303 = scmp.ne.s32.totalorder %s295, %s297
      %p304 = scmp.eq.s32.totalorder %s39, 1
      %p305 = por %p303, %p304
      %p306 = scmp.ne.s32.totalorder %s297, %s298
      %p307 = scmp.eq.s32.totalorder %s39, 0
      %p308 = por %p306, %p307
      %p309 = scmp.ne.s32.totalorder %s297, %s298
      %p310 = scmp.eq.s32.totalorder %s40, 1
      %p311 = por %p309, %p310
      %p313 = scmp.ne.s32.totalorder %s298, %s312
      %p314 = scmp.eq.s32.totalorder %s40, 0
      %p315 = por %p313, %p314
      %s317 = sadd.s32 %s316, 1
      %p320 = scmp.eq.s32.totalorder %s34, 1
      %p321 = scmp.ne.s32.totalorder %s316, %s318
      %p322 = scmp.eq.s32.totalorder %s34, 0
      %p323 = por %p321, %p322
      %p324 = scmp.ne.s32.totalorder %s316, %s318
      %p325 = scmp.eq.s32.totalorder %s39, 1
      %p326 = por %p324, %p325
      %p327 = scmp.ne.s32.totalorder %s318, %s319
      %p328 = scmp.eq.s32.totalorder %s39, 0
      %p329 = por %p327, %p328
      %p330 = scmp.ne.s32.totalorder %s318, %s319
      %p331 = scmp.eq.s32.totalorder %s40, 1
      %p332 = por %p330, %p331
      %p334 = scmp.ne.s32.totalorder %s319, %s333
      %p335 = scmp.eq.s32.totalorder %s40, 0
      %p336 = por %p334, %p335
      %s338 = sadd.s32 %s337, 1
      %p341 = scmp.eq.s32.totalorder %s34, 1
      %p342 = scmp.ne.s32.totalorder %s337, %s339
      %p343 = scmp.eq.s32.totalorder %s34, 0
      %p344 = por %p342, %p343
      %p345 = scmp.ne.s32.totalorder %s337, %s339
      %p346 = scmp.eq.s32.totalorder %s39, 1
      %p347 = por %p345, %p346
      %p348 = scmp.ne.s32.totalorder %s339, %s340
      %p349 = scmp.eq.s32.totalorder %s39, 0
      %p350 = por %p348, %p349
      %p351 = scmp.ne.s32.totalorder %s339, %s340
      %p352 = scmp.eq.s32.totalorder %s40, 1
      %p353 = por %p351, %p352
      %p355 = scmp.ne.s32.totalorder %s340, %s354
      %p356 = scmp.eq.s32.totalorder %s40, 0
      %p357 = por %p355, %p356
      %s359 = sadd.s32 %s358, 1
      %p362 = scmp.eq.s32.totalorder %s34, 1
      %p363 = scmp.ne.s32.totalorder %s358, %s360
      %p364 = scmp.eq.s32.totalorder %s34, 0
      %p365 = por %p363, %p364
      %p366 = scmp.ne.s32.totalorder %s358, %s360
      %p367 = scmp.eq.s32.totalorder %s39, 1
      %p368 = por %p366, %p367
      %p369 = scmp.ne.s32.totalorder %s360, %s361
      %p370 = scmp.eq.s32.totalorder %s39, 0
      %p371 = por %p369, %p370
      %p372 = scmp.ne.s32.totalorder %s360, %s361
      %p373 = scmp.eq.s32.totalorder %s40, 1
      %p374 = por %p372, %p373
      %p376 = scmp.ne.s32.totalorder %s361, %s375
      %p377 = scmp.eq.s32.totalorder %s40, 0
      %p378 = por %p376, %p377
      %s380 = sadd.s32 %s379, 1
      %p383 = scmp.eq.s32.totalorder %s34, 1
      %p384 = scmp.ne.s32.totalorder %s379, %s381
      %p385 = scmp.eq.s32.totalorder %s34, 0
      %p386 = por %p384, %p385
      %p387 = scmp.ne.s32.totalorder %s379, %s381
      %p388 = scmp.eq.s32.totalorder %s39, 1
      %p389 = por %p387, %p388
      %p390 = scmp.ne.s32.totalorder %s381, %s382
      %p391 = scmp.eq.s32.totalorder %s39, 0
      %p392 = por %p390, %p391
      %p393 = scmp.ne.s32.totalorder %s381, %s382
      %p394 = scmp.eq.s32.totalorder %s40, 1
      %p395 = por %p393, %p394
      %p397 = scmp.ne.s32.totalorder %s382, %s396
      %p398 = scmp.eq.s32.totalorder %s40, 0
      %p399 = por %p397, %p398
      %s401 = sadd.s32 %s400, 1
      %p404 = scmp.eq.s32.totalorder %s34, 1
      %p405 = scmp.ne.s32.totalorder %s400, %s402
      %p406 = scmp.eq.s32.totalorder %s34, 0
      %p407 = por %p405, %p406
      %p408 = scmp.ne.s32.totalorder %s400, %s402
      %p409 = scmp.eq.s32.totalorder %s39, 1
      %p410 = por %p408, %p409
      %p411 = scmp.ne.s32.totalorder %s402, %s403
      %p412 = scmp.eq.s32.totalorder %s39, 0
      %p413 = por %p411, %p412
      %p414 = scmp.ne.s32.totalorder %s402, %s403
      %p415 = scmp.eq.s32.totalorder %s40, 1
      %p416 = por %p414, %p415
      %p418 = scmp.ne.s32.totalorder %s403, %s417
      %p419 = scmp.eq.s32.totalorder %s40, 0
      %p420 = por %p418, %p419
      %s422 = sadd.s32 %s421, 1
      %p425 = scmp.eq.s32.totalorder %s34, 1
      %p426 = scmp.ne.s32.totalorder %s421, %s423
      %p427 = scmp.eq.s32.totalorder %s34, 0
      %p428 = por %p426, %p427
      %p429 = scmp.ne.s32.totalorder %s421, %s423
      %p430 = scmp.eq.s32.totalorder %s39, 1
      %p431 = por %p429, %p430
      %p432 = scmp.ne.s32.totalorder %s423, %s424
      %p433 = scmp.eq.s32.totalorder %s39, 0
      %p434 = por %p432, %p433
      %p435 = scmp.ne.s32.totalorder %s423, %s424
      %p436 = scmp.eq.s32.totalorder %s40, 1
      %p437 = por %p435, %p436
      %p439 = scmp.ne.s32.totalorder %s424, %s438
      %p440 = scmp.eq.s32.totalorder %s40, 0
      %p441 = por %p439, %p440
      %s442 = ssub.s32 %s41, %s53
      %s443 = ssub.s32 %s42, %s49
      %s444 = sor.u32 %s442, %s443
      %p445 = scmp.eq.s32.totalorder %s444, 0
      %s447 = sadd.s32 %s446, 1
      %s448 = scalar_select %p445, %s446, %s447
      %p451 = pneg %p445
      %p452 = scmp.eq.s32.totalorder %s34, 1
      %p453 = por %p451, %p452
      %p454 = scmp.ne.s32.totalorder %s446, %s449
      %p455 = scmp.eq.s32.totalorder %s34, 0
      %p456 = por %p454, %p455
      %p457 = scmp.ne.s32.totalorder %s446, %s449
      %p458 = scmp.eq.s32.totalorder %s39, 1
      %p459 = por %p457, %p458
      %p460 = scmp.ne.s32.totalorder %s449, %s450
      %p461 = scmp.eq.s32.totalorder %s39, 0
      %p462 = por %p460, %p461
      %p463 = scmp.ne.s32.totalorder %s449, %s450
      %p464 = scmp.eq.s32.totalorder %s40, 1
      %p465 = por %p463, %p464
      %p467 = scmp.ne.s32.totalorder %s450, %s466
      %p468 = scmp.eq.s32.totalorder %s40, 0
      %p469 = por %p467, %p468
      %p470 = scmp.le.s32.totalorder 1, %s34
      %p471 = scmp.lt.s32.totalorder %s34, 3
      %p472 = pnand %p470, %p471
      %p473 = pneg %p472
      // Predicated region
      $region9: #{tpu_custom_call.1} parent=5 // pred_check
        _
      $region10: #{tpu_custom_call.1} parent=5 // pred_check_branch
        %475 = sbr.rel (%p472) target = $region12
      $region11: #{tpu_custom_call.1} parent=5 // pred_region
        %s476 = ssub.s32 %s34, 1
        // Predicated region
        $region13: #{tpu_custom_call.1} parent=11 // pred_check
          %p477 = pneg %p119
        $region14: #{tpu_custom_call.1} parent=11 // pred_check_branch
          %479 = sbr.rel (%p477) target = $region16
        $region15: #{tpu_custom_call.1} parent=11 // pred_region
          _
        $region16: #{tpu_custom_call.1} parent=11 // pred_fallthru
          _
        // Predicated region
        $region17: #{tpu_custom_call.1} parent=11 // pred_check
          %p480 = pneg %p140
        $region18: #{tpu_custom_call.1} parent=11 // pred_check_branch
          %482 = sbr.rel (%p480) target = $region20
        $region19: #{tpu_custom_call.1} parent=11 // pred_region
          _
        $region20: #{tpu_custom_call.1} parent=11 // pred_fallthru
          _
        // Predicated region
        $region21: #{tpu_custom_call.1} parent=11 // pred_check
          %p483 = pneg %p161
        $region22: #{tpu_custom_call.1} parent=11 // pred_check_branch
          %485 = sbr.rel (%p483) target = $region24
        $region23: #{tpu_custom_call.1} parent=11 // pred_region
          _
        $region24: #{tpu_custom_call.1} parent=11 // pred_fallthru
          _
        // Predicated region
        $region25: #{tpu_custom_call.1} parent=11 // pred_check
          %p486 = pneg %p182
        $region26: #{tpu_custom_call.1} parent=11 // pred_check_branch
          %488 = sbr.rel (%p486) target = $region28
        $region27: #{tpu_custom_call.1} parent=11 // pred_region
          _
        $region28: #{tpu_custom_call.1} parent=11 // pred_fallthru
          _
        // Predicated region
        $region29: #{tpu_custom_call.1} parent=11 // pred_check
          %p489 = pneg %p203
        $region30: #{tpu_custom_call.1} parent=11 // pred_check_branch
          %491 = sbr.rel (%p489) target = $region32
        $region31: #{tpu_custom_call.1} parent=11 // pred_region
          _
        $region32: #{tpu_custom_call.1} parent=11 // pred_fallthru
          _
        // Predicated region
        $region33: #{tpu_custom_call.1} parent=11 // pred_check
          %p492 = pneg %p224
        $region34: #{tpu_custom_call.1} parent=11 // pred_check_branch
          %494 = sbr.rel (%p492) target = $region36
        $region35: #{tpu_custom_call.1} parent=11 // pred_region
          _
        $region36: #{tpu_custom_call.1} parent=11 // pred_fallthru
          _
        // Predicated region
        $region37: #{tpu_custom_call.1} parent=11 // pred_check
          %p495 = pneg %p245
        $region38: #{tpu_custom_call.1} parent=11 // pred_check_branch
          %497 = sbr.rel (%p495) target = $region40
        $region39: #{tpu_custom_call.1} parent=11 // pred_region
          %499 = vsyncadd [#allocation8], 0
          %s500 = sshll.u32 %s8, 4
          %s501 = int_to_ptr.hbm [resolvable:$true] %s500
          %s502 = sshll.u32 [#allocation9], 4
          %s503 = int_to_ptr.vmem [resolvable:$true] %s502
          %508 = dma.hbm_to_vmem [thread:$0]  %s501, 256, %s503, [#allocation8], 64, 64, 4
        $region40: #{tpu_custom_call.1} parent=11 // pred_fallthru
          _
        // Predicated region
        $region41: #{tpu_custom_call.1} parent=11 // pred_check
          %p509 = pneg %p266
        $region42: #{tpu_custom_call.1} parent=11 // pred_check_branch
          %511 = sbr.rel (%p509) target = $region44
        $region43: #{tpu_custom_call.1} parent=11 // pred_region
          _
        $region44: #{tpu_custom_call.1} parent=11 // pred_fallthru
          _
        // Predicated region
        $region45: #{tpu_custom_call.1} parent=11 // pred_check
          %p512 = pneg %p287
        $region46: #{tpu_custom_call.1} parent=11 // pred_check_branch
          %514 = sbr.rel (%p512) target = $region48
        $region47: #{tpu_custom_call.1} parent=11 // pred_region
          _
        $region48: #{tpu_custom_call.1} parent=11 // pred_fallthru
          _
        // Predicated region
        $region49: #{tpu_custom_call.1} parent=11 // pred_check
          %p515 = pneg %p308
        $region50: #{tpu_custom_call.1} parent=11 // pred_check_branch
          %517 = sbr.rel (%p515) target = $region52
        $region51: #{tpu_custom_call.1} parent=11 // pred_region
          _
        $region52: #{tpu_custom_call.1} parent=11 // pred_fallthru
          _
        // Predicated region
        $region53: #{tpu_custom_call.1} parent=11 // pred_check
          %p518 = pneg %p329
        $region54: #{tpu_custom_call.1} parent=11 // pred_check_branch
          %520 = sbr.rel (%p518) target = $region56
        $region55: #{tpu_custom_call.1} parent=11 // pred_region
          %522 = vsyncadd [#allocation11], 0
          %s523 = sshll.u32 %s12, 4
          %s524 = int_to_ptr.hbm [resolvable:$true] %s523
          %s525 = sshll.u32 [#allocation10], 4
          %s526 = int_to_ptr.vmem [resolvable:$true] %s525
          %531 = dma.hbm_to_vmem [thread:$0]  %s524, 256, %s526, [#allocation11], 64, 64, 4
        $region56: #{tpu_custom_call.1} parent=11 // pred_fallthru
          _
        // Predicated region
        $region57: #{tpu_custom_call.1} parent=11 // pred_check
          %p532 = pneg %p350
        $region58: #{tpu_custom_call.1} parent=11 // pred_check_branch
          %534 = sbr.rel (%p532) target = $region60
        $region59: #{tpu_custom_call.1} parent=11 // pred_region
          _
        $region60: #{tpu_custom_call.1} parent=11 // pred_fallthru
          _
        // Predicated region
        $region61: #{tpu_custom_call.1} parent=11 // pred_check
          %p535 = pneg %p371
        $region62: #{tpu_custom_call.1} parent=11 // pred_check_branch
          %537 = sbr.rel (%p535) target = $region64
        $region63: #{tpu_custom_call.1} parent=11 // pred_region
          _
        $region64: #{tpu_custom_call.1} parent=11 // pred_fallthru
          _
        // Predicated region
        $region65: #{tpu_custom_call.1} parent=11 // pred_check
          %p538 = pneg %p392
        $region66: #{tpu_custom_call.1} parent=11 // pred_check_branch
          %540 = sbr.rel (%p538) target = $region68
        $region67: #{tpu_custom_call.1} parent=11 // pred_region
          _
        $region68: #{tpu_custom_call.1} parent=11 // pred_fallthru
          _
        // Predicated region
        $region69: #{tpu_custom_call.1} parent=11 // pred_check
          %p541 = pneg %p413
        $region70: #{tpu_custom_call.1} parent=11 // pred_check_branch
          %543 = sbr.rel (%p541) target = $region72
        $region71: #{tpu_custom_call.1} parent=11 // pred_region
          _
        $region72: #{tpu_custom_call.1} parent=11 // pred_fallthru
          _
        // Predicated region
        $region73: #{tpu_custom_call.1} parent=11 // pred_check
          %p544 = pneg %p434
        $region74: #{tpu_custom_call.1} parent=11 // pred_check_branch
          %546 = sbr.rel (%p544) target = $region76
        $region75: #{tpu_custom_call.1} parent=11 // pred_region
          _
        $region76: #{tpu_custom_call.1} parent=11 // pred_fallthru
          _
      $region12: #{tpu_custom_call.1} parent=5 // pred_fallthru
        _
      %p547 = scmp.lt.s32.totalorder %s34, 2
      // Predicated region
      $region77: #{tpu_custom_call.1} parent=5 // pred_check
        %p548 = pneg %p547
      $region78: #{tpu_custom_call.1} parent=5 // pred_check_branch
        %550 = sbr.rel (%p548) target = $region80
      $region79: #{tpu_custom_call.1} parent=5 // pred_region
        // Predicated region
        $region81: #{tpu_custom_call.1} parent=79 // pred_check
          %p551 = pneg %p66
        $region82: #{tpu_custom_call.1} parent=79 // pred_check_branch
          %553 = sbr.rel (%p551) target = $region84
        $region83: #{tpu_custom_call.1} parent=79 // pred_region
          %s554 = sand.u32 %s56, 1
          %s555 = scalar_lea.sflag [#allocation5], %s554
          %s556 = sand.u32 %s56, 1
          %s557 = smul.addr %s556, 4
          %s558 = scalar_lea.vmem [#allocation4], %s557
          %560 = vsyncadd %s555, 0
          %s561 = smul.addr %s41, 4
          %s562 = scalar_lea.hbm %s0, %s561
          %s564 = sshll.u32 %s562, 4
          %s565 = int_to_ptr.hbm [resolvable:$true] %s564
          %s566 = sshll.u32 %s558, 4
          %s567 = int_to_ptr.vmem [resolvable:$true] %s566
          %569 = dma.hbm_to_vmem [thread:$0]  %s565, 64, %s567, %s555
        $region84: #{tpu_custom_call.1} parent=79 // pred_fallthru
          _
        // Predicated region
        $region85: #{tpu_custom_call.1} parent=79 // pred_check
          %p570 = pneg %p92
        $region86: #{tpu_custom_call.1} parent=79 // pred_check_branch
          %572 = sbr.rel (%p570) target = $region88
        $region87: #{tpu_custom_call.1} parent=79 // pred_region
          %s573 = sand.u32 %s34, 1
          %s574 = scalar_lea.sflag [#allocation8], %s573
          %s575 = sand.u32 %s82, 1
          %s576 = scalar_lea.vmem [#allocation7], %s575
          %578 = vsyncadd %s574, 0
          %s579 = scalar_lea.hbm %s1, %s41
          %s581 = sshll.u32 %s579, 4
          %s582 = int_to_ptr.hbm [resolvable:$true] %s581
          %s583 = sshll.u32 %s576, 4
          %s584 = int_to_ptr.vmem [resolvable:$true] %s583
          %586 = dma.hbm_to_vmem [thread:$0]  %s582, 16, %s584, %s574
        $region88: #{tpu_custom_call.1} parent=79 // pred_fallthru
          _
      $region80: #{tpu_custom_call.1} parent=5 // pred_fallthru
        _
      %p587 = scmp.le.s32.totalorder 1, %s34
      %p588 = scmp.lt.s32.totalorder %s34, 3
      %p589 = pnand %p587, %p588
      %p590 = pneg %p589
      // Predicated region
      $region89: #{tpu_custom_call.1} parent=5 // pred_check
        _
      $region90: #{tpu_custom_call.1} parent=5 // pred_check_branch
        %592 = sbr.rel (%p589) target = $region92
      $region91: #{tpu_custom_call.1} parent=5 // pred_region
        %s593 = ssub.s32 %s34, 1
        %s594 = sand.u32 %s59, 1
        %s595 = scalar_lea.sflag [#allocation5], %s594
        %s596 = sand.u32 %s59, 1
        %s597 = smul.addr %s596, 4
        %s598 = scalar_lea.vmem [#allocation4], %s597
        // Predicated region
        $region93: #{tpu_custom_call.1} parent=91 // pred_check
          %p599 = pneg %p72
        $region94: #{tpu_custom_call.1} parent=91 // pred_check_branch
          %601 = sbr.rel (%p599) target = $region96
        $region95: #{tpu_custom_call.1} parent=91 // pred_region
          %603 = dma.done %s595, 64
        $region96: #{tpu_custom_call.1} parent=91 // pred_fallthru
          _
        %s604 = sand.u32 %s39, 1
        %s605 = scalar_lea.sflag [#allocation8], %s604
        %s606 = sand.u32 %s85, 1
        %s607 = scalar_lea.vmem [#allocation7], %s606
        // Predicated region
        $region97: #{tpu_custom_call.1} parent=91 // pred_check
          %p608 = pneg %p98
        $region98: #{tpu_custom_call.1} parent=91 // pred_check_branch
          %610 = sbr.rel (%p608) target = $region100
        $region99: #{tpu_custom_call.1} parent=91 // pred_region
          %612 = dma.done %s605, 16
        $region100: #{tpu_custom_call.1} parent=91 // pred_fallthru
          _
        // Predicated region
        $region101: #{tpu_custom_call.1} parent=91 // pred_check
          %p613 = pneg %p245
        $region102: #{tpu_custom_call.1} parent=91 // pred_check_branch
          %615 = sbr.rel (%p613) target = $region104
        $region103: #{tpu_custom_call.1} parent=91 // pred_region
          %617 = dma.done [#allocation8], 256
        $region104: #{tpu_custom_call.1} parent=91 // pred_fallthru
          _
        // Predicated region
        $region105: #{tpu_custom_call.1} parent=91 // pred_check
          %p618 = pneg %p329
        $region106: #{tpu_custom_call.1} parent=91 // pred_check_branch
          %620 = sbr.rel (%p618) target = $region108
        $region107: #{tpu_custom_call.1} parent=91 // pred_region
          %622 = dma.done [#allocation11], 256
        $region108: #{tpu_custom_call.1} parent=91 // pred_fallthru
          _
        %s623 = sand.u32 %s59, 1
        %s624 = scalar_lea.sflag [#allocation5], %s623
        %s625 = sand.u32 %s59, 1
        %s626 = smul.addr %s625, 4
        %s627 = scalar_lea.vmem [#allocation4], %s626
        %p628 = pneg %p72
        %p629 = pneg %p69
        %s630 = sand.u32 %s39, 1
        %s631 = scalar_lea.sflag [#allocation8], %s630
        %s632 = sand.u32 %s85, 1
        %s633 = scalar_lea.vmem [#allocation7], %s632
        %p634 = pneg %p98
        %p635 = pneg %p95
        %p636 = pneg %p119
        %p637 = pneg %p116
        %p638 = pneg %p140
        %p639 = pneg %p137
        %p640 = pneg %p161
        %p641 = pneg %p158
        %p642 = pneg %p182
        %p643 = pneg %p179
        %p644 = pneg %p203
        %p645 = pneg %p200
        %p646 = pneg %p224
        %p647 = pneg %p221
        %p648 = pneg %p245
        %p649 = pneg %p242
        %p650 = pneg %p266
        %p651 = pneg %p263
        %p652 = pneg %p287
        %p653 = pneg %p284
        %p654 = pneg %p308
        %p655 = pneg %p305
        %p656 = pneg %p329
        %p657 = pneg %p326
        %p658 = pneg %p350
        %p659 = pneg %p347
        %p660 = pneg %p371
        %p661 = pneg %p368
        %p662 = pneg %p392
        %p663 = pneg %p389
        %p664 = pneg %p413
        %p665 = pneg %p410
        %p666 = pneg %p434
        %p667 = pneg %p431
        %p668 = pneg %p462
        %p669 = pneg %p459
        %s670 = sand.u32 %s449, 1
        %s671 = scalar_lea.sflag [#allocation6], %s670
        %s672 = sand.u32 %s449, 1
        %s673 = smul.addr %s672, 4
        %s674 = scalar_lea.vmem [#allocation12], %s673
        %p676 = scmp.eq.s32.totalorder %s44, 0
        // Predicated region
        $region109: #{tpu_custom_call.1} parent=91 // pred_check
          %p677 = pneg %p676
        $region110: #{tpu_custom_call.1} parent=91 // pred_check_branch
          %679 = sbr.rel (%p677) target = $region112
        $region111: #{tpu_custom_call.1} parent=91 // pred_region
          %v680 = vld [vmem:[%s598] sm:$0xf]
          %v681 = vld [vmem:[%s4] sm:$0xf]
          %v682 = vld [vmem:[%s4 + $0x4] sm:$0xf]
          %v683 = vld [vmem:[%s4 + $0x8] sm:$0xf]
          %v684 = vld [vmem:[%s4 + $0xc] sm:$0xf]
          %v685 = vld [vmem:[%s5] sm:$0x1]
          %v686 = vunpack.c.l.bf16 %v685
          %v687 = vperm.slane %v686, 0
          %v692 = vunpack.c.l.b16 %v681
          %v693 = vunpack.c.l.b16 %v682
          %v694 = vunpack.c.l.b16 %v683
          %v695 = vunpack.c.l.b16 %v684
          %v696 = vpack.c.b16 %v693, %v692
          %v697 = vpack.c.b16 %v695, %v694
          %vm700 = vcmask 261120
          %v702 = vsel %vm700, %v680, 0
          %704 = vmatpush.bf16.msra.mxu0 0
          %705 = vmatpush.bf16.msra.mxu0 0
          %706 = vmatpush.bf16.msra.mxu0 0
          %707 = vmatpush.bf16.msra.mxu0 0
          %708 = vmatpush.bf16.msra.mxu0 0
          %709 = vmatpush.bf16.msra.mxu0 0
          %710 = vmatpush.bf16.msra.mxu0 %v697
          %711 = vmatpush.bf16.msra.mxu0 %v696
          %712 = vmatmul.bf16.gmra.mxu0 %v702
          %v713 = vpop.f32.mrf.mxu0
          %v714 = vadd.f32 %v687, %v713
          %v715 = vpop.f32.mrf.mxu0
          %716 = vdwg.mxu0
          %v717 = vld [vmem:[%s6] sm:$0xf]
          %v718 = vld [vmem:[%s6 + $0x4] sm:$0xf]
          %v719 = vld [vmem:[%s6 + $0x8] sm:$0xf]
          %v720 = vld [vmem:[%s6 + $0xc] sm:$0xf]
          %v721 = vld [vmem:[%s7] sm:$0x1]
          %v722 = vunpack.c.l.bf16 %v721
          %v723 = vperm.slane %v722, 0
          %v728 = vunpack.c.l.b16 %v717
          %v729 = vunpack.c.l.b16 %v718
          %v730 = vunpack.c.l.b16 %v719
          %v731 = vunpack.c.l.b16 %v720
          %v732 = vpack.c.b16 %v729, %v728
          %v733 = vpack.c.b16 %v731, %v730
          %736 = vmatpush.bf16.msra.mxu0 0
          %737 = vmatpush.bf16.msra.mxu0 0
          %738 = vmatpush.bf16.msra.mxu0 0
          %739 = vmatpush.bf16.msra.mxu0 0
          %740 = vmatpush.bf16.msra.mxu0 0
          %741 = vmatpush.bf16.msra.mxu0 0
          %742 = vmatpush.bf16.msra.mxu0 %v733
          %743 = vmatpush.bf16.msra.mxu0 %v732
          %744 = vmatmul.bf16.gmra.mxu0 %v702
          %v745 = vpop.f32.mrf.mxu0
          %v746 = vadd.f32 %v723, %v745
          %v747 = vpop.f32.mrf.mxu0
          %748 = vdwg.mxu0
          %v749 = vpack.c.bf16 %v714, %v714
          %751 = vrot.lane.b32.xlu0 %v749, 120
          %v752 = vpop.permute.xlu0 %751
          %753 = vrot.lane.b32.xlu0 %v749, 112
          %v754 = vpop.permute.xlu0 %753
          %755 = vrot.lane.b32.xlu0 %v749, 104
          %v756 = vpop.permute.xlu0 %755
          %v759 = vpack.i.b16 %v752, %v749
          %v760 = vshrl.u32 %v749, 16
          %v761 = vshrl.u32 %v752, 16
          %v762 = vpack.i.b16 %v761, %v760
          %v765 = vpack.i.b16 %v756, %v754
          %v766 = vshrl.u32 %v754, 16
          %v767 = vshrl.u32 %v756, 16
          %v768 = vpack.i.b16 %v767, %v766
          %v771 = vunpack.c.l.s4 1983009808
          %v772 = vunpack.c.0.s8 %v771
          %v773 = vperm.slane %v759, %v772
          %v776 = vunpack.c.l.s4 1983009808
          %v777 = vunpack.c.0.s8 %v776
          %v778 = vperm.slane %v765, %v777
          %v779 = vrot.slane %v778, 4
          %vm780 = vcmask 1047556
          %v781 = vsel %vm780, %v779, %v773
          %v782 = vrot.slane %v773, 4
          %v783 = vsel %vm780, %v778, %v782
          %v785 = vunpack.c.l.s4 1934713408
          %v786 = vunpack.c.0.s8 %v785
          %v787 = vperm.slane %v781, %v786
          %v789 = vunpack.c.l.s4 1934713408
          %v790 = vunpack.c.0.s8 %v789
          %v791 = vperm.slane %v783, %v790
          %v792 = vrot.slane %v787, 4
          %v793 = vsel %vm780, 0, %v792
          %v794 = vrot.slane %v791, 4
          %v795 = vsel %vm780, 0, %v794
          %v798 = vunpack.c.l.s4 1983009808
          %v799 = vunpack.c.0.s8 %v798
          %v800 = vperm.slane %v762, %v799
          %v803 = vunpack.c.l.s4 1983009808
          %v804 = vunpack.c.0.s8 %v803
          %v805 = vperm.slane %v768, %v804
          %v806 = vrot.slane %v805, 4
          %v807 = vsel %vm780, %v806, %v800
          %v808 = vrot.slane %v800, 4
          %v809 = vsel %vm780, %v805, %v808
          %v811 = vunpack.c.l.s4 1934713408
          %v812 = vunpack.c.0.s8 %v811
          %v813 = vperm.slane %v807, %v812
          %v815 = vunpack.c.l.s4 1934713408
          %v816 = vunpack.c.0.s8 %v815
          %v817 = vperm.slane %v809, %v816
          %v818 = vrot.slane %v813, 4
          %v819 = vsel %vm780, 0, %v818
          %v820 = vrot.slane %v817, 4
          %v821 = vsel %vm780, 0, %v820
          %v822 = vsel %vm780, %v794, %v787
          %v824 = vunpack.c.l.s4 1983009808
          %v825 = vunpack.c.0.s8 %v824
          %v826 = vperm.slane %v822, %v825
          %v827 = vrot.slane %v795, 4
          %v828 = vsel %vm780, %v827, %v793
          %v830 = vunpack.c.l.s4 1983009808
          %v831 = vunpack.c.0.s8 %v830
          %v832 = vperm.slane %v828, %v831
          %v833 = vrot.slane %v832, 4
          %v834 = vsel %vm780, %v833, %v826
          %v836 = vunpack.c.l.s4 1934713408
          %v837 = vunpack.c.0.s8 %v836
          %v838 = vperm.slane %v834, %v837
          %v839 = vrot.slane %v838, 4
          %v840 = vsel %vm780, 0, %v839
          %v841 = vsel %vm780, %v820, %v813
          %v843 = vunpack.c.l.s4 1983009808
          %v844 = vunpack.c.0.s8 %v843
          %v845 = vperm.slane %v841, %v844
          %v846 = vrot.slane %v821, 4
          %v847 = vsel %vm780, %v846, %v819
          %v849 = vunpack.c.l.s4 1983009808
          %v850 = vunpack.c.0.s8 %v849
          %v851 = vperm.slane %v847, %v850
          %v852 = vrot.slane %v851, 4
          %v853 = vsel %vm780, %v852, %v845
          %v855 = vunpack.c.l.s4 1934713408
          %v856 = vunpack.c.0.s8 %v855
          %v857 = vperm.slane %v853, %v856
          %v858 = vrot.slane %v857, 4
          %v859 = vsel %vm780, 0, %v858
          %v862 = vpack.i.b16 %v857, %v838
          %v864 = vshrl.u32 %v838, 16
          %v865 = vshrl.u32 %v857, 16
          %v866 = vpack.i.b16 %v865, %v864
          %v870 = vpack.i.b16 %v859, %v840
          %v872 = vshrl.u32 %v840, 16
          %v873 = vshrl.u32 %v859, 16
          %v874 = vpack.i.b16 %v873, %v872
          %vm876 = vcmask 60416
          %877 = vst.msk [vmem:[#allocation2] sm:$0xf] %vm876, %v862
          %878 = vst.msk [vmem:[#allocation2 + $0x4] sm:$0xf] %vm876, %v866
          %879 = vst.msk [vmem:[#allocation2 + $0x8] sm:$0xf] %vm876, %v870
          %880 = vst.msk [vmem:[#allocation2 + $0xc] sm:$0xf] %vm876, %v874
          %v881 = vpack.c.bf16 %v746, %v746
          %883 = vrot.lane.b32.xlu0 %v881, 120
          %v884 = vpop.permute.xlu0 %883
          %885 = vrot.lane.b32.xlu0 %v881, 112
          %v886 = vpop.permute.xlu0 %885
          %887 = vrot.lane.b32.xlu0 %v881, 104
          %v888 = vpop.permute.xlu0 %887
          %v891 = vpack.i.b16 %v884, %v881
          %v892 = vshrl.u32 %v881, 16
          %v893 = vshrl.u32 %v884, 16
          %v894 = vpack.i.b16 %v893, %v892
          %v897 = vpack.i.b16 %v888, %v886
          %v898 = vshrl.u32 %v886, 16
          %v899 = vshrl.u32 %v888, 16
          %v900 = vpack.i.b16 %v899, %v898
          %v903 = vunpack.c.l.s4 1983009808
          %v904 = vunpack.c.0.s8 %v903
          %v905 = vperm.slane %v891, %v904
          %v908 = vunpack.c.l.s4 1983009808
          %v909 = vunpack.c.0.s8 %v908
          %v910 = vperm.slane %v897, %v909
          %v911 = vrot.slane %v910, 4
          %v912 = vsel %vm780, %v911, %v905
          %v913 = vrot.slane %v905, 4
          %v914 = vsel %vm780, %v910, %v913
          %v916 = vunpack.c.l.s4 1934713408
          %v917 = vunpack.c.0.s8 %v916
          %v918 = vperm.slane %v912, %v917
          %v920 = vunpack.c.l.s4 1934713408
          %v921 = vunpack.c.0.s8 %v920
          %v922 = vperm.slane %v914, %v921
          %v923 = vrot.slane %v918, 4
          %v924 = vsel %vm780, 0, %v923
          %v925 = vrot.slane %v922, 4
          %v926 = vsel %vm780, 0, %v925
          %v929 = vunpack.c.l.s4 1983009808
          %v930 = vunpack.c.0.s8 %v929
          %v931 = vperm.slane %v894, %v930
          %v934 = vunpack.c.l.s4 1983009808
          %v935 = vunpack.c.0.s8 %v934
          %v936 = vperm.slane %v900, %v935
          %v937 = vrot.slane %v936, 4
          %v938 = vsel %vm780, %v937, %v931
          %v939 = vrot.slane %v931, 4
          %v940 = vsel %vm780, %v936, %v939
          %v942 = vunpack.c.l.s4 1934713408
          %v943 = vunpack.c.0.s8 %v942
          %v944 = vperm.slane %v938, %v943
          %v946 = vunpack.c.l.s4 1934713408
          %v947 = vunpack.c.0.s8 %v946
          %v948 = vperm.slane %v940, %v947
          %v949 = vrot.slane %v944, 4
          %v950 = vsel %vm780, 0, %v949
          %v951 = vrot.slane %v948, 4
          %v952 = vsel %vm780, 0, %v951
          %v953 = vsel %vm780, %v925, %v918
          %v955 = vunpack.c.l.s4 1983009808
          %v956 = vunpack.c.0.s8 %v955
          %v957 = vperm.slane %v953, %v956
          %v958 = vrot.slane %v926, 4
          %v959 = vsel %vm780, %v958, %v924
          %v961 = vunpack.c.l.s4 1983009808
          %v962 = vunpack.c.0.s8 %v961
          %v963 = vperm.slane %v959, %v962
          %v964 = vrot.slane %v963, 4
          %v965 = vsel %vm780, %v964, %v957
          %v967 = vunpack.c.l.s4 1934713408
          %v968 = vunpack.c.0.s8 %v967
          %v969 = vperm.slane %v965, %v968
          %v970 = vrot.slane %v969, 4
          %v971 = vsel %vm780, 0, %v970
          %v972 = vsel %vm780, %v951, %v944
          %v974 = vunpack.c.l.s4 1983009808
          %v975 = vunpack.c.0.s8 %v974
          %v976 = vperm.slane %v972, %v975
          %v977 = vrot.slane %v952, 4
          %v978 = vsel %vm780, %v977, %v950
          %v980 = vunpack.c.l.s4 1983009808
          %v981 = vunpack.c.0.s8 %v980
          %v982 = vperm.slane %v978, %v981
          %v983 = vrot.slane %v982, 4
          %v984 = vsel %vm780, %v983, %v976
          %v986 = vunpack.c.l.s4 1934713408
          %v987 = vunpack.c.0.s8 %v986
          %v988 = vperm.slane %v984, %v987
          %v989 = vrot.slane %v988, 4
          %v990 = vsel %vm780, 0, %v989
          %v993 = vpack.i.b16 %v988, %v969
          %v995 = vshrl.u32 %v969, 16
          %v996 = vshrl.u32 %v988, 16
          %v997 = vpack.i.b16 %v996, %v995
          %v1001 = vpack.i.b16 %v990, %v971
          %v1003 = vshrl.u32 %v971, 16
          %v1004 = vshrl.u32 %v990, 16
          %v1005 = vpack.i.b16 %v1004, %v1003
          %1007 = vst.msk [vmem:[#allocation3] sm:$0xf] %vm876, %v993
          %1008 = vst.msk [vmem:[#allocation3 + $0x4] sm:$0xf] %vm876, %v997
          %1009 = vst.msk [vmem:[#allocation3 + $0x8] sm:$0xf] %vm876, %v1001
          %1010 = vst.msk [vmem:[#allocation3 + $0xc] sm:$0xf] %vm876, %v1005
        $region112: #{tpu_custom_call.1} parent=91 // pred_fallthru
          _
        %s1011 = smul.u32 %s44, 8
        %s1012 = sshra.s32 %s1011, 3
        %s1013 = sand.u32 %s1011, 7
        %s1014 = smul.addr %s1012, 4
        %s1015 = scalar_lea.vmem %s598, %s1014 [#allocation4]
        %v1016 = vld [vmem:[%s1015] sm:$0xf]
        %v1017 = vunpack.c.l.bf16 %v1016
        %v1018 = vld [vmem:[%s2] sm:$0xf]
        %v1019 = vld [vmem:[%s2 + $0x4] sm:$0xf]
        %v1020 = vld [vmem:[%s2 + $0x8] sm:$0xf]
        %v1021 = vld [vmem:[%s2 + $0xc] sm:$0xf]
        %v1022 = vld [vmem:[%s3] sm:$0x1]
        %v1023 = vunpack.c.l.bf16 %v1022
        %v1024 = vperm.slane %v1023, 0
        %v1029 = vunpack.c.l.b16 %v1018
        %v1030 = vunpack.c.l.b16 %v1019
        %v1031 = vunpack.c.l.b16 %v1020
        %v1032 = vunpack.c.l.b16 %v1021
        %v1033 = vpack.c.b16 %v1030, %v1029
        %v1034 = vpack.c.b16 %v1032, %v1031
        %vm1037 = vcmask 261120
        %v1039 = vsel %vm1037, %v1016, 0
        %1041 = vmatpush.bf16.msra.mxu0 0
        %1042 = vmatpush.bf16.msra.mxu0 0
        %1043 = vmatpush.bf16.msra.mxu0 0
        %1044 = vmatpush.bf16.msra.mxu0 0
        %1045 = vmatpush.bf16.msra.mxu0 0
        %1046 = vmatpush.bf16.msra.mxu0 0
        %1047 = vmatpush.bf16.msra.mxu0 %v1034
        %1048 = vmatpush.bf16.msra.mxu0 %v1033
        %1049 = vmatmul.bf16.gmra.mxu0 %v1039
        %v1050 = vpop.f32.mrf.mxu0
        %v1051 = vadd.f32 %v1024, %v1050
        %v1052 = vpop.f32.mrf.mxu0
        %1053 = vdwg.mxu0
        %v1054 = vmul.f32 %v1051, 0.35355338
        %v1055 = vpack.c.bf16 %v1054, %v1054
        %1057 = vrot.lane.b32.xlu0 %v1055, 120
        %v1058 = vpop.permute.xlu0 %1057
        %1059 = vrot.lane.b32.xlu0 %v1055, 112
        %v1060 = vpop.permute.xlu0 %1059
        %1061 = vrot.lane.b32.xlu0 %v1055, 104
        %v1062 = vpop.permute.xlu0 %1061
        %v1065 = vpack.i.b16 %v1058, %v1055
        %v1066 = vshrl.u32 %v1055, 16
        %v1067 = vshrl.u32 %v1058, 16
        %v1068 = vpack.i.b16 %v1067, %v1066
        %v1071 = vpack.i.b16 %v1062, %v1060
        %v1072 = vshrl.u32 %v1060, 16
        %v1073 = vshrl.u32 %v1062, 16
        %v1074 = vpack.i.b16 %v1073, %v1072
        %v1077 = vunpack.c.l.s4 1983009808
        %v1078 = vunpack.c.0.s8 %v1077
        %v1079 = vperm.slane %v1065, %v1078
        %v1082 = vunpack.c.l.s4 1983009808
        %v1083 = vunpack.c.0.s8 %v1082
        %v1084 = vperm.slane %v1071, %v1083
        %v1085 = vrot.slane %v1084, 4
        %vm1086 = vcmask 1047556
        %v1087 = vsel %vm1086, %v1085, %v1079
        %v1088 = vrot.slane %v1079, 4
        %v1089 = vsel %vm1086, %v1084, %v1088
        %v1091 = vunpack.c.l.s4 1934713408
        %v1092 = vunpack.c.0.s8 %v1091
        %v1093 = vperm.slane %v1087, %v1092
        %v1095 = vunpack.c.l.s4 1934713408
        %v1096 = vunpack.c.0.s8 %v1095
        %v1097 = vperm.slane %v1089, %v1096
        %v1098 = vrot.slane %v1093, 4
        %v1099 = vsel %vm1086, 0, %v1098
        %v1100 = vrot.slane %v1097, 4
        %v1101 = vsel %vm1086, 0, %v1100
        %v1104 = vunpack.c.l.s4 1983009808
        %v1105 = vunpack.c.0.s8 %v1104
        %v1106 = vperm.slane %v1068, %v1105
        %v1109 = vunpack.c.l.s4 1983009808
        %v1110 = vunpack.c.0.s8 %v1109
        %v1111 = vperm.slane %v1074, %v1110
        %v1112 = vrot.slane %v1111, 4
        %v1113 = vsel %vm1086, %v1112, %v1106
        %v1114 = vrot.slane %v1106, 4
        %v1115 = vsel %vm1086, %v1111, %v1114
        %v1117 = vunpack.c.l.s4 1934713408
        %v1118 = vunpack.c.0.s8 %v1117
        %v1119 = vperm.slane %v1113, %v1118
        %v1121 = vunpack.c.l.s4 1934713408
        %v1122 = vunpack.c.0.s8 %v1121
        %v1123 = vperm.slane %v1115, %v1122
        %v1124 = vrot.slane %v1119, 4
        %v1125 = vsel %vm1086, 0, %v1124
        %v1126 = vrot.slane %v1123, 4
        %v1127 = vsel %vm1086, 0, %v1126
        %v1128 = vsel %vm1086, %v1100, %v1093
        %v1130 = vunpack.c.l.s4 1983009808
        %v1131 = vunpack.c.0.s8 %v1130
        %v1132 = vperm.slane %v1128, %v1131
        %v1133 = vrot.slane %v1101, 4
        %v1134 = vsel %vm1086, %v1133, %v1099
        %v1136 = vunpack.c.l.s4 1983009808
        %v1137 = vunpack.c.0.s8 %v1136
        %v1138 = vperm.slane %v1134, %v1137
        %v1139 = vrot.slane %v1138, 4
        %v1140 = vsel %vm1086, %v1139, %v1132
        %v1142 = vunpack.c.l.s4 1934713408
        %v1143 = vunpack.c.0.s8 %v1142
        %v1144 = vperm.slane %v1140, %v1143
        %v1145 = vrot.slane %v1144, 4
        %v1146 = vsel %vm1086, 0, %v1145
        %v1147 = vsel %vm1086, %v1126, %v1119
        %v1149 = vunpack.c.l.s4 1983009808
        %v1150 = vunpack.c.0.s8 %v1149
        %v1151 = vperm.slane %v1147, %v1150
        %v1152 = vrot.slane %v1127, 4
        %v1153 = vsel %vm1086, %v1152, %v1125
        %v1155 = vunpack.c.l.s4 1983009808
        %v1156 = vunpack.c.0.s8 %v1155
        %v1157 = vperm.slane %v1153, %v1156
        %v1158 = vrot.slane %v1157, 4
        %v1159 = vsel %vm1086, %v1158, %v1151
        %v1161 = vunpack.c.l.s4 1934713408
        %v1162 = vunpack.c.0.s8 %v1161
        %v1163 = vperm.slane %v1159, %v1162
        %v1164 = vrot.slane %v1163, 4
        %v1165 = vsel %vm1086, 0, %v1164
        %v1168 = vpack.i.b16 %v1163, %v1144
        %v1169 = vshrl.u32 %v1144, 16
        %v1170 = vshrl.u32 %v1163, 16
        %v1171 = vpack.i.b16 %v1170, %v1169
        %v1174 = vpack.i.b16 %v1165, %v1146
        %v1175 = vshrl.u32 %v1146, 16
        %v1176 = vshrl.u32 %v1165, 16
        %v1177 = vpack.i.b16 %v1176, %v1175
        %v1178 = vld [vmem:[%s607] sm:$0x1]
        %v1179 = vld [vmem:[#allocation2] sm:$0xf]
        %v1180 = vld [vmem:[#allocation2 + $0x4] sm:$0xf]
        %v1181 = vld [vmem:[#allocation2 + $0x8] sm:$0xf]
        %v1182 = vld [vmem:[#allocation2 + $0xc] sm:$0xf]
        %v1184 = vperm.slane %v1178, 0
        %vm1186 = vcmask 64512
        %v1188 = vsel %vm1186, %v1168, 0
        %v1191 = vsel %vm1186, %v1179, 0
        %1193 = vmatpush.bf16.xpose.msra.mxu0 0
        %1194 = vmatpush.bf16.xpose.msra.mxu0 0
        %1195 = vmatpush.bf16.xpose.msra.mxu0 0
        %1196 = vmatpush.bf16.xpose.msra.mxu0 0
        %1197 = vmatpush.bf16.xpose.msra.mxu0 0
        %1198 = vmatpush.bf16.xpose.msra.mxu0 0
        %1199 = vmatpush.bf16.xpose.msra.mxu0 0
        %1200 = vmatpush.bf16.xpose.msra.mxu0 %v1191
        %1201 = vmatmul.bf16.gmra.mxu0 %v1188
        %v1202 = vpop.f32.mrf.mxu0
        %v1203 = vadd.f32 %v1184, %v1202
        %v1204 = vpop.f32.mrf.mxu0
        %1205 = vdwg.mxu0
        %v1207 = vsel %vm1186, %v1171, 0
        %v1210 = vsel %vm1186, %v1180, 0
        %1212 = vmatpush.bf16.xpose.msra.mxu0 0
        %1213 = vmatpush.bf16.xpose.msra.mxu0 0
        %1214 = vmatpush.bf16.xpose.msra.mxu0 0
        %1215 = vmatpush.bf16.xpose.msra.mxu0 0
        %1216 = vmatpush.bf16.xpose.msra.mxu0 0
        %1217 = vmatpush.bf16.xpose.msra.mxu0 0
        %1218 = vmatpush.bf16.xpose.msra.mxu0 0
        %1219 = vmatpush.bf16.xpose.msra.mxu0 %v1210
        %1220 = vmatmul.bf16.gmra.mxu0 %v1207
        %v1221 = vpop.f32.mrf.mxu0
        %v1222 = vadd.f32 %v1184, %v1221
        %v1223 = vpop.f32.mrf.mxu0
        %1224 = vdwg.mxu0
        %v1226 = vsel %vm1186, %v1174, 0
        %v1229 = vsel %vm1186, %v1181, 0
        %1231 = vmatpush.bf16.xpose.msra.mxu0 0
        %1232 = vmatpush.bf16.xpose.msra.mxu0 0
        %1233 = vmatpush.bf16.xpose.msra.mxu0 0
        %1234 = vmatpush.bf16.xpose.msra.mxu0 0
        %1235 = vmatpush.bf16.xpose.msra.mxu0 0
        %1236 = vmatpush.bf16.xpose.msra.mxu0 0
        %1237 = vmatpush.bf16.xpose.msra.mxu0 0
        %1238 = vmatpush.bf16.xpose.msra.mxu0 %v1229
        %1239 = vmatmul.bf16.gmra.mxu0 %v1226
        %v1240 = vpop.f32.mrf.mxu0
        %v1241 = vadd.f32 %v1184, %v1240
        %v1242 = vpop.f32.mrf.mxu0
        %1243 = vdwg.mxu0
        %v1245 = vsel %vm1186, %v1177, 0
        %v1248 = vsel %vm1186, %v1182, 0
        %1250 = vmatpush.bf16.xpose.msra.mxu0 0
        %1251 = vmatpush.bf16.xpose.msra.mxu0 0
        %1252 = vmatpush.bf16.xpose.msra.mxu0 0
        %1253 = vmatpush.bf16.xpose.msra.mxu0 0
        %1254 = vmatpush.bf16.xpose.msra.mxu0 0
        %1255 = vmatpush.bf16.xpose.msra.mxu0 0
        %1256 = vmatpush.bf16.xpose.msra.mxu0 0
        %1257 = vmatpush.bf16.xpose.msra.mxu0 %v1248
        %1258 = vmatmul.bf16.gmra.mxu0 %v1245
        %v1259 = vpop.f32.mrf.mxu0
        %v1260 = vadd.f32 %v1184, %v1259
        %v1261 = vpop.f32.mrf.mxu0
        %1262 = vdwg.mxu0
        %v1263 = vsel %vm1186, %v1203, -inf
        %1264 = vmax.xlane.f32.xlu0 %v1263
        %v1265 = vpop.xlane.xlu0 %1264
        %v1266 = vsel %vm1186, %v1222, -inf
        %1267 = vmax.xlane.f32.xlu0 %v1266
        %v1268 = vpop.xlane.xlu0 %1267
        %v1269 = vsel %vm1186, %v1241, -inf
        %1270 = vmax.xlane.f32.xlu0 %v1269
        %v1271 = vpop.xlane.xlu0 %1270
        %v1272 = vsel %vm1186, %v1260, -inf
        %1273 = vmax.xlane.f32.xlu0 %v1272
        %v1274 = vpop.xlane.xlu0 %1273
        %v1275 = vsub.f32 %v1203, %v1265
        %v1276 = vsub.f32 %v1222, %v1268
        %v1277 = vsub.f32 %v1241, %v1271
        %v1278 = vsub.f32 %v1260, %v1274
        %v1279 = vmul.f32 %v1275, 1.442695
        %v1280 = vpow.pop %v1279
        %v1281 = vmul.f32 %v1276, 1.442695
        %v1282 = vpow.pop %v1281
        %v1283 = vmul.f32 %v1277, 1.442695
        %v1284 = vpow.pop %v1283
        %v1285 = vmul.f32 %v1278, 1.442695
        %v1286 = vpow.pop %v1285
        %v1287 = vsel %vm1186, %v1280, 0.0
        %1288 = vadd.xlane.f32.xlu0 %v1287
        %v1289 = vpop.xlane.xlu0 %1288
        %v1290 = vsel %vm1186, %v1282, 0.0
        %1291 = vadd.xlane.f32.xlu0 %v1290
        %v1292 = vpop.xlane.xlu0 %1291
        %v1293 = vsel %vm1186, %v1284, 0.0
        %1294 = vadd.xlane.f32.xlu0 %v1293
        %v1295 = vpop.xlane.xlu0 %1294
        %v1296 = vsel %vm1186, %v1286, 0.0
        %1297 = vadd.xlane.f32.xlu0 %v1296
        %v1298 = vpop.xlane.xlu0 %1297
        %v1299 = vrcp.pop %v1289
        %v1300 = vmul.f32 %v1289, %v1299
        %v1301 = vsub.f32 1.0, %v1300
        %v1302 = vmul.f32 %v1299, %v1301
        %v1303 = vadd.f32 %v1299, %v1302
        %vm1304 = vweird.f32 %v1289
        %vm1305 = vweird.f32 %v1299
        %vm1306 = vmor %vm1304, %vm1305
        %v1307 = vsel %vm1306, %v1299, %v1303
        %v1308 = vand.u32 2147483647, %v1289
        %vm1309 = vcmp.eq.f32.partialorder %v1308, 8.507059e+37
        %v1310 = vand.u32 %v1289, 2147483648
        %v1311 = vor.u32 1.1754944e-38, %v1310
        %v1312 = vsel %vm1309, %v1311, %v1307
        %v1313 = vrcp.pop %v1292
        %v1314 = vmul.f32 %v1292, %v1313
        %v1315 = vsub.f32 1.0, %v1314
        %v1316 = vmul.f32 %v1313, %v1315
        %v1317 = vadd.f32 %v1313, %v1316
        %vm1318 = vweird.f32 %v1292
        %vm1319 = vweird.f32 %v1313
        %vm1320 = vmor %vm1318, %vm1319
        %v1321 = vsel %vm1320, %v1313, %v1317
        %v1322 = vand.u32 2147483647, %v1292
        %vm1323 = vcmp.eq.f32.partialorder %v1322, 8.507059e+37
        %v1324 = vand.u32 %v1292, 2147483648
        %v1325 = vor.u32 1.1754944e-38, %v1324
        %v1326 = vsel %vm1323, %v1325, %v1321
        %v1327 = vrcp.pop %v1295
        %v1328 = vmul.f32 %v1295, %v1327
        %v1329 = vsub.f32 1.0, %v1328
        %v1330 = vmul.f32 %v1327, %v1329
        %v1331 = vadd.f32 %v1327, %v1330
        %vm1332 = vweird.f32 %v1295
        %vm1333 = vweird.f32 %v1327
        %vm1334 = vmor %vm1332, %vm1333
        %v1335 = vsel %vm1334, %v1327, %v1331
        %v1336 = vand.u32 2147483647, %v1295
        %vm1337 = vcmp.eq.f32.partialorder %v1336, 8.507059e+37
        %v1338 = vand.u32 %v1295, 2147483648
        %v1339 = vor.u32 1.1754944e-38, %v1338
        %v1340 = vsel %vm1337, %v1339, %v1335
        %v1341 = vrcp.pop %v1298
        %v1342 = vmul.f32 %v1298, %v1341
        %v1343 = vsub.f32 1.0, %v1342
        %v1344 = vmul.f32 %v1341, %v1343
        %v1345 = vadd.f32 %v1341, %v1344
        %vm1346 = vweird.f32 %v1298
        %vm1347 = vweird.f32 %v1341
        %vm1348 = vmor %vm1346, %vm1347
        %v1349 = vsel %vm1348, %v1341, %v1345
        %v1350 = vand.u32 2147483647, %v1298
        %vm1351 = vcmp.eq.f32.partialorder %v1350, 8.507059e+37
        %v1352 = vand.u32 %v1298, 2147483648
        %v1353 = vor.u32 1.1754944e-38, %v1352
        %v1354 = vsel %vm1351, %v1353, %v1349
        %v1355 = vmul.f32 %v1280, %v1312
        %v1356 = vmul.f32 %v1282, %v1326
        %v1357 = vmul.f32 %v1284, %v1340
        %v1358 = vmul.f32 %v1286, %v1354
        %v1359 = vpack.c.bf16 %v1355, %v1355
        %v1360 = vpack.c.bf16 %v1356, %v1356
        %v1361 = vpack.c.bf16 %v1357, %v1357
        %v1362 = vpack.c.bf16 %v1358, %v1358
        %v1363 = vld [vmem:[#allocation3] sm:$0xf]
        %v1364 = vld [vmem:[#allocation3 + $0x4] sm:$0xf]
        %v1365 = vld [vmem:[#allocation3 + $0x8] sm:$0xf]
        %v1366 = vld [vmem:[#allocation3 + $0xc] sm:$0xf]
        %v1368 = vsel %vm1186, %v1359, 0
        %vm1370 = vcmask 1043456
        %v1372 = vsel %vm1370, %v1363, 0
        %1374 = vmatpush.bf16.msra.mxu0 0
        %1375 = vmatpush.bf16.msra.mxu0 0
        %1376 = vmatpush.bf16.msra.mxu0 0
        %1377 = vmatpush.bf16.msra.mxu0 0
        %1378 = vmatpush.bf16.msra.mxu0 0
        %1379 = vmatpush.bf16.msra.mxu0 0
        %1380 = vmatpush.bf16.msra.mxu0 0
        %1381 = vmatpush.bf16.msra.mxu0 %v1372
        %1382 = vmatmul.bf16.gmra.mxu0 %v1368
        %v1383 = vpop.f32.mrf.mxu0
        %v1384 = vadd.f32 0.0, %v1383
        %v1385 = vpop.f32.mrf.mxu0
        %1386 = vdwg.mxu0
        %v1388 = vsel %vm1186, %v1360, 0
        %v1391 = vsel %vm1370, %v1364, 0
        %1393 = vmatpush.bf16.msra.mxu0 0
        %1394 = vmatpush.bf16.msra.mxu0 0
        %1395 = vmatpush.bf16.msra.mxu0 0
        %1396 = vmatpush.bf16.msra.mxu0 0
        %1397 = vmatpush.bf16.msra.mxu0 0
        %1398 = vmatpush.bf16.msra.mxu0 0
        %1399 = vmatpush.bf16.msra.mxu0 0
        %1400 = vmatpush.bf16.msra.mxu0 %v1391
        %1401 = vmatmul.bf16.gmra.mxu0 %v1388
        %v1402 = vpop.f32.mrf.mxu0
        %v1403 = vadd.f32 0.0, %v1402
        %v1404 = vpop.f32.mrf.mxu0
        %1405 = vdwg.mxu0
        %v1407 = vsel %vm1186, %v1361, 0
        %v1410 = vsel %vm1370, %v1365, 0
        %1412 = vmatpush.bf16.msra.mxu0 0
        %1413 = vmatpush.bf16.msra.mxu0 0
        %1414 = vmatpush.bf16.msra.mxu0 0
        %1415 = vmatpush.bf16.msra.mxu0 0
        %1416 = vmatpush.bf16.msra.mxu0 0
        %1417 = vmatpush.bf16.msra.mxu0 0
        %1418 = vmatpush.bf16.msra.mxu0 0
        %1419 = vmatpush.bf16.msra.mxu0 %v1410
        %1420 = vmatmul.bf16.gmra.mxu0 %v1407
        %v1421 = vpop.f32.mrf.mxu0
        %v1422 = vadd.f32 0.0, %v1421
        %v1423 = vpop.f32.mrf.mxu0
        %1424 = vdwg.mxu0
        %v1426 = vsel %vm1186, %v1362, 0
        %v1429 = vsel %vm1370, %v1366, 0
        %1431 = vmatpush.bf16.msra.mxu0 0
        %1432 = vmatpush.bf16.msra.mxu0 0
        %1433 = vmatpush.bf16.msra.mxu0 0
        %1434 = vmatpush.bf16.msra.mxu0 0
        %1435 = vmatpush.bf16.msra.mxu0 0
        %1436 = vmatpush.bf16.msra.mxu0 0
        %1437 = vmatpush.bf16.msra.mxu0 0
        %1438 = vmatpush.bf16.msra.mxu0 %v1429
        %1439 = vmatmul.bf16.gmra.mxu0 %v1426
        %v1440 = vpop.f32.mrf.mxu0
        %v1441 = vadd.f32 0.0, %v1440
        %v1442 = vpop.f32.mrf.mxu0
        %1443 = vdwg.mxu0
        %v1444 = vpack.c.bf16 %v1384, %v1384
        %v1445 = vpack.c.bf16 %v1403, %v1403
        %v1446 = vpack.c.bf16 %v1422, %v1422
        %v1447 = vpack.c.bf16 %v1441, %v1441
        %v1450 = vpack.i.b16 %v1445, %v1444
        %v1451 = vshrl.u32 %v1444, 16
        %v1452 = vshrl.u32 %v1445, 16
        %v1453 = vpack.i.b16 %v1452, %v1451
        %v1456 = vpack.i.b16 %v1447, %v1446
        %v1457 = vshrl.u32 %v1446, 16
        %v1458 = vshrl.u32 %v1447, 16
        %v1459 = vpack.i.b16 %v1458, %v1457
        %v1462 = vunpack.c.l.s4 1983009808
        %v1463 = vunpack.c.0.s8 %v1462
        %v1464 = vperm.slane %v1450, %v1463
        %v1467 = vunpack.c.l.s4 1983009808
        %v1468 = vunpack.c.0.s8 %v1467
        %v1469 = vperm.slane %v1456, %v1468
        %v1470 = vrot.slane %v1469, 4
        %v1471 = vsel %vm1086, %v1470, %v1464
        %v1472 = vrot.slane %v1464, 4
        %v1473 = vsel %vm1086, %v1469, %v1472
        %v1475 = vunpack.c.l.s4 1934713408
        %v1476 = vunpack.c.0.s8 %v1475
        %v1477 = vperm.slane %v1471, %v1476
        %v1479 = vunpack.c.l.s4 1934713408
        %v1480 = vunpack.c.0.s8 %v1479
        %v1481 = vperm.slane %v1473, %v1480
        %v1482 = vrot.slane %v1477, 4
        %v1483 = vsel %vm1086, 0, %v1482
        %v1484 = vrot.slane %v1481, 4
        %v1485 = vsel %vm1086, 0, %v1484
        %v1488 = vunpack.c.l.s4 1983009808
        %v1489 = vunpack.c.0.s8 %v1488
        %v1490 = vperm.slane %v1453, %v1489
        %v1493 = vunpack.c.l.s4 1983009808
        %v1494 = vunpack.c.0.s8 %v1493
        %v1495 = vperm.slane %v1459, %v1494
        %v1496 = vrot.slane %v1495, 4
        %v1497 = vsel %vm1086, %v1496, %v1490
        %v1498 = vrot.slane %v1490, 4
        %v1499 = vsel %vm1086, %v1495, %v1498
        %v1501 = vunpack.c.l.s4 1934713408
        %v1502 = vunpack.c.0.s8 %v1501
        %v1503 = vperm.slane %v1497, %v1502
        %v1505 = vunpack.c.l.s4 1934713408
        %v1506 = vunpack.c.0.s8 %v1505
        %v1507 = vperm.slane %v1499, %v1506
        %v1508 = vrot.slane %v1503, 4
        %v1509 = vsel %vm1086, 0, %v1508
        %v1510 = vrot.slane %v1507, 4
        %v1511 = vsel %vm1086, 0, %v1510
        %v1512 = vsel %vm1086, %v1484, %v1477
        %v1514 = vunpack.c.l.s4 1983009808
        %v1515 = vunpack.c.0.s8 %v1514
        %v1516 = vperm.slane %v1512, %v1515
        %v1517 = vrot.slane %v1485, 4
        %v1518 = vsel %vm1086, %v1517, %v1483
        %v1520 = vunpack.c.l.s4 1983009808
        %v1521 = vunpack.c.0.s8 %v1520
        %v1522 = vperm.slane %v1518, %v1521
        %v1523 = vrot.slane %v1522, 4
        %v1524 = vsel %vm1086, %v1523, %v1516
        %v1526 = vunpack.c.l.s4 1934713408
        %v1527 = vunpack.c.0.s8 %v1526
        %v1528 = vperm.slane %v1524, %v1527
        %v1529 = vrot.slane %v1528, 4
        %v1530 = vsel %vm1086, 0, %v1529
        %v1531 = vsel %vm1086, %v1510, %v1503
        %v1533 = vunpack.c.l.s4 1983009808
        %v1534 = vunpack.c.0.s8 %v1533
        %v1535 = vperm.slane %v1531, %v1534
        %v1536 = vrot.slane %v1511, 4
        %v1537 = vsel %vm1086, %v1536, %v1509
        %v1539 = vunpack.c.l.s4 1983009808
        %v1540 = vunpack.c.0.s8 %v1539
        %v1541 = vperm.slane %v1537, %v1540
        %v1542 = vrot.slane %v1541, 4
        %v1543 = vsel %vm1086, %v1542, %v1535
        %v1545 = vunpack.c.l.s4 1934713408
        %v1546 = vunpack.c.0.s8 %v1545
        %v1547 = vperm.slane %v1543, %v1546
        %v1548 = vrot.slane %v1547, 4
        %v1549 = vsel %vm1086, 0, %v1548
        %v1552 = vpack.i.b16 %v1547, %v1528
        %v1553 = vshrl.u32 %v1528, 16
        %v1554 = vshrl.u32 %v1547, 16
        %v1555 = vpack.i.b16 %v1554, %v1553
        %v1558 = vpack.i.b16 %v1549, %v1530
        %v1559 = vshrl.u32 %v1530, 16
        %v1560 = vshrl.u32 %v1549, 16
        %v1561 = vpack.i.b16 %v1560, %v1559
        %v1562 = vunpack.c.l.b16 %v1555
        %v1563 = vpack.c.b16 %v1562, %v1562
        %1564 = vrot.lane.b32.xlu0 %v1563, 8
        %v1565 = vpop.permute.xlu0 %1564
        %v1566 = vunpack.c.l.b16 %v1558
        %v1567 = vpack.c.b16 %v1566, %v1566
        %1568 = vrot.lane.b32.xlu0 %v1567, 16
        %v1569 = vpop.permute.xlu0 %1568
        %v1570 = vunpack.c.l.b16 %v1561
        %v1571 = vpack.c.b16 %v1570, %v1570
        %1572 = vrot.lane.b32.xlu0 %v1571, 24
        %v1573 = vpop.permute.xlu0 %1572
        %v1576 = vsel %vm1186, %v1552, %v1565
        %vm1577 = vcmask 130048
        %v1579 = vsel %vm1577, %v1576, %v1569
        %vm1580 = vcmask 195584
        %v1582 = vsel %vm1580, %v1579, %v1573
        %v1583 = vld [vmem:[#allocation9] sm:$0xf]
        %v1584 = vld [vmem:[#allocation9 + $0x4] sm:$0xf]
        %v1585 = vld [vmem:[#allocation9 + $0x8] sm:$0xf]
        %v1586 = vld [vmem:[#allocation9 + $0xc] sm:$0xf]
        %v1587 = vld [vmem:[%s9] sm:$0x1]
        %v1588 = vunpack.c.l.bf16 %v1587
        %v1589 = vperm.slane %v1588, 0
        %v1594 = vunpack.c.l.b16 %v1583
        %v1595 = vunpack.c.l.b16 %v1584
        %v1596 = vunpack.c.l.b16 %v1585
        %v1597 = vunpack.c.l.b16 %v1586
        %v1598 = vpack.c.b16 %v1595, %v1594
        %v1599 = vpack.c.b16 %v1597, %v1596
        %v1602 = vsel %vm1037, %v1582, 0
        %1604 = vmatpush.bf16.msra.mxu0 0
        %1605 = vmatpush.bf16.msra.mxu0 0
        %1606 = vmatpush.bf16.msra.mxu0 0
        %1607 = vmatpush.bf16.msra.mxu0 0
        %1608 = vmatpush.bf16.msra.mxu0 0
        %1609 = vmatpush.bf16.msra.mxu0 0
        %1610 = vmatpush.bf16.msra.mxu0 %v1599
        %1611 = vmatpush.bf16.msra.mxu0 %v1598
        %1612 = vmatmul.bf16.gmra.mxu0 %v1602
        %v1613 = vpop.f32.mrf.mxu0
        %v1614 = vadd.f32 %v1589, %v1613
        %v1615 = vpop.f32.mrf.mxu0
        %1616 = vdwg.mxu0
        %v1617 = vadd.f32 %v1614, %v1017
        %v1618 = vld [vmem:[%s10] sm:$0x1]
        %v1619 = vld [vmem:[%s11] sm:$0x1]
        %v1620 = vsel %vm1037, %v1617, 0.0
        %1621 = vadd.xlane.f32.xlu0 %v1620
        %v1622 = vpop.xlane.xlu0 %1621
        %v1623 = vrcp.pop 32.0
        %v1624 = vmul.f32 32.0, %v1623
        %v1625 = vsub.f32 1.0, %v1624
        %v1626 = vmul.f32 %v1623, %v1625
        %v1627 = vadd.f32 %v1623, %v1626
        %vm1628 = vweird.f32 %v1623
        %v1629 = vsel %vm1628, %v1623, %v1627
        %v1630 = vmul.f32 %v1622, %v1629
        %v1631 = vsub.f32 %v1617, %v1630
        %v1632 = vmul.f32 %v1631, %v1631
        %v1633 = vsel %vm1037, %v1632, 0.0
        %1634 = vadd.xlane.f32.xlu0 %v1633
        %v1635 = vpop.xlane.xlu0 %1634
        %v1636 = vmul.f32 %v1635, %v1629
        %v1637 = vadd.f32 %v1636, 1e-12
        %v1638 = vrsqrt.pop %v1637
        %v1639 = vmul.f32 %v1638, %v1637
        %v1640 = vmul.f32 %v1639, %v1638
        %v1641 = vmul.f32 0.5, %v1640
        %v1642 = vsub.f32 1.5, %v1641
        %v1643 = vmul.f32 %v1638, %v1642
        %vm1644 = vweird.f32 %v1637
        %vm1645 = vweird.f32 %v1638
        %vm1646 = vmor %vm1644, %vm1645
        %v1647 = vsel %vm1646, %v1638, %v1643
        %v1648 = vmul.f32 %v1631, %v1647
        %v1650 = vperm.slane %v1618, 0
        %v1652 = vmul.f32 %v1648, %v1650
        %v1654 = vperm.slane %v1619, 0
        %v1656 = vadd.f32 %v1652, %v1654
        %v1657 = vpack.c.bf16 %v1656, %v1656
        %v1658 = vld [vmem:[#allocation10] sm:$0xf]
        %v1659 = vld [vmem:[#allocation10 + $0x4] sm:$0xf]
        %v1660 = vld [vmem:[#allocation10 + $0x8] sm:$0xf]
        %v1661 = vld [vmem:[#allocation10 + $0xc] sm:$0xf]
        %v1662 = vld [vmem:[%s13] sm:$0x1]
        %v1663 = vunpack.c.l.bf16 %v1662
        %v1664 = vperm.slane %v1663, 0
        %v1669 = vunpack.c.l.b16 %v1658
        %v1670 = vunpack.c.l.b16 %v1659
        %v1671 = vunpack.c.l.b16 %v1660
        %v1672 = vunpack.c.l.b16 %v1661
        %v1673 = vpack.c.b16 %v1670, %v1669
        %v1674 = vpack.c.b16 %v1672, %v1671
        %v1678 = vsel %vm1037, %v1657, 0
        %1680 = vmatpush.bf16.msra.mxu0 0
        %1681 = vmatpush.bf16.msra.mxu0 0
        %1682 = vmatpush.bf16.msra.mxu0 0
        %1683 = vmatpush.bf16.msra.mxu0 0
        %1684 = vmatpush.bf16.msra.mxu0 0
        %1685 = vmatpush.bf16.msra.mxu0 0
        %1686 = vmatpush.bf16.msra.mxu0 %v1674
        %1687 = vmatpush.bf16.msra.mxu0 %v1673
        %1688 = vmatmul.bf16.gmra.mxu0 %v1678
        %v1689 = vpop.f32.mrf.mxu0
        %v1690 = vadd.f32 %v1664, %v1689
        %v1691 = vpop.f32.mrf.mxu0
        %1692 = vdwg.mxu0
        %v1693 = vmul.f32 %v1690, 0.5
        %v1694 = vmul.f32 %v1690, 0.70710677
        %v1695 = vmul.f32 %v1694, %v1694
        %v1696 = vmin.f32 16.0, %v1695
        %v1697 = vmul.f32 %v1696, 2.1237322e-06
        %v1698 = vadd.f32 %v1697, 0.00028619796
        %v1699 = vmul.f32 %v1696, %v1698
        %v1700 = vadd.f32 %v1699, 0.0036580483
        %v1701 = vmul.f32 %v1696, %v1700
        %v1702 = vadd.f32 %v1701, 0.05243302
        %v1703 = vmul.f32 %v1696, %v1702
        %v1704 = vadd.f32 %v1703, 0.18741608
        %v1705 = vmul.f32 %v1696, %v1704
        %v1706 = vadd.f32 %v1705, 1.1283791
        %v1707 = vmul.f32 %v1694, %v1706
        %v1708 = vmul.f32 %v1696, 3.8918573e-05
        %v1709 = vadd.f32 %v1708, 0.001143296
        %v1710 = vmul.f32 %v1696, %v1709
        %v1711 = vadd.f32 %v1710, 0.014752088
        %v1712 = vmul.f32 %v1696, %v1711
        %v1713 = vadd.f32 %v1712, 0.112945676
        %v1714 = vmul.f32 %v1696, %v1713
        %v1715 = vadd.f32 %v1714, 0.4994258
        %v1716 = vmul.f32 %v1696, %v1715
        %v1717 = vadd.f32 %v1716, 1.0
        %v1718 = vrcp.pop %v1717
        %v1719 = vmul.f32 %v1717, %v1718
        %v1720 = vsub.f32 1.0, %v1719
        %v1721 = vmul.f32 %v1718, %v1720
        %v1722 = vadd.f32 %v1718, %v1721
        %vm1723 = vweird.f32 %v1717
        %vm1724 = vweird.f32 %v1718
        %vm1725 = vmor %vm1723, %vm1724
        %v1726 = vsel %vm1725, %v1718, %v1722
        %v1727 = vand.u32 2147483647, %v1717
        %vm1728 = vcmp.eq.f32.partialorder %v1727, 8.507059e+37
        %v1729 = vand.u32 %v1717, 2147483648
        %v1730 = vor.u32 1.1754944e-38, %v1729
        %v1731 = vsel %vm1728, %v1730, %v1726
        %v1732 = vmul.f32 %v1707, %v1731
        %v1733 = vmin.f32 %v1732, 1.0
        %v1734 = vmax.f32 %v1733, -1.0
        %v1735 = vadd.f32 %v1734, 1.0
        %v1736 = vmul.f32 %v1693, %v1735
        %v1737 = vpack.c.bf16 %v1736, %v1736
        %v1738 = vld [vmem:[%s14] sm:$0xf]
        %v1739 = vld [vmem:[%s14 + $0x4] sm:$0xf]
        %v1740 = vld [vmem:[%s14 + $0x8] sm:$0xf]
        %v1741 = vld [vmem:[%s14 + $0xc] sm:$0xf]
        %v1742 = vld [vmem:[%s14 + $0x10] sm:$0xf]
        %v1743 = vld [vmem:[%s14 + $0x14] sm:$0xf]
        %v1744 = vld [vmem:[%s14 + $0x18] sm:$0xf]
        %v1745 = vld [vmem:[%s14 + $0x1c] sm:$0xf]
        %v1746 = vld [vmem:[%s15] sm:$0x1]
        %v1747 = vunpack.c.l.bf16 %v1746
        %v1748 = vperm.slane %v1747, 0
        %v1757 = vunpack.c.l.b16 %v1738
        %v1758 = vunpack.c.l.b16 %v1739
        %v1759 = vunpack.c.l.b16 %v1740
        %v1760 = vunpack.c.l.b16 %v1741
        %v1761 = vunpack.c.l.b16 %v1742
        %v1762 = vunpack.c.l.b16 %v1743
        %v1763 = vunpack.c.l.b16 %v1744
        %v1764 = vunpack.c.l.b16 %v1745
        %v1765 = vpack.c.b16 %v1758, %v1757
        %v1766 = vpack.c.b16 %v1760, %v1759
        %v1767 = vpack.c.b16 %v1762, %v1761
        %v1768 = vpack.c.b16 %v1764, %v1763
        %vm1773 = vcmask 523264
        %v1775 = vsel %vm1773, %v1737, 0
        %1777 = vmatpush.bf16.msra.mxu0 0
        %1778 = vmatpush.bf16.msra.mxu0 0
        %1779 = vmatpush.bf16.msra.mxu0 0
        %1780 = vmatpush.bf16.msra.mxu0 0
        %1781 = vmatpush.bf16.msra.mxu0 %v1768
        %1782 = vmatpush.bf16.msra.mxu0 %v1767
        %1783 = vmatpush.bf16.msra.mxu0 %v1766
        %1784 = vmatpush.bf16.msra.mxu0 %v1765
        %1785 = vmatmul.bf16.gmra.mxu0 %v1775
        %v1786 = vpop.f32.mrf.mxu0
        %v1787 = vadd.f32 %v1748, %v1786
        %v1788 = vpop.f32.mrf.mxu0
        %1789 = vdwg.mxu0
        %v1790 = vadd.f32 %v1787, %v1656
        %v1791 = vld [vmem:[%s16] sm:$0x1]
        %v1792 = vld [vmem:[%s17] sm:$0x1]
        %v1793 = vsel %vm1037, %v1790, 0.0
        %1794 = vadd.xlane.f32.xlu0 %v1793
        %v1795 = vpop.xlane.xlu0 %1794
        %v1796 = vmul.f32 %v1795, %v1629
        %v1797 = vsub.f32 %v1790, %v1796
        %v1798 = vmul.f32 %v1797, %v1797
        %v1799 = vsel %vm1037, %v1798, 0.0
        %1800 = vadd.xlane.f32.xlu0 %v1799
        %v1801 = vpop.xlane.xlu0 %1800
        %v1802 = vmul.f32 %v1801, %v1629
        %v1803 = vadd.f32 %v1802, 1e-12
        %v1804 = vrsqrt.pop %v1803
        %v1805 = vmul.f32 %v1804, %v1803
        %v1806 = vmul.f32 %v1805, %v1804
        %v1807 = vmul.f32 0.5, %v1806
        %v1808 = vsub.f32 1.5, %v1807
        %v1809 = vmul.f32 %v1804, %v1808
        %vm1810 = vweird.f32 %v1803
        %vm1811 = vweird.f32 %v1804
        %vm1812 = vmor %vm1810, %vm1811
        %v1813 = vsel %vm1812, %v1804, %v1809
        %v1814 = vmul.f32 %v1797, %v1813
        %v1816 = vperm.slane %v1791, 0
        %v1818 = vmul.f32 %v1814, %v1816
        %v1820 = vperm.slane %v1792, 0
        %v1822 = vadd.f32 %v1818, %v1820
        %v1823 = vpack.c.bf16 %v1822, %v1822
        %vm1824 = vcmask 257024
        %1825 = vst.msk [vmem:[%s674] sm:$0xf] %vm1824, %v1823
        %s1826 = sand.u32 %s449, 1
        %s1827 = scalar_lea.sflag [#allocation6], %s1826
        %s1828 = sand.u32 %s449, 1
        %s1829 = smul.addr %s1828, 4
        %s1830 = scalar_lea.vmem [#allocation12], %s1829
        // Predicated region
        $region113: #{tpu_custom_call.1} parent=91 // pred_check
          %p1831 = pneg %p459
        $region114: #{tpu_custom_call.1} parent=91 // pred_check_branch
          %1833 = sbr.rel (%p1831) target = $region116
        $region115: #{tpu_custom_call.1} parent=91 // pred_region
          %1835 = vsyncadd %s1827, 0
          %s1836 = sadd.s32 %s44, %s43
          %s1837 = smul.addr %s1836, 4
          %s1838 = scalar_lea.hbm %s18, %s1837
          %s1840 = sshll.u32 %s1830, 4
          %s1841 = int_to_ptr.vmem [resolvable:$true] %s1840
          %s1842 = sshll.u32 %s1838, 4
          %s1843 = int_to_ptr.hbm [resolvable:$true] %s1842
          %1845 = dma.vmem_to_hbm [thread:$0]  %s1841, 64, %s1843, %s1827
        $region116: #{tpu_custom_call.1} parent=91 // pred_fallthru
          _
      $region92: #{tpu_custom_call.1} parent=5 // pred_fallthru
        _
      %p1846 = scmp.le.s32.totalorder 2, %s34
      // Predicated region
      $region117: #{tpu_custom_call.1} parent=5 // pred_check
        %p1847 = pneg %p1846
      $region118: #{tpu_custom_call.1} parent=5 // pred_check_branch
        %1849 = sbr.rel (%p1847) target = $region120
      $region119: #{tpu_custom_call.1} parent=5 // pred_region
        %s1850 = ssub.s32 %s34, 2
        // Predicated region
        $region121: #{tpu_custom_call.1} parent=119 // pred_check
          %p1851 = pneg %p465
        $region122: #{tpu_custom_call.1} parent=119 // pred_check_branch
          %1853 = sbr.rel (%p1851) target = $region124
        $region123: #{tpu_custom_call.1} parent=119 // pred_region
          %s1854 = sand.u32 %s450, 1
          %s1855 = scalar_lea.sflag [#allocation6], %s1854
          %s1856 = sand.u32 %s450, 1
          %s1857 = smul.addr %s1856, 4
          %s1858 = scalar_lea.vmem [#allocation12], %s1857
          %1860 = dma.done %s1855, 64
        $region124: #{tpu_custom_call.1} parent=119 // pred_fallthru
          _
      $region120: #{tpu_custom_call.1} parent=5 // pred_fallthru
        _
    $region6: #{tpu_custom_call.1} parent=1 // loop_footer
      %s38 = sadd.s32 1, %s34
    $region7: #{tpu_custom_call.1} parent=1 // loop_footer_branch
      %33 = sbr.rel target = $region3
    $region8: #{tpu_custom_call.1} parent=1 // loop_exit
      _
    %1861 = vsyncpa [#allocation5], 1
    %s1862 = scalar_lea.sflag [#allocation5], 1
    %1863 = vsyncpa %s1862, 1
    %1864 = vsyncpa [#allocation8], 1
    %s1865 = scalar_lea.sflag [#allocation8], 1
    %1866 = vsyncpa %s1865, 1
    %1867 = vsyncpa [#allocation11], 1
    %1868 = vsyncpa [#allocation6], 1
    %s1869 = scalar_lea.sflag [#allocation6], 1
    %1870 = vsyncpa %s1869, 1

</llo_original>
